<compile_context>
chip_gen: v7x
topology: tpu7x:2x2x1
jax: 0.10.0
libtpu: 0.0.40
codegen_flags: <defaults>
</compile_context>

<pallas_src>
import jax
import jax.numpy as jnp
import numpy as np
from jax.experimental import pallas as pl
from jax.experimental.pallas import tpu as pltpu


def _bottleneck_kernel(x_ref, r_ref, w1_ref, b1_ref, w2_ref, b2_ref, w3_ref, b3_ref,
                       o_ref, y1s_ref):
    """One (batch image, row-tile) grid step.

    x_ref : (1, H, W, Cin)    bf16  full image (resident across row-tiles; halo reads)
    r_ref : (1, TH, W, Cout)  f32   row-tiled residual (exact f32 skip connection)
    w1    : (Cin, P)  bf16 (BN1 scale folded)   b1 : (1, P)    f32
    w2    : (9P, P)   bf16 (BN2 scale folded)   b2 : (1, P)    f32
    w3    : (P, Cout) bf16 (BN3 scale folded)   b3 : (1, Cout) f32
    o_ref : (1, TH, W, Cout)  bf16  lane-dense output tile
    y1s   : (TH+2, W+2, P)    bf16  scratch: zero-padded relu(bn1(conv1(x))) tile + halo
    """
    h = pl.program_id(1)
    HT = pl.num_programs(1)
    _, H, W, Cin = x_ref.shape
    TH = o_ref.shape[1]
    Cout = o_ref.shape[3]
    P = w1_ref.shape[1]
    row0 = pl.multiple_of(h * TH, TH)

    # ---- stage 1: conv1 (1x1) + bn1 shift + relu, per row-tile with 2-row halo.
    def conv1_rows(xr):                          # (R, W, Cin) bf16 -> (R, W, P) f32
        R = xr.shape[0]
        y = jnp.dot(xr.reshape(R * W, Cin), w1_ref[...],
                    preferred_element_type=jnp.float32)
        return jnp.maximum(y + b1_ref[0], 0.0).reshape(R, W, P)

    y1_mid = conv1_rows(x_ref[0, pl.ds(row0, TH)])                          # interior rows
    y1_top = conv1_rows(x_ref[0, pl.ds(jnp.maximum(row0 - 1, 0), 1)])       # halo row above
    y1_bot = conv1_rows(x_ref[0, pl.ds(jnp.minimum(row0 + TH, H - 1), 1)])  # halo row below
    top_ok = (h > 0).astype(jnp.float32)         # at image top    -> zero padding
    bot_ok = (h < HT - 1).astype(jnp.float32)    # at image bottom -> zero padding

    # Interior + halo-row stores (no full-image jnp.pad, no whole-image store).
    y1s_ref[1:TH + 1, 1:W + 1, :] = y1_mid.astype(y1s_ref.dtype)
    y1s_ref[0:1, 1:W + 1, :] = (y1_top * top_ok).astype(y1s_ref.dtype)
    y1s_ref[TH + 1:TH + 2, 1:W + 1, :] = (y1_bot * bot_ok).astype(y1s_ref.dtype)
    # Left/right zero-pad columns (tiny strided stores).
    zcol = jnp.zeros((TH + 2, 1, P), y1s_ref.dtype)
    y1s_ref[:, 0:1, :] = zcol
    y1s_ref[:, W + 1:W + 2, :] = zcol

    # ---- stage 2: conv2 (3x3, pad 1) as ONE im2col matmul (K = 9*P).
    # With P % 128 == 0 each tap lands on a lane boundary, so the concat is
    # pure layout (no cross-lane repacking).
    # TODO(synk): for P not a multiple of 128, pre-pack taps into a (TH*W, 9P)
    # VMEM scratch to avoid ragged-lane concatenation.
    y1p = y1s_ref[...]                                                  # (TH+2, W+2, P)
    taps = [y1p[dy:dy + TH, dx:dx + W, :] for dy in range(3) for dx in range(3)]
    im2col = jnp.concatenate(taps, axis=-1).reshape(TH * W, 9 * P)      # bf16
    y2 = jnp.dot(im2col, w2_ref[...], preferred_element_type=jnp.float32)
    y2 = jnp.maximum(y2 + b2_ref[0], 0.0)                               # (TH*W, P) f32

    # ---- stage 3: conv3 (1x1) + bn3 shift, exact-f32 residual add, relu.
    y3 = jnp.dot(y2.astype(w3_ref.dtype), w3_ref[...],
                 preferred_element_type=jnp.float32) + b3_ref[0]        # (TH*W, Cout)
    out = jnp.maximum(y3 + r_ref[0].reshape(TH * W, Cout), 0.0)
    o_ref[0] = out.reshape(TH, W, Cout).astype(o_ref.dtype)


def _fold_bn(gamma, beta, mean, var, eps=1e-5):
    scale = gamma / jnp.sqrt(var + eps)
    shift = beta - mean * scale
    return scale, shift


def bottleneck_forward_nhwc(x_nhwc, params, *, th=None, out_dtype=jnp.bfloat16):
    """NHWC (channels-last) forward. x_nhwc: (N, H, W, Cin) float32."""
    N, H, W, Cin = x_nhwc.shape
    P = params["conv1_w"].shape[0]                       # planes
    Cout = params["conv3_w"].shape[0]                    # planes * 4
    assert Cout == Cin, "downsample=None requires inplanes == planes*expansion"

    # Row-tile height: target TH*W >= 256 work-items per grid step.
    if th is None:
        th = H
        for cand in (8, 16, 32, 64, 128):
            if H % cand == 0 and cand * W >= 256:
                th = cand
                break
    if H % th != 0:
        th = H                                           # fall back: one row-tile
    HT = H // th

    # Fold BN scales into the conv weights (conv is linear in W); keep shifts.
    s1, b1 = _fold_bn(params["bn1_g"], params["bn1_b"], params["bn1_m"], params["bn1_v"])
    s2, b2 = _fold_bn(params["bn2_g"], params["bn2_b"], params["bn2_m"], params["bn2_v"])
    s3, b3 = _fold_bn(params["bn3_g"], params["bn3_b"], params["bn3_m"], params["bn3_v"])

    # PyTorch OIHW -> matmul layouts, scale-folded, bf16 for the MXU.
    w1 = (params["conv1_w"][:, :, 0, 0].T * s1[None, :]).astype(jnp.bfloat16)      # (Cin, P)
    w2 = (jnp.transpose(params["conv2_w"], (2, 3, 1, 0)).reshape(9 * P, P)
          * s2[None, :]).astype(jnp.bfloat16)                                       # (9P, P)
    w3 = (params["conv3_w"][:, :, 0, 0].T * s3[None, :]).astype(jnp.bfloat16)      # (P, Cout)

    b1 = b1.reshape(1, P).astype(jnp.float32)
    b2 = b2.reshape(1, P).astype(jnp.float32)
    b3 = b3.reshape(1, Cout).astype(jnp.float32)

    xb = x_nhwc.astype(jnp.bfloat16)       # conv-path operand (MXU)
    xr = x_nhwc.astype(jnp.float32)        # residual path: exact f32 skip, row-tiled

    def _full(a):
        return pl.BlockSpec(a.shape, lambda n, h: (0,) * a.ndim)

    out_isz = np.dtype(out_dtype).itemsize
    flops = 2 * N * H * W * (Cin * P + 9 * P * P + P * Cout)
    bytes_accessed = (xb.size * 2 + xr.size * 4 + N * H * W * Cout * out_isz
                      + (w1.size + w2.size + w3.size) * 2
                      + (b1.size + b2.size + b3.size) * 4)

    out_nhwc = pl.pallas_call(
        _bottleneck_kernel,
        out_shape=jax.ShapeDtypeStruct((N, H, W, Cout), out_dtype),
        grid_spec=pltpu.PrefetchScalarGridSpec(
            num_scalar_prefetch=0,
            grid=(N, HT),
            in_specs=[
                pl.BlockSpec((1, H, W, Cin), lambda n, h: (n, 0, 0, 0)),    # full image (bf16)
                pl.BlockSpec((1, th, W, Cout), lambda n, h: (n, h, 0, 0)),  # residual tile (f32)
                _full(w1), _full(b1),
                _full(w2), _full(b2),
                _full(w3), _full(b3),
            ],
            out_specs=pl.BlockSpec((1, th, W, Cout), lambda n, h: (n, h, 0, 0)),
            scratch_shapes=[pltpu.VMEM((th + 2, W + 2, P), jnp.bfloat16)],
        ),
        compiler_params=pltpu.CompilerParams(
            # No cross-tile carry anymore -> both axes parallel (v7x: 2 TCs).
            dimension_semantics=("parallel", "parallel"),
            # Explicit VMEM budget; stays below v7x's 64 MiB physical VMEM.
            vmem_limit_bytes=48 * 1024 * 1024),
        cost_estimate=pl.CostEstimate(flops=flops, transcendentals=0,
                                      bytes_accessed=bytes_accessed),
    )(xb, xr, w1, b1, w2, b2, w3, b3)
    return out_nhwc


@jax.jit
def bottleneck_forward(x_nchw, params):
    """PyTorch-style NCHW entry point (transposes are wrapper glue)."""
    x = jnp.transpose(x_nchw, (0, 2, 3, 1))
    out_nhwc = bottleneck_forward_nhwc(x, params)
    return jnp.transpose(out_nhwc, (0, 3, 1, 2))


def _reference_forward(x_nchw, params):
    """Pure-JAX f32 NCHW reference (inference-mode BN), for verification."""
    def bn(y, g, b, m, v, eps=1e-5):
        g, b, m, v = (a.reshape(1, -1, 1, 1) for a in (g, b, m, v))
        return (y - m) / jnp.sqrt(v + eps) * g + b

    dn = ("NCHW", "OIHW", "NCHW")
    y = jax.lax.conv_general_dilated(x_nchw, params["conv1_w"], (1, 1), "VALID",
                                     dimension_numbers=dn)
    y = jax.nn.relu(bn(y, params["bn1_g"], params["bn1_b"], params["bn1_m"], params["bn1_v"]))
    y = jax.lax.conv_general_dilated(y, params["conv2_w"], (1, 1), ((1, 1), (1, 1)),
                                     dimension_numbers=dn)
    y = jax.nn.relu(bn(y, params["bn2_g"], params["bn2_b"], params["bn2_m"], params["bn2_v"]))
    y = jax.lax.conv_general_dilated(y, params["conv3_w"], (1, 1), "VALID",
                                     dimension_numbers=dn)
    y = bn(y, params["bn3_g"], params["bn3_b"], params["bn3_m"], params["bn3_v"])
    return jax.nn.relu(y + x_nchw)


def make_params(key, inplanes, planes):
    expansion = 4
    ks = jax.random.split(key, 12)
    f32 = jnp.float32
    return {
        # fan-in-scaled init keeps activations O(1) so the bf16-vs-f32 check is tight.
        "conv1_w": jax.random.normal(ks[0], (planes, inplanes, 1, 1), f32) / np.sqrt(inplanes),
        "conv2_w": jax.random.normal(ks[1], (planes, planes, 3, 3), f32) / np.sqrt(9 * planes),
        "conv3_w": jax.random.normal(ks[2], (planes * expansion, planes, 1, 1), f32) / np.sqrt(planes),
        "bn1_g": 1.0 + 0.1 * jax.random.normal(ks[3], (planes,), f32),
        "bn1_b": 0.1 * jax.random.normal(ks[4], (planes,), f32),
        "bn1_m": 0.1 * jax.random.normal(ks[5], (planes,), f32),
        "bn1_v": jnp.abs(1.0 + 0.1 * jax.random.normal(ks[6], (planes,), f32)),
        "bn2_g": 1.0 + 0.1 * jax.random.normal(ks[7], (planes,), f32),
        "bn2_b": 0.1 * jax.random.normal(ks[8], (planes,), f32),
        "bn2_m": jnp.zeros((planes,), f32),
        "bn2_v": jnp.ones((planes,), f32),
        "bn3_g": 1.0 + 0.1 * jax.random.normal(ks[9], (planes * expansion,), f32),
        "bn3_b": 0.1 * jax.random.normal(ks[10], (planes * expansion,), f32),
        "bn3_m": jnp.zeros((planes * expansion,), f32),
        "bn3_v": jnp.ones((planes * expansion,), f32),
    }


if __name__ == "__main__":
    key = jax.random.PRNGKey(0)
    k_x, k_p = jax.random.split(key)

    # Real mid-ResNet channel counts (planes multiple of 128) so every im2col
    # tap is lane-aligned and conv1/conv2 use the MXU columns well; spatial
    # kept small.  H=32, W=16, th=16 -> grid (N, 2): exercises both the
    # image-boundary (zero-pad) and the interior-neighbor halo paths.
    N, planes, H, W = 2, 128, 32, 16
    inplanes = planes * 4                     # downsample=None => Cin == Cout == 512
    x = jax.random.normal(k_x, (N, inplanes, H, W), jnp.float32)
    params = make_params(k_p, inplanes, planes)

    out = bottleneck_forward(x, params)
    jax.block_until_ready(out)

    ref = _reference_forward(x, params)
    # bf16 matmul operands + bf16 output (f32 accumulation, f32 residual add)
    # => relaxed tolerance vs the f32 reference.
    np.testing.assert_allclose(np.asarray(out.astype(jnp.float32)),
                               np.asarray(ref), rtol=5e-2, atol=8e-2)

    print("KERNEL_OK")
</pallas_src>

<mosaic_0001>
module attributes {stable_mosaic.version = 11 : i64} {
  func.func @_bottleneck_kernel(%arg0: i32, %arg1: i32, %arg2: memref<1x32x16x512xbf16, #tpu.memory_space<vmem>>, %arg3: memref<1x16x16x512xf32, #tpu.memory_space<vmem>>, %arg4: memref<512x128xbf16, #tpu.memory_space<vmem>>, %arg5: memref<1x128xf32, #tpu.memory_space<vmem>>, %arg6: memref<1152x128xbf16, #tpu.memory_space<vmem>>, %arg7: memref<1x128xf32, #tpu.memory_space<vmem>>, %arg8: memref<128x512xbf16, #tpu.memory_space<vmem>>, %arg9: memref<1x512xf32, #tpu.memory_space<vmem>>, %arg10: memref<1x16x16x512xbf16, #tpu.memory_space<vmem>>, %arg11: memref<18x18x128xbf16, #tpu.memory_space<vmem>>) attributes {dimension_semantics = [#tpu.dimension_semantics<parallel>, #tpu.dimension_semantics<parallel>], iteration_bounds = array<i64: 2, 2>, scalar_prefetch = 0 : i64, scratch_operands = 1 : i64, tpu.core_type = #tpu.core_type<tc>, window_params = [{transform_indices = @transform_0, window_bounds = array<i64: 1, 32, 16, 512>}, {transform_indices = @transform_1, window_bounds = array<i64: 1, 16, 16, 512>}, {pipeline_mode = #tpu.pipeline_mode<synchronous>, transform_indices = @transform_2, window_bounds = array<i64: 512, 128>}, {pipeline_mode = #tpu.pipeline_mode<synchronous>, transform_indices = @transform_3, window_bounds = array<i64: 1, 128>}, {pipeline_mode = #tpu.pipeline_mode<synchronous>, transform_indices = @transform_4, window_bounds = array<i64: 1152, 128>}, {pipeline_mode = #tpu.pipeline_mode<synchronous>, transform_indices = @transform_5, window_bounds = array<i64: 1, 128>}, {pipeline_mode = #tpu.pipeline_mode<synchronous>, transform_indices = @transform_6, window_bounds = array<i64: 128, 512>}, {pipeline_mode = #tpu.pipeline_mode<synchronous>, transform_indices = @transform_7, window_bounds = array<i64: 1, 512>}, {transform_indices = @transform_8, window_bounds = array<i64: 1, 16, 16, 512>}]} {
    %c16_i32 = arith.constant 16 : i32
    %0 = arith.muli %arg1, %c16_i32 : i32
    %1 = tpu.assume_multiple %0, 16 : i32
    %c0 = arith.constant 0 : index
    %2 = arith.index_cast %1 : i32 to index
    %c0_0 = arith.constant 0 : index
    %c0_1 = arith.constant 0 : index
    %3 = vector.load %arg2[%c0, %2, %c0_0, %c0_1] : memref<1x32x16x512xbf16, #tpu.memory_space<vmem>>, vector<1x16x16x512xbf16>
    %4 = vector.shape_cast %3 : vector<1x16x16x512xbf16> to vector<16x16x512xbf16>
    %5 = vector.shape_cast %4 : vector<16x16x512xbf16> to vector<256x512xbf16>
    %c0_2 = arith.constant 0 : index
    %c0_3 = arith.constant 0 : index
    %6 = vector.load %arg4[%c0_2, %c0_3] : memref<512x128xbf16, #tpu.memory_space<vmem>>, vector<512x128xbf16>
    %cst = arith.constant dense<0.000000e+00> : vector<256x128xf32>
    %7 = tpu.matmul %5, %6, %cst {dimension_numbers = #tpu.dot_dimension_numbers<[1], [0], [0], [1], [0, 0, 1, 1], [], []>} : vector<256x512xbf16>, vector<512x128xbf16>, vector<256x128xf32> -> vector<256x128xf32>
    %c0_4 = arith.constant 0 : index
    %c0_5 = arith.constant 0 : index
    %8 = vector.load %arg5[%c0_4, %c0_5] : memref<1x128xf32, #tpu.memory_space<vmem>>, vector<1x128xf32>
    %9 = vector.shape_cast %8 : vector<1x128xf32> to vector<128xf32>
    %10 = vector.shape_cast %9 : vector<128xf32> to vector<1x128xf32>
    %11 = vector.broadcast %10 : vector<1x128xf32> to vector<256x128xf32>
    %12 = arith.addf %7, %11 : vector<256x128xf32>
    %cst_6 = arith.constant 0.000000e+00 : f32
    %13 = vector.broadcast %cst_6 : f32 to vector<256x128xf32>
    %14 = arith.maximumf %12, %13 : vector<256x128xf32>
    %15 = vector.shape_cast %14 : vector<256x128xf32> to vector<16x16x128xf32>
    %c1_i32 = arith.constant 1 : i32
    %16 = arith.subi %1, %c1_i32 : i32
    %c0_i32 = arith.constant 0 : i32
    %17 = arith.maxsi %16, %c0_i32 : i32
    %c0_7 = arith.constant 0 : index
    %18 = arith.index_cast %17 : i32 to index
    %c0_8 = arith.constant 0 : index
    %c0_9 = arith.constant 0 : index
    %19 = vector.load %arg2[%c0_7, %18, %c0_8, %c0_9] : memref<1x32x16x512xbf16, #tpu.memory_space<vmem>>, vector<1x1x16x512xbf16>
    %20 = vector.shape_cast %19 : vector<1x1x16x512xbf16> to vector<1x16x512xbf16>
    %21 = vector.shape_cast %20 : vector<1x16x512xbf16> to vector<16x512xbf16>
    %c0_10 = arith.constant 0 : index
    %c0_11 = arith.constant 0 : index
    %22 = vector.load %arg4[%c0_10, %c0_11] : memref<512x128xbf16, #tpu.memory_space<vmem>>, vector<512x128xbf16>
    %cst_12 = arith.constant dense<0.000000e+00> : vector<16x128xf32>
    %23 = tpu.matmul %21, %22, %cst_12 {dimension_numbers = #tpu.dot_dimension_numbers<[1], [0], [0], [1], [0, 0, 1, 1], [], []>} : vector<16x512xbf16>, vector<512x128xbf16>, vector<16x128xf32> -> vector<16x128xf32>
    %c0_13 = arith.constant 0 : index
    %c0_14 = arith.constant 0 : index
    %24 = vector.load %arg5[%c0_13, %c0_14] : memref<1x128xf32, #tpu.memory_space<vmem>>, vector<1x128xf32>
    %25 = vector.shape_cast %24 : vector<1x128xf32> to vector<128xf32>
    %26 = vector.shape_cast %25 : vector<128xf32> to vector<1x128xf32>
    %27 = vector.broadcast %26 : vector<1x128xf32> to vector<16x128xf32>
    %28 = arith.addf %23, %27 : vector<16x128xf32>
    %cst_15 = arith.constant 0.000000e+00 : f32
    %29 = vector.broadcast %cst_15 : f32 to vector<16x128xf32>
    %30 = arith.maximumf %28, %29 : vector<16x128xf32>
    %31 = vector.shape_cast %30 : vector<16x128xf32> to vector<1x16x128xf32>
    %c16_i32_16 = arith.constant 16 : i32
    %32 = arith.addi %1, %c16_i32_16 : i32
    %c31_i32 = arith.constant 31 : i32
    %33 = arith.minsi %32, %c31_i32 : i32
    %c0_17 = arith.constant 0 : index
    %34 = arith.index_cast %33 : i32 to index
    %c0_18 = arith.constant 0 : index
    %c0_19 = arith.constant 0 : index
    %35 = vector.load %arg2[%c0_17, %34, %c0_18, %c0_19] : memref<1x32x16x512xbf16, #tpu.memory_space<vmem>>, vector<1x1x16x512xbf16>
    %36 = vector.shape_cast %35 : vector<1x1x16x512xbf16> to vector<1x16x512xbf16>
    %37 = vector.shape_cast %36 : vector<1x16x512xbf16> to vector<16x512xbf16>
    %c0_20 = arith.constant 0 : index
    %c0_21 = arith.constant 0 : index
    %38 = vector.load %arg4[%c0_20, %c0_21] : memref<512x128xbf16, #tpu.memory_space<vmem>>, vector<512x128xbf16>
    %cst_22 = arith.constant dense<0.000000e+00> : vector<16x128xf32>
    %39 = tpu.matmul %37, %38, %cst_22 {dimension_numbers = #tpu.dot_dimension_numbers<[1], [0], [0], [1], [0, 0, 1, 1], [], []>} : vector<16x512xbf16>, vector<512x128xbf16>, vector<16x128xf32> -> vector<16x128xf32>
    %c0_23 = arith.constant 0 : index
    %c0_24 = arith.constant 0 : index
    %40 = vector.load %arg5[%c0_23, %c0_24] : memref<1x128xf32, #tpu.memory_space<vmem>>, vector<1x128xf32>
    %41 = vector.shape_cast %40 : vector<1x128xf32> to vector<128xf32>
    %42 = vector.shape_cast %41 : vector<128xf32> to vector<1x128xf32>
    %43 = vector.broadcast %42 : vector<1x128xf32> to vector<16x128xf32>
    %44 = arith.addf %39, %43 : vector<16x128xf32>
    %cst_25 = arith.constant 0.000000e+00 : f32
    %45 = vector.broadcast %cst_25 : f32 to vector<16x128xf32>
    %46 = arith.maximumf %44, %45 : vector<16x128xf32>
    %47 = vector.shape_cast %46 : vector<16x128xf32> to vector<1x16x128xf32>
    %c0_i32_26 = arith.constant 0 : i32
    %48 = arith.cmpi sgt, %arg1, %c0_i32_26 : i32
    %49 = arith.extui %48 : i1 to i32
    %50 = arith.sitofp %49 : i32 to f32
    %c1_i32_27 = arith.constant 1 : i32
    %51 = arith.cmpi slt, %arg1, %c1_i32_27 : i32
    %52 = arith.extui %51 : i1 to i32
    %53 = arith.sitofp %52 : i32 to f32
    %54 = arith.truncf %15 : vector<16x16x128xf32> to vector<16x16x128xbf16>
    %c1 = arith.constant 1 : index
    %c1_28 = arith.constant 1 : index
    %c0_29 = arith.constant 0 : index
    %55 = vector.load %arg11[%c1, %c1_28, %c0_29] : memref<18x18x128xbf16, #tpu.memory_space<vmem>>, vector<16x16x128xbf16>
    tpu.vector_store %arg11[%c1, %c1_28, %c0_29], %54 {strides = array<i32>} : memref<18x18x128xbf16, #tpu.memory_space<vmem>>, vector<16x16x128xbf16>,
    %56 = vector.broadcast %50 : f32 to vector<1x16x128xf32>
    %57 = arith.mulf %31, %56 : vector<1x16x128xf32>
    %58 = arith.truncf %57 : vector<1x16x128xf32> to vector<1x16x128xbf16>
    %c0_30 = arith.constant 0 : index
    %c1_31 = arith.constant 1 : index
    %c0_32 = arith.constant 0 : index
    %59 = vector.load %arg11[%c0_30, %c1_31, %c0_32] : memref<18x18x128xbf16, #tpu.memory_space<vmem>>, vector<1x16x128xbf16>
    tpu.vector_store %arg11[%c0_30, %c1_31, %c0_32], %58 {strides = array<i32>} : memref<18x18x128xbf16, #tpu.memory_space<vmem>>, vector<1x16x128xbf16>,
    %60 = vector.broadcast %53 : f32 to vector<1x16x128xf32>
    %61 = arith.mulf %47, %60 : vector<1x16x128xf32>
    %62 = arith.truncf %61 : vector<1x16x128xf32> to vector<1x16x128xbf16>
    %c17 = arith.constant 17 : index
    %c1_33 = arith.constant 1 : index
    %c0_34 = arith.constant 0 : index
    %63 = vector.load %arg11[%c17, %c1_33, %c0_34] : memref<18x18x128xbf16, #tpu.memory_space<vmem>>, vector<1x16x128xbf16>
    tpu.vector_store %arg11[%c17, %c1_33, %c0_34], %62 {strides = array<i32>} : memref<18x18x128xbf16, #tpu.memory_space<vmem>>, vector<1x16x128xbf16>,
    %cst_35 = arith.constant 0.000000e+00 : bf16
    %64 = vector.broadcast %cst_35 : bf16 to vector<18x1x128xbf16>
    %c0_36 = arith.constant 0 : index
    %c0_37 = arith.constant 0 : index
    %c0_38 = arith.constant 0 : index
    %65 = vector.load %arg11[%c0_36, %c0_37, %c0_38] : memref<18x18x128xbf16, #tpu.memory_space<vmem>>, vector<18x1x128xbf16>
    tpu.vector_store %arg11[%c0_36, %c0_37, %c0_38], %64 {strides = array<i32>} : memref<18x18x128xbf16, #tpu.memory_space<vmem>>, vector<18x1x128xbf16>,
    %c0_39 = arith.constant 0 : index
    %c17_40 = arith.constant 17 : index
    %c0_41 = arith.constant 0 : index
    %66 = vector.load %arg11[%c0_39, %c17_40, %c0_41] : memref<18x18x128xbf16, #tpu.memory_space<vmem>>, vector<18x1x128xbf16>
    tpu.vector_store %arg11[%c0_39, %c17_40, %c0_41], %64 {strides = array<i32>} : memref<18x18x128xbf16, #tpu.memory_space<vmem>>, vector<18x1x128xbf16>,
    %c0_42 = arith.constant 0 : index
    %c0_43 = arith.constant 0 : index
    %c0_44 = arith.constant 0 : index
    %67 = vector.load %arg11[%c0_42, %c0_43, %c0_44] : memref<18x18x128xbf16, #tpu.memory_space<vmem>>, vector<18x18x128xbf16>
    %68 = vector.extract_strided_slice %67 {offsets = [0, 0, 0], sizes = [16, 16, 128], strides = [1, 1, 1]} : vector<18x18x128xbf16> to vector<16x16x128xbf16>
    %69 = vector.extract_strided_slice %67 {offsets = [0, 1, 0], sizes = [16, 16, 128], strides = [1, 1, 1]} : vector<18x18x128xbf16> to vector<16x16x128xbf16>
    %70 = vector.extract_strided_slice %67 {offsets = [0, 2, 0], sizes = [16, 16, 128], strides = [1, 1, 1]} : vector<18x18x128xbf16> to vector<16x16x128xbf16>
    %71 = vector.extract_strided_slice %67 {offsets = [1, 0, 0], sizes = [16, 16, 128], strides = [1, 1, 1]} : vector<18x18x128xbf16> to vector<16x16x128xbf16>
    %72 = vector.extract_strided_slice %67 {offsets = [1, 1, 0], sizes = [16, 16, 128], strides = [1, 1, 1]} : vector<18x18x128xbf16> to vector<16x16x128xbf16>
    %73 = vector.extract_strided_slice %67 {offsets = [1, 2, 0], sizes = [16, 16, 128], strides = [1, 1, 1]} : vector<18x18x128xbf16> to vector<16x16x128xbf16>
    %74 = vector.extract_strided_slice %67 {offsets = [2, 0, 0], sizes = [16, 16, 128], strides = [1, 1, 1]} : vector<18x18x128xbf16> to vector<16x16x128xbf16>
    %75 = vector.extract_strided_slice %67 {offsets = [2, 1, 0], sizes = [16, 16, 128], strides = [1, 1, 1]} : vector<18x18x128xbf16> to vector<16x16x128xbf16>
    %76 = vector.extract_strided_slice %67 {offsets = [2, 2, 0], sizes = [16, 16, 128], strides = [1, 1, 1]} : vector<18x18x128xbf16> to vector<16x16x128xbf16>
    %77 = tpu.concatenate %68, %69, %70, %71, %72, %73, %74, %75, %76 in 2 : vector<16x16x128xbf16>, vector<16x16x128xbf16>, vector<16x16x128xbf16>, vector<16x16x128xbf16>, vector<16x16x128xbf16>, vector<16x16x128xbf16>, vector<16x16x128xbf16>, vector<16x16x128xbf16>, vector<16x16x128xbf16> -> vector<16x16x1152xbf16>
    %78 = vector.shape_cast %77 : vector<16x16x1152xbf16> to vector<256x1152xbf16>
    %c0_45 = arith.constant 0 : index
    %c0_46 = arith.constant 0 : index
    %79 = vector.load %arg6[%c0_45, %c0_46] : memref<1152x128xbf16, #tpu.memory_space<vmem>>, vector<1152x128xbf16>
    %cst_47 = arith.constant dense<0.000000e+00> : vector<256x128xf32>
    %80 = tpu.matmul %78, %79, %cst_47 {dimension_numbers = #tpu.dot_dimension_numbers<[1], [0], [0], [1], [0, 0, 1, 1], [], []>} : vector<256x1152xbf16>, vector<1152x128xbf16>, vector<256x128xf32> -> vector<256x128xf32>
    %c0_48 = arith.constant 0 : index
    %c0_49 = arith.constant 0 : index
    %81 = vector.load %arg7[%c0_48, %c0_49] : memref<1x128xf32, #tpu.memory_space<vmem>>, vector<1x128xf32>
    %82 = vector.shape_cast %81 : vector<1x128xf32> to vector<128xf32>
    %83 = vector.shape_cast %82 : vector<128xf32> to vector<1x128xf32>
    %84 = vector.broadcast %83 : vector<1x128xf32> to vector<256x128xf32>
    %85 = arith.addf %80, %84 : vector<256x128xf32>
    %cst_50 = arith.constant 0.000000e+00 : f32
    %86 = vector.broadcast %cst_50 : f32 to vector<256x128xf32>
    %87 = arith.maximumf %85, %86 : vector<256x128xf32>
    %88 = arith.truncf %87 : vector<256x128xf32> to vector<256x128xbf16>
    %c0_51 = arith.constant 0 : index
    %c0_52 = arith.constant 0 : index
    %89 = vector.load %arg8[%c0_51, %c0_52] : memref<128x512xbf16, #tpu.memory_space<vmem>>, vector<128x512xbf16>
    %cst_53 = arith.constant dense<0.000000e+00> : vector<256x512xf32>
    %90 = tpu.matmul %88, %89, %cst_53 {dimension_numbers = #tpu.dot_dimension_numbers<[1], [0], [0], [1], [0, 0, 1, 1], [], []>} : vector<256x128xbf16>, vector<128x512xbf16>, vector<256x512xf32> -> vector<256x512xf32>
    %c0_54 = arith.constant 0 : index
    %c0_55 = arith.constant 0 : index
    %91 = vector.load %arg9[%c0_54, %c0_55] : memref<1x512xf32, #tpu.memory_space<vmem>>, vector<1x512xf32>
    %92 = vector.shape_cast %91 : vector<1x512xf32> to vector<512xf32>
    %93 = vector.shape_cast %92 : vector<512xf32> to vector<1x512xf32>
    %94 = vector.broadcast %93 : vector<1x512xf32> to vector<256x512xf32>
    %95 = arith.addf %90, %94 : vector<256x512xf32>
    %c0_56 = arith.constant 0 : index
    %c0_57 = arith.constant 0 : index
    %c0_58 = arith.constant 0 : index
    %c0_59 = arith.constant 0 : index
    %96 = vector.load %arg3[%c0_56, %c0_57, %c0_58, %c0_59] : memref<1x16x16x512xf32, #tpu.memory_space<vmem>>, vector<1x16x16x512xf32>
    %97 = vector.shape_cast %96 : vector<1x16x16x512xf32> to vector<16x16x512xf32>
    %98 = vector.shape_cast %97 : vector<16x16x512xf32> to vector<256x512xf32>
    %99 = arith.addf %95, %98 : vector<256x512xf32>
    %cst_60 = arith.constant 0.000000e+00 : f32
    %100 = vector.broadcast %cst_60 : f32 to vector<256x512xf32>
    %101 = arith.maximumf %99, %100 : vector<256x512xf32>
    %102 = vector.shape_cast %101 : vector<256x512xf32> to vector<16x16x512xf32>
    %103 = arith.truncf %102 : vector<16x16x512xf32> to vector<16x16x512xbf16>
    %c0_61 = arith.constant 0 : index
    %c0_62 = arith.constant 0 : index
    %c0_63 = arith.constant 0 : index
    %c0_64 = arith.constant 0 : index
    %104 = vector.load %arg10[%c0_61, %c0_62, %c0_63, %c0_64] : memref<1x16x16x512xbf16, #tpu.memory_space<vmem>>, vector<1x16x16x512xbf16>
    %105 = vector.shape_cast %104 : vector<1x16x16x512xbf16> to vector<16x16x512xbf16>
    %106 = vector.shape_cast %103 : vector<16x16x512xbf16> to vector<1x16x16x512xbf16>
    tpu.vector_store %arg10[%c0_61, %c0_62, %c0_63, %c0_64], %106 {strides = array<i32>} : memref<1x16x16x512xbf16, #tpu.memory_space<vmem>>, vector<1x16x16x512xbf16>,
    return
  }
  func.func @transform_0(%arg0: i32, %arg1: i32) -> (i32, i32, i32, i32) {
    %c0_i32 = arith.constant 0 : i32
    %c0_i32_0 = arith.constant 0 : i32
    %c0_i32_1 = arith.constant 0 : i32
    %c0_i32_2 = arith.constant 0 : i32
    return %arg0, %c0_i32, %c0_i32_0, %c0_i32_1 : i32, i32, i32, i32
  }
  func.func @transform_1(%arg0: i32, %arg1: i32) -> (i32, i32, i32, i32) {
    %c0_i32 = arith.constant 0 : i32
    %c0_i32_0 = arith.constant 0 : i32
    %c0_i32_1 = arith.constant 0 : i32
    return %arg0, %arg1, %c0_i32, %c0_i32_0 : i32, i32, i32, i32
  }
  func.func @transform_2(%arg0: i32, %arg1: i32) -> (i32, i32) {
    %c0_i32 = arith.constant 0 : i32
    %c0_i32_0 = arith.constant 0 : i32
    %c0_i32_1 = arith.constant 0 : i32
    return %c0_i32, %c0_i32_0 : i32, i32
  }
  func.func @transform_3(%arg0: i32, %arg1: i32) -> (i32, i32) {
    %c0_i32 = arith.constant 0 : i32
    %c0_i32_0 = arith.constant 0 : i32
    %c0_i32_1 = arith.constant 0 : i32
    return %c0_i32, %c0_i32_0 : i32, i32
  }
  func.func @transform_4(%arg0: i32, %arg1: i32) -> (i32, i32) {
    %c0_i32 = arith.constant 0 : i32
    %c0_i32_0 = arith.constant 0 : i32
    %c0_i32_1 = arith.constant 0 : i32
    return %c0_i32, %c0_i32_0 : i32, i32
  }
  func.func @transform_5(%arg0: i32, %arg1: i32) -> (i32, i32) {
    %c0_i32 = arith.constant 0 : i32
    %c0_i32_0 = arith.constant 0 : i32
    %c0_i32_1 = arith.constant 0 : i32
    return %c0_i32, %c0_i32_0 : i32, i32
  }
  func.func @transform_6(%arg0: i32, %arg1: i32) -> (i32, i32) {
    %c0_i32 = arith.constant 0 : i32
    %c0_i32_0 = arith.constant 0 : i32
    %c0_i32_1 = arith.constant 0 : i32
    return %c0_i32, %c0_i32_0 : i32, i32
  }
  func.func @transform_7(%arg0: i32, %arg1: i32) -> (i32, i32) {
    %c0_i32 = arith.constant 0 : i32
    %c0_i32_0 = arith.constant 0 : i32
    %c0_i32_1 = arith.constant 0 : i32
    return %c0_i32, %c0_i32_0 : i32, i32
  }
  func.func @transform_8(%arg0: i32, %arg1: i32) -> (i32, i32, i32, i32) {
    %c0_i32 = arith.constant 0 : i32
    %c0_i32_0 = arith.constant 0 : i32
    %c0_i32_1 = arith.constant 0 : i32
    return %arg0, %arg1, %c0_i32, %c0_i32_0 : i32, i32, i32, i32
  }
}

</mosaic_0001>

<llo_original>
// kernel: bottleneck_forward.1
$region0: #{bottleneck_forward.1}
  #allocation0 [shape = 'u32[]', space=smem, size = 0x4, offset = 0x4, fixed_abs, tag = 'smem constant byte address 0x4 - core index']
  #allocation1 [shape = 'u32[144,128]{1,0:T(1,128)}', space=vmem, size = 0x12000, scoped, tag = 'internal scratch']
  #allocation2 [shape = 'bf16[18,18,128]{2,1,0:T(8,128)(2,1)}', space=vmem, size = 0x1b000, scoped, tag = 'scratch operand']
  %s0 = inlined_call_operand.vmem [shape: bf16[2,32,16,512], index: 0, kind: input, shape index: {}]
  %s1 = inlined_call_operand.vmem [shape: f32[2,32,16,512], index: 1, kind: input, shape index: {}]
  %s2 = inlined_call_operand.vmem [shape: bf16[512,128], index: 2, kind: input, shape index: {}]
  %s3 = inlined_call_operand.vmem [shape: f32[1,128], index: 3, kind: input, shape index: {}]
  %s4 = inlined_call_operand.vmem [shape: bf16[1152,128], index: 4, kind: input, shape index: {}]
  %s5 = inlined_call_operand.vmem [shape: f32[1,128], index: 5, kind: input, shape index: {}]
  %s6 = inlined_call_operand.vmem [shape: bf16[128,512], index: 6, kind: input, shape index: {}]
  %s7 = inlined_call_operand.vmem [shape: f32[1,512], index: 7, kind: input, shape index: {}]
  %s8 = inlined_call_operand.hbm [shape: bf16[2,32,16,512], index: 8, kind: output, shape index: {}]
  %s9 = sld [smem:[#allocation0]]
  $region65: #{bottleneck_forward.1} parent=0
    _
  %s11 = ssub.s32 1, %s9
  %s12 = scalar_select 0, %s11, %s9
  $region1: #{bottleneck_forward.1} parent=0
    #allocation3 [shape = 'u8[524288]{0}', space=vmem, size = 0x80000, scoped, tag = 'output window, operand 0']
    #allocation4 [shape = 's32[2]{0}', space=sflag, size = 0x8, scoped, tag = 'scoped memory for bottleneck_forward.1']
    %13 = vsyncpa [#allocation4], 0
    %s14 = scalar_lea.sflag [#allocation4], 1
    %15 = vsyncpa %s14, 0
    loop: start=0, step=1, limit=6
    $region2: #{bottleneck_forward.1} parent=1 // loop_pre_header
      _
    $region3: #{bottleneck_forward.1} parent=1 // loop_header
      %s17 = sphi 0, %s21
      %p18 = scmp.ge.s32.totalorder %s17, 6
      %s24 = sphi 0, %s36
      %s25 = sphi 0, %s32
      %s26 = sphi 0, %s24
      %s27 = sphi 0, %s25
      %s28 = sphi 0, %s26
      %s29 = sphi 0, %s27
      %s39 = sphi 0, %s41
      %s42 = sphi 0, %s39
      %s43 = sphi 0, %s42
      %s59 = sphi 0, %s43
      %s67 = sphi 0, %s69
      %s70 = sphi 0, %s67
      %s71 = sphi 0, %s70
      %s87 = sphi 0, %s71
      %s91 = sphi 0, %s91
      %s93 = sphi 0, %s91
      %s94 = sphi 0, %s93
      %s108 = sphi 0, %s94
      %s112 = sphi 0, %s112
      %s114 = sphi 0, %s112
      %s115 = sphi 0, %s114
      %s129 = sphi 0, %s115
      %s133 = sphi 0, %s133
      %s135 = sphi 0, %s133
      %s136 = sphi 0, %s135
      %s150 = sphi 0, %s136
      %s154 = sphi 0, %s154
      %s156 = sphi 0, %s154
      %s157 = sphi 0, %s156
      %s171 = sphi 0, %s157
      %s175 = sphi 0, %s175
      %s177 = sphi 0, %s175
      %s178 = sphi 0, %s177
      %s192 = sphi 0, %s178
      %s196 = sphi 0, %s196
      %s198 = sphi 0, %s196
      %s199 = sphi 0, %s198
      %s213 = sphi 0, %s199
      %s221 = sphi 0, %s223
      %s224 = sphi 0, %s221
      %s225 = sphi 0, %s224
      %s241 = sphi 0, %s225
    $region4: #{bottleneck_forward.1} parent=1 // loop_header_branch
      %20 = sbr.rel (%p18) target = $region8
    $region5: #{bottleneck_forward.1} parent=1 // loop_body
      %s22 = ssub.s32 %s17, 1
      %s23 = ssub.s32 %s17, 2
      %s30 = sadd.s32 1, %s25
      %p31 = scmp.ge.s32.totalorder %s30, 2
      %s32 = scalar_select %p31, 0, %s30
      %s33 = sadd.s32 1, %s24
      %s34 = scalar_select %p31, %s33, %s24
      %p35 = scmp.ge.s32.totalorder %s34, 2
      %s36 = scalar_select %p35, 0, %s34
      %s37 = ssub.s32 %s24, %s36
      %p38 = scmp.eq.s32.totalorder %s37, 0
      %s40 = sadd.s32 %s39, 1
      %s41 = scalar_select %p38, %s39, %s40
      %p44 = pneg %p38
      %p45 = scmp.eq.s32.totalorder %s17, 3
      %p46 = por %p44, %p45
      %p47 = scmp.ne.s32.totalorder %s39, %s42
      %p48 = scmp.eq.s32.totalorder %s17, 0
      %p49 = por %p47, %p48
      %p50 = scmp.ne.s32.totalorder %s39, %s42
      %p51 = scmp.eq.s32.totalorder %s22, 3
      %p52 = por %p50, %p51
      %p53 = scmp.ne.s32.totalorder %s42, %s43
      %p54 = scmp.eq.s32.totalorder %s22, 0
      %p55 = por %p53, %p54
      %p56 = scmp.ne.s32.totalorder %s42, %s43
      %p57 = scmp.eq.s32.totalorder %s23, 3
      %p58 = por %p56, %p57
      %p60 = scmp.ne.s32.totalorder %s43, %s59
      %p61 = scmp.eq.s32.totalorder %s23, 0
      %p62 = por %p60, %p61
      %s63 = ssub.s32 %s24, %s36
      %s64 = ssub.s32 %s25, %s32
      %s65 = sor.u32 %s63, %s64
      %p66 = scmp.eq.s32.totalorder %s65, 0
      %s68 = sadd.s32 %s67, 1
      %s69 = scalar_select %p66, %s67, %s68
      %p72 = pneg %p66
      %p73 = scmp.eq.s32.totalorder %s17, 3
      %p74 = por %p72, %p73
      %p75 = scmp.ne.s32.totalorder %s67, %s70
      %p76 = scmp.eq.s32.totalorder %s17, 0
      %p77 = por %p75, %p76
      %p78 = scmp.ne.s32.totalorder %s67, %s70
      %p79 = scmp.eq.s32.totalorder %s22, 3
      %p80 = por %p78, %p79
      %p81 = scmp.ne.s32.totalorder %s70, %s71
      %p82 = scmp.eq.s32.totalorder %s22, 0
      %p83 = por %p81, %p82
      %p84 = scmp.ne.s32.totalorder %s70, %s71
      %p85 = scmp.eq.s32.totalorder %s23, 3
      %p86 = por %p84, %p85
      %p88 = scmp.ne.s32.totalorder %s71, %s87
      %p89 = scmp.eq.s32.totalorder %s23, 0
      %p90 = por %p88, %p89
      %s92 = sadd.s32 %s91, 1
      %p95 = scmp.eq.s32.totalorder %s17, 3
      %p96 = scmp.ne.s32.totalorder %s91, %s93
      %p97 = scmp.eq.s32.totalorder %s17, 0
      %p98 = por %p96, %p97
      %p99 = scmp.ne.s32.totalorder %s91, %s93
      %p100 = scmp.eq.s32.totalorder %s22, 3
      %p101 = por %p99, %p100
      %p102 = scmp.ne.s32.totalorder %s93, %s94
      %p103 = scmp.eq.s32.totalorder %s22, 0
      %p104 = por %p102, %p103
      %p105 = scmp.ne.s32.totalorder %s93, %s94
      %p106 = scmp.eq.s32.totalorder %s23, 3
      %p107 = por %p105, %p106
      %p109 = scmp.ne.s32.totalorder %s94, %s108
      %p110 = scmp.eq.s32.totalorder %s23, 0
      %p111 = por %p109, %p110
      %s113 = sadd.s32 %s112, 1
      %p116 = scmp.eq.s32.totalorder %s17, 3
      %p117 = scmp.ne.s32.totalorder %s112, %s114
      %p118 = scmp.eq.s32.totalorder %s17, 0
      %p119 = por %p117, %p118
      %p120 = scmp.ne.s32.totalorder %s112, %s114
      %p121 = scmp.eq.s32.totalorder %s22, 3
      %p122 = por %p120, %p121
      %p123 = scmp.ne.s32.totalorder %s114, %s115
      %p124 = scmp.eq.s32.totalorder %s22, 0
      %p125 = por %p123, %p124
      %p126 = scmp.ne.s32.totalorder %s114, %s115
      %p127 = scmp.eq.s32.totalorder %s23, 3
      %p128 = por %p126, %p127
      %p130 = scmp.ne.s32.totalorder %s115, %s129
      %p131 = scmp.eq.s32.totalorder %s23, 0
      %p132 = por %p130, %p131
      %s134 = sadd.s32 %s133, 1
      %p137 = scmp.eq.s32.totalorder %s17, 3
      %p138 = scmp.ne.s32.totalorder %s133, %s135
      %p139 = scmp.eq.s32.totalorder %s17, 0
      %p140 = por %p138, %p139
      %p141 = scmp.ne.s32.totalorder %s133, %s135
      %p142 = scmp.eq.s32.totalorder %s22, 3
      %p143 = por %p141, %p142
      %p144 = scmp.ne.s32.totalorder %s135, %s136
      %p145 = scmp.eq.s32.totalorder %s22, 0
      %p146 = por %p144, %p145
      %p147 = scmp.ne.s32.totalorder %s135, %s136
      %p148 = scmp.eq.s32.totalorder %s23, 3
      %p149 = por %p147, %p148
      %p151 = scmp.ne.s32.totalorder %s136, %s150
      %p152 = scmp.eq.s32.totalorder %s23, 0
      %p153 = por %p151, %p152
      %s155 = sadd.s32 %s154, 1
      %p158 = scmp.eq.s32.totalorder %s17, 3
      %p159 = scmp.ne.s32.totalorder %s154, %s156
      %p160 = scmp.eq.s32.totalorder %s17, 0
      %p161 = por %p159, %p160
      %p162 = scmp.ne.s32.totalorder %s154, %s156
      %p163 = scmp.eq.s32.totalorder %s22, 3
      %p164 = por %p162, %p163
      %p165 = scmp.ne.s32.totalorder %s156, %s157
      %p166 = scmp.eq.s32.totalorder %s22, 0
      %p167 = por %p165, %p166
      %p168 = scmp.ne.s32.totalorder %s156, %s157
      %p169 = scmp.eq.s32.totalorder %s23, 3
      %p170 = por %p168, %p169
      %p172 = scmp.ne.s32.totalorder %s157, %s171
      %p173 = scmp.eq.s32.totalorder %s23, 0
      %p174 = por %p172, %p173
      %s176 = sadd.s32 %s175, 1
      %p179 = scmp.eq.s32.totalorder %s17, 3
      %p180 = scmp.ne.s32.totalorder %s175, %s177
      %p181 = scmp.eq.s32.totalorder %s17, 0
      %p182 = por %p180, %p181
      %p183 = scmp.ne.s32.totalorder %s175, %s177
      %p184 = scmp.eq.s32.totalorder %s22, 3
      %p185 = por %p183, %p184
      %p186 = scmp.ne.s32.totalorder %s177, %s178
      %p187 = scmp.eq.s32.totalorder %s22, 0
      %p188 = por %p186, %p187
      %p189 = scmp.ne.s32.totalorder %s177, %s178
      %p190 = scmp.eq.s32.totalorder %s23, 3
      %p191 = por %p189, %p190
      %p193 = scmp.ne.s32.totalorder %s178, %s192
      %p194 = scmp.eq.s32.totalorder %s23, 0
      %p195 = por %p193, %p194
      %s197 = sadd.s32 %s196, 1
      %p200 = scmp.eq.s32.totalorder %s17, 3
      %p201 = scmp.ne.s32.totalorder %s196, %s198
      %p202 = scmp.eq.s32.totalorder %s17, 0
      %p203 = por %p201, %p202
      %p204 = scmp.ne.s32.totalorder %s196, %s198
      %p205 = scmp.eq.s32.totalorder %s22, 3
      %p206 = por %p204, %p205
      %p207 = scmp.ne.s32.totalorder %s198, %s199
      %p208 = scmp.eq.s32.totalorder %s22, 0
      %p209 = por %p207, %p208
      %p210 = scmp.ne.s32.totalorder %s198, %s199
      %p211 = scmp.eq.s32.totalorder %s23, 3
      %p212 = por %p210, %p211
      %p214 = scmp.ne.s32.totalorder %s199, %s213
      %p215 = scmp.eq.s32.totalorder %s23, 0
      %p216 = por %p214, %p215
      %s217 = ssub.s32 %s24, %s36
      %s218 = ssub.s32 %s25, %s32
      %s219 = sor.u32 %s217, %s218
      %p220 = scmp.eq.s32.totalorder %s219, 0
      %s222 = sadd.s32 %s221, 1
      %s223 = scalar_select %p220, %s221, %s222
      %p226 = pneg %p220
      %p227 = scmp.eq.s32.totalorder %s17, 3
      %p228 = por %p226, %p227
      %p229 = scmp.ne.s32.totalorder %s221, %s224
      %p230 = scmp.eq.s32.totalorder %s17, 0
      %p231 = por %p229, %p230
      %p232 = scmp.ne.s32.totalorder %s221, %s224
      %p233 = scmp.eq.s32.totalorder %s22, 3
      %p234 = por %p232, %p233
      %p235 = scmp.ne.s32.totalorder %s224, %s225
      %p236 = scmp.eq.s32.totalorder %s22, 0
      %p237 = por %p235, %p236
      %p238 = scmp.ne.s32.totalorder %s224, %s225
      %p239 = scmp.eq.s32.totalorder %s23, 3
      %p240 = por %p238, %p239
      %p242 = scmp.ne.s32.totalorder %s225, %s241
      %p243 = scmp.eq.s32.totalorder %s23, 0
      %p244 = por %p242, %p243
      %p245 = scmp.le.s32.totalorder 1, %s17
      %p246 = scmp.lt.s32.totalorder %s17, 5
      %p247 = pnand %p245, %p246
      %p248 = pneg %p247
      // Predicated region
      $region9: #{bottleneck_forward.1} parent=5 // pred_check
        _
      $region10: #{bottleneck_forward.1} parent=5 // pred_check_branch
        %250 = sbr.rel (%p247) target = $region12
      $region11: #{bottleneck_forward.1} parent=5 // pred_region
        %s251 = ssub.s32 %s17, 1
        // Predicated region
        $region13: #{bottleneck_forward.1} parent=11 // pred_check
          %p252 = pneg %p104
        $region14: #{bottleneck_forward.1} parent=11 // pred_check_branch
          %254 = sbr.rel (%p252) target = $region16
        $region15: #{bottleneck_forward.1} parent=11 // pred_region
          _
        $region16: #{bottleneck_forward.1} parent=11 // pred_fallthru
          _
        // Predicated region
        $region17: #{bottleneck_forward.1} parent=11 // pred_check
          %p255 = pneg %p125
        $region18: #{bottleneck_forward.1} parent=11 // pred_check_branch
          %257 = sbr.rel (%p255) target = $region20
        $region19: #{bottleneck_forward.1} parent=11 // pred_region
          _
        $region20: #{bottleneck_forward.1} parent=11 // pred_fallthru
          _
        // Predicated region
        $region21: #{bottleneck_forward.1} parent=11 // pred_check
          %p258 = pneg %p146
        $region22: #{bottleneck_forward.1} parent=11 // pred_check_branch
          %260 = sbr.rel (%p258) target = $region24
        $region23: #{bottleneck_forward.1} parent=11 // pred_region
          _
        $region24: #{bottleneck_forward.1} parent=11 // pred_fallthru
          _
        // Predicated region
        $region25: #{bottleneck_forward.1} parent=11 // pred_check
          %p261 = pneg %p167
        $region26: #{bottleneck_forward.1} parent=11 // pred_check_branch
          %263 = sbr.rel (%p261) target = $region28
        $region27: #{bottleneck_forward.1} parent=11 // pred_region
          _
        $region28: #{bottleneck_forward.1} parent=11 // pred_fallthru
          _
        // Predicated region
        $region29: #{bottleneck_forward.1} parent=11 // pred_check
          %p264 = pneg %p188
        $region30: #{bottleneck_forward.1} parent=11 // pred_check_branch
          %266 = sbr.rel (%p264) target = $region32
        $region31: #{bottleneck_forward.1} parent=11 // pred_region
          _
        $region32: #{bottleneck_forward.1} parent=11 // pred_fallthru
          _
        // Predicated region
        $region33: #{bottleneck_forward.1} parent=11 // pred_check
          %p267 = pneg %p209
        $region34: #{bottleneck_forward.1} parent=11 // pred_check_branch
          %269 = sbr.rel (%p267) target = $region36
        $region35: #{bottleneck_forward.1} parent=11 // pred_region
          _
        $region36: #{bottleneck_forward.1} parent=11 // pred_fallthru
          _
      $region12: #{bottleneck_forward.1} parent=5 // pred_fallthru
        _
      %p270 = scmp.lt.s32.totalorder %s17, 4
      // Predicated region
      $region37: #{bottleneck_forward.1} parent=5 // pred_check
        %p271 = pneg %p270
      $region38: #{bottleneck_forward.1} parent=5 // pred_check_branch
        %273 = sbr.rel (%p271) target = $region40
      $region39: #{bottleneck_forward.1} parent=5 // pred_region
        // Predicated region
        $region41: #{bottleneck_forward.1} parent=39 // pred_check
          %p274 = pneg %p49
        $region42: #{bottleneck_forward.1} parent=39 // pred_check_branch
          %276 = sbr.rel (%p274) target = $region44
        $region43: #{bottleneck_forward.1} parent=39 // pred_region
          %p277 = scmp.lt.s32.totalorder %s24, 1
          %s278 = scalar_select %p277, %s24, 1
          %s279 = smul.addr %s278, 256
          %s280 = smul.addr %s279, 4
          %s281 = scalar_lea.vmem %s0, %s280
        $region44: #{bottleneck_forward.1} parent=39 // pred_fallthru
          _
        // Predicated region
        $region45: #{bottleneck_forward.1} parent=39 // pred_check
          %p282 = pneg %p77
        $region46: #{bottleneck_forward.1} parent=39 // pred_check_branch
          %284 = sbr.rel (%p282) target = $region48
        $region47: #{bottleneck_forward.1} parent=39 // pred_region
          %s285 = smul.u32 16, %s25
          %p286 = scmp.lt.s32.totalorder %s24, 1
          %s287 = scalar_select %p286, %s24, 1
          %p288 = scmp.lt.s32.totalorder %s285, 31
          %s289 = scalar_select %p288, %s285, 31
          %s290 = smul.addr %s289, 8
          %s291 = smul.addr %s287, 256
          %s292 = sadd.s32 %s290, %s291
          %s293 = smul.addr %s292, 8
          %s294 = scalar_lea.vmem %s1, %s293
          %s295 = smul.u32 16, %s25
        $region48: #{bottleneck_forward.1} parent=39 // pred_fallthru
          _
      $region40: #{bottleneck_forward.1} parent=5 // pred_fallthru
        _
      %p296 = scmp.le.s32.totalorder 1, %s17
      %p297 = scmp.lt.s32.totalorder %s17, 5
      %p298 = pnand %p296, %p297
      %p299 = pneg %p298
      // Predicated region
      $region49: #{bottleneck_forward.1} parent=5 // pred_check
        _
      $region50: #{bottleneck_forward.1} parent=5 // pred_check_branch
        %301 = sbr.rel (%p298) target = $region52
      $region51: #{bottleneck_forward.1} parent=5 // pred_region
        %s302 = ssub.s32 %s17, 1
        %p303 = scmp.lt.s32.totalorder %s26, 1
        %s304 = scalar_select %p303, %s26, 1
        %s305 = smul.addr %s304, 256
        %s306 = smul.addr %s305, 4
        %s307 = scalar_lea.vmem %s0, %s306
        %p308 = pneg %p55
        %p309 = pneg %p52
        %s310 = smul.u32 16, %s27
        %p311 = scmp.lt.s32.totalorder %s26, 1
        %s312 = scalar_select %p311, %s26, 1
        %p313 = scmp.lt.s32.totalorder %s310, 31
        %s314 = scalar_select %p313, %s310, 31
        %s315 = smul.addr %s314, 8
        %s316 = smul.addr %s312, 256
        %s317 = sadd.s32 %s315, %s316
        %s318 = smul.addr %s317, 8
        %s319 = scalar_lea.vmem %s1, %s318
        %p320 = pneg %p83
        %p321 = pneg %p80
        %p322 = pneg %p104
        %p323 = pneg %p101
        %p324 = pneg %p125
        %p325 = pneg %p122
        %p326 = pneg %p146
        %p327 = pneg %p143
        %p328 = pneg %p167
        %p329 = pneg %p164
        %p330 = pneg %p188
        %p331 = pneg %p185
        %p332 = pneg %p209
        %p333 = pneg %p206
        %p334 = pneg %p237
        %p335 = pneg %p234
        %s336 = sand.u32 %s224, 1
        %s337 = scalar_lea.sflag [#allocation4], %s336
        %s338 = sand.u32 %s224, 1
        %s339 = smul.addr %s338, 512
        %s340 = scalar_lea.vmem [#allocation3], %s339
        %p341 = scmp.lt.s32.totalorder %s26, 1
        %s342 = scalar_select %p341, %s26, 1
        %s343 = smul.addr %s342, 256
        %s344 = smul.addr %s343, 4
        %s345 = scalar_lea.vmem %s0, %s344
        %s346 = smul.u32 16, %s27
        %p347 = scmp.lt.s32.totalorder %s26, 1
        %s348 = scalar_select %p347, %s26, 1
        %p349 = scmp.lt.s32.totalorder %s346, 31
        %s350 = scalar_select %p349, %s346, 31
        %s351 = smul.addr %s350, 8
        %s352 = smul.addr %s348, 256
        %s353 = sadd.s32 %s351, %s352
        %s354 = smul.addr %s353, 8
        %s355 = scalar_lea.vmem %s1, %s354
        %s356 = smul.u32 16, %s27
        %s357 = smul.u32 16, %s27
        %s359 = smul.u32 %s27, 16
        %s360 = smul.u32 %s359, 8
        %s361 = smul.addr %s360, 4
        %s362 = scalar_lea.vmem %s345, %s361
        %v363 = vld [vmem:[%s362] sm:$0xff]
        %v364 = vld [vmem:[%s362 + $0x8] sm:$0xff]
        %v365 = vld [vmem:[%s362 + $0x10] sm:$0xff]
        %v366 = vld [vmem:[%s362 + $0x18] sm:$0xff]
        %v367 = vld [vmem:[%s362 + $0x20] sm:$0xff]
        %v368 = vld [vmem:[%s362 + $0x28] sm:$0xff]
        %v369 = vld [vmem:[%s362 + $0x30] sm:$0xff]
        %v370 = vld [vmem:[%s362 + $0x38] sm:$0xff]
        %v371 = vld [vmem:[%s362 + $0x40] sm:$0xff]
        %v372 = vld [vmem:[%s362 + $0x48] sm:$0xff]
        %v373 = vld [vmem:[%s362 + $0x50] sm:$0xff]
        %v374 = vld [vmem:[%s362 + $0x58] sm:$0xff]
        %v375 = vld [vmem:[%s362 + $0x60] sm:$0xff]
        %v376 = vld [vmem:[%s362 + $0x68] sm:$0xff]
        %v377 = vld [vmem:[%s362 + $0x70] sm:$0xff]
        %v378 = vld [vmem:[%s362 + $0x78] sm:$0xff]
        %v379 = vld [vmem:[%s362 + $0x80] sm:$0xff]
        %v380 = vld [vmem:[%s362 + $0x88] sm:$0xff]
        %v381 = vld [vmem:[%s362 + $0x90] sm:$0xff]
        %v382 = vld [vmem:[%s362 + $0x98] sm:$0xff]
        %v383 = vld [vmem:[%s362 + $0xa0] sm:$0xff]
        %v384 = vld [vmem:[%s362 + $0xa8] sm:$0xff]
        %v385 = vld [vmem:[%s362 + $0xb0] sm:$0xff]
        %v386 = vld [vmem:[%s362 + $0xb8] sm:$0xff]
        %v387 = vld [vmem:[%s362 + $0xc0] sm:$0xff]
        %v388 = vld [vmem:[%s362 + $0xc8] sm:$0xff]
        %v389 = vld [vmem:[%s362 + $0xd0] sm:$0xff]
        %v390 = vld [vmem:[%s362 + $0xd8] sm:$0xff]
        %v391 = vld [vmem:[%s362 + $0xe0] sm:$0xff]
        %v392 = vld [vmem:[%s362 + $0xe8] sm:$0xff]
        %v393 = vld [vmem:[%s362 + $0xf0] sm:$0xff]
        %v394 = vld [vmem:[%s362 + $0xf8] sm:$0xff]
        %v395 = vld [vmem:[%s362 + $0x100] sm:$0xff]
        %v396 = vld [vmem:[%s362 + $0x108] sm:$0xff]
        %v397 = vld [vmem:[%s362 + $0x110] sm:$0xff]
        %v398 = vld [vmem:[%s362 + $0x118] sm:$0xff]
        %v399 = vld [vmem:[%s362 + $0x120] sm:$0xff]
        %v400 = vld [vmem:[%s362 + $0x128] sm:$0xff]
        %v401 = vld [vmem:[%s362 + $0x130] sm:$0xff]
        %v402 = vld [vmem:[%s362 + $0x138] sm:$0xff]
        %v403 = vld [vmem:[%s362 + $0x140] sm:$0xff]
        %v404 = vld [vmem:[%s362 + $0x148] sm:$0xff]
        %v405 = vld [vmem:[%s362 + $0x150] sm:$0xff]
        %v406 = vld [vmem:[%s362 + $0x158] sm:$0xff]
        %v407 = vld [vmem:[%s362 + $0x160] sm:$0xff]
        %v408 = vld [vmem:[%s362 + $0x168] sm:$0xff]
        %v409 = vld [vmem:[%s362 + $0x170] sm:$0xff]
        %v410 = vld [vmem:[%s362 + $0x178] sm:$0xff]
        %v411 = vld [vmem:[%s362 + $0x180] sm:$0xff]
        %v412 = vld [vmem:[%s362 + $0x188] sm:$0xff]
        %v413 = vld [vmem:[%s362 + $0x190] sm:$0xff]
        %v414 = vld [vmem:[%s362 + $0x198] sm:$0xff]
        %v415 = vld [vmem:[%s362 + $0x1a0] sm:$0xff]
        %v416 = vld [vmem:[%s362 + $0x1a8] sm:$0xff]
        %v417 = vld [vmem:[%s362 + $0x1b0] sm:$0xff]
        %v418 = vld [vmem:[%s362 + $0x1b8] sm:$0xff]
        %v419 = vld [vmem:[%s362 + $0x1c0] sm:$0xff]
        %v420 = vld [vmem:[%s362 + $0x1c8] sm:$0xff]
        %v421 = vld [vmem:[%s362 + $0x1d0] sm:$0xff]
        %v422 = vld [vmem:[%s362 + $0x1d8] sm:$0xff]
        %v423 = vld [vmem:[%s362 + $0x1e0] sm:$0xff]
        %v424 = vld [vmem:[%s362 + $0x1e8] sm:$0xff]
        %v425 = vld [vmem:[%s362 + $0x1f0] sm:$0xff]
        %v426 = vld [vmem:[%s362 + $0x1f8] sm:$0xff]
        %v427 = vld [vmem:[%s2] sm:$0xf]
        %v428 = vld [vmem:[%s2 + $0x4] sm:$0xf]
        %v429 = vld [vmem:[%s2 + $0x8] sm:$0xf]
        %v430 = vld [vmem:[%s2 + $0xc] sm:$0xf]
        %v431 = vld [vmem:[%s2 + $0x10] sm:$0xf]
        %v432 = vld [vmem:[%s2 + $0x14] sm:$0xf]
        %v433 = vld [vmem:[%s2 + $0x18] sm:$0xf]
        %v434 = vld [vmem:[%s2 + $0x1c] sm:$0xf]
        %v435 = vld [vmem:[%s2 + $0x20] sm:$0xf]
        %v436 = vld [vmem:[%s2 + $0x24] sm:$0xf]
        %v437 = vld [vmem:[%s2 + $0x28] sm:$0xf]
        %v438 = vld [vmem:[%s2 + $0x2c] sm:$0xf]
        %v439 = vld [vmem:[%s2 + $0x30] sm:$0xf]
        %v440 = vld [vmem:[%s2 + $0x34] sm:$0xf]
        %v441 = vld [vmem:[%s2 + $0x38] sm:$0xf]
        %v442 = vld [vmem:[%s2 + $0x3c] sm:$0xf]
        %v443 = vld [vmem:[%s2 + $0x40] sm:$0xf]
        %v444 = vld [vmem:[%s2 + $0x44] sm:$0xf]
        %v445 = vld [vmem:[%s2 + $0x48] sm:$0xf]
        %v446 = vld [vmem:[%s2 + $0x4c] sm:$0xf]
        %v447 = vld [vmem:[%s2 + $0x50] sm:$0xf]
        %v448 = vld [vmem:[%s2 + $0x54] sm:$0xf]
        %v449 = vld [vmem:[%s2 + $0x58] sm:$0xf]
        %v450 = vld [vmem:[%s2 + $0x5c] sm:$0xf]
        %v451 = vld [vmem:[%s2 + $0x60] sm:$0xf]
        %v452 = vld [vmem:[%s2 + $0x64] sm:$0xf]
        %v453 = vld [vmem:[%s2 + $0x68] sm:$0xf]
        %v454 = vld [vmem:[%s2 + $0x6c] sm:$0xf]
        %v455 = vld [vmem:[%s2 + $0x70] sm:$0xf]
        %v456 = vld [vmem:[%s2 + $0x74] sm:$0xf]
        %v457 = vld [vmem:[%s2 + $0x78] sm:$0xf]
        %v458 = vld [vmem:[%s2 + $0x7c] sm:$0xf]
        %v459 = vld [vmem:[%s2 + $0x80] sm:$0xf]
        %v460 = vld [vmem:[%s2 + $0x84] sm:$0xf]
        %v461 = vld [vmem:[%s2 + $0x88] sm:$0xf]
        %v462 = vld [vmem:[%s2 + $0x8c] sm:$0xf]
        %v463 = vld [vmem:[%s2 + $0x90] sm:$0xf]
        %v464 = vld [vmem:[%s2 + $0x94] sm:$0xf]
        %v465 = vld [vmem:[%s2 + $0x98] sm:$0xf]
        %v466 = vld [vmem:[%s2 + $0x9c] sm:$0xf]
        %v467 = vld [vmem:[%s2 + $0xa0] sm:$0xf]
        %v468 = vld [vmem:[%s2 + $0xa4] sm:$0xf]
        %v469 = vld [vmem:[%s2 + $0xa8] sm:$0xf]
        %v470 = vld [vmem:[%s2 + $0xac] sm:$0xf]
        %v471 = vld [vmem:[%s2 + $0xb0] sm:$0xf]
        %v472 = vld [vmem:[%s2 + $0xb4] sm:$0xf]
        %v473 = vld [vmem:[%s2 + $0xb8] sm:$0xf]
        %v474 = vld [vmem:[%s2 + $0xbc] sm:$0xf]
        %v475 = vld [vmem:[%s2 + $0xc0] sm:$0xf]
        %v476 = vld [vmem:[%s2 + $0xc4] sm:$0xf]
        %v477 = vld [vmem:[%s2 + $0xc8] sm:$0xf]
        %v478 = vld [vmem:[%s2 + $0xcc] sm:$0xf]
        %v479 = vld [vmem:[%s2 + $0xd0] sm:$0xf]
        %v480 = vld [vmem:[%s2 + $0xd4] sm:$0xf]
        %v481 = vld [vmem:[%s2 + $0xd8] sm:$0xf]
        %v482 = vld [vmem:[%s2 + $0xdc] sm:$0xf]
        %v483 = vld [vmem:[%s2 + $0xe0] sm:$0xf]
        %v484 = vld [vmem:[%s2 + $0xe4] sm:$0xf]
        %v485 = vld [vmem:[%s2 + $0xe8] sm:$0xf]
        %v486 = vld [vmem:[%s2 + $0xec] sm:$0xf]
        %v487 = vld [vmem:[%s2 + $0xf0] sm:$0xf]
        %v488 = vld [vmem:[%s2 + $0xf4] sm:$0xf]
        %v489 = vld [vmem:[%s2 + $0xf8] sm:$0xf]
        %v490 = vld [vmem:[%s2 + $0xfc] sm:$0xf]
        %v491 = vld [vmem:[%s3] sm:$0x1]
        %v493 = vlaneseq
        %v494 = vshrl.u32 %v493, 7
        %v495 = vsub.s32 0, %v494
        %v496 = vrot.slane %v491, %v495
        %v562 = vunpack.c.l.b16 %v363
        %v563 = vunpack.c.h.b16 %v363
        %v564 = vunpack.c.l.b16 %v364
        %v565 = vunpack.c.h.b16 %v364
        %v566 = vunpack.c.l.b16 %v365
        %v567 = vunpack.c.h.b16 %v365
        %v568 = vunpack.c.l.b16 %v366
        %v569 = vunpack.c.h.b16 %v366
        %v570 = vunpack.c.l.b16 %v367
        %v571 = vunpack.c.h.b16 %v367
        %v572 = vunpack.c.l.b16 %v368
        %v573 = vunpack.c.h.b16 %v368
        %v574 = vunpack.c.l.b16 %v369
        %v575 = vunpack.c.h.b16 %v369
        %v576 = vunpack.c.l.b16 %v370
        %v577 = vunpack.c.h.b16 %v370
        %v578 = vunpack.c.l.b16 %v371
        %v579 = vunpack.c.h.b16 %v371
        %v580 = vunpack.c.l.b16 %v372
        %v581 = vunpack.c.h.b16 %v372
        %v582 = vunpack.c.l.b16 %v373
        %v583 = vunpack.c.h.b16 %v373
        %v584 = vunpack.c.l.b16 %v374
        %v585 = vunpack.c.h.b16 %v374
        %v586 = vunpack.c.l.b16 %v375
        %v587 = vunpack.c.h.b16 %v375
        %v588 = vunpack.c.l.b16 %v376
        %v589 = vunpack.c.h.b16 %v376
        %v590 = vunpack.c.l.b16 %v377
        %v591 = vunpack.c.h.b16 %v377
        %v592 = vunpack.c.l.b16 %v378
        %v593 = vunpack.c.h.b16 %v378
        %v594 = vunpack.c.l.b16 %v379
        %v595 = vunpack.c.h.b16 %v379
        %v596 = vunpack.c.l.b16 %v380
        %v597 = vunpack.c.h.b16 %v380
        %v598 = vunpack.c.l.b16 %v381
        %v599 = vunpack.c.h.b16 %v381
        %v600 = vunpack.c.l.b16 %v382
        %v601 = vunpack.c.h.b16 %v382
        %v602 = vunpack.c.l.b16 %v383
        %v603 = vunpack.c.h.b16 %v383
        %v604 = vunpack.c.l.b16 %v384
        %v605 = vunpack.c.h.b16 %v384
        %v606 = vunpack.c.l.b16 %v385
        %v607 = vunpack.c.h.b16 %v385
        %v608 = vunpack.c.l.b16 %v386
        %v609 = vunpack.c.h.b16 %v386
        %v610 = vunpack.c.l.b16 %v387
        %v611 = vunpack.c.h.b16 %v387
        %v612 = vunpack.c.l.b16 %v388
        %v613 = vunpack.c.h.b16 %v388
        %v614 = vunpack.c.l.b16 %v389
        %v615 = vunpack.c.h.b16 %v389
        %v616 = vunpack.c.l.b16 %v390
        %v617 = vunpack.c.h.b16 %v390
        %v618 = vunpack.c.l.b16 %v391
        %v619 = vunpack.c.h.b16 %v391
        %v620 = vunpack.c.l.b16 %v392
        %v621 = vunpack.c.h.b16 %v392
        %v622 = vunpack.c.l.b16 %v393
        %v623 = vunpack.c.h.b16 %v393
        %v624 = vunpack.c.l.b16 %v394
        %v625 = vunpack.c.h.b16 %v394
        %v626 = vunpack.c.l.b16 %v395
        %v627 = vunpack.c.h.b16 %v395
        %v628 = vunpack.c.l.b16 %v396
        %v629 = vunpack.c.h.b16 %v396
        %v630 = vunpack.c.l.b16 %v397
        %v631 = vunpack.c.h.b16 %v397
        %v632 = vunpack.c.l.b16 %v398
        %v633 = vunpack.c.h.b16 %v398
        %v634 = vunpack.c.l.b16 %v399
        %v635 = vunpack.c.h.b16 %v399
        %v636 = vunpack.c.l.b16 %v400
        %v637 = vunpack.c.h.b16 %v400
        %v638 = vunpack.c.l.b16 %v401
        %v639 = vunpack.c.h.b16 %v401
        %v640 = vunpack.c.l.b16 %v402
        %v641 = vunpack.c.h.b16 %v402
        %v642 = vunpack.c.l.b16 %v403
        %v643 = vunpack.c.h.b16 %v403
        %v644 = vunpack.c.l.b16 %v404
        %v645 = vunpack.c.h.b16 %v404
        %v646 = vunpack.c.l.b16 %v405
        %v647 = vunpack.c.h.b16 %v405
        %v648 = vunpack.c.l.b16 %v406
        %v649 = vunpack.c.h.b16 %v406
        %v650 = vunpack.c.l.b16 %v407
        %v651 = vunpack.c.h.b16 %v407
        %v652 = vunpack.c.l.b16 %v408
        %v653 = vunpack.c.h.b16 %v408
        %v654 = vunpack.c.l.b16 %v409
        %v655 = vunpack.c.h.b16 %v409
        %v656 = vunpack.c.l.b16 %v410
        %v657 = vunpack.c.h.b16 %v410
        %v658 = vunpack.c.l.b16 %v411
        %v659 = vunpack.c.h.b16 %v411
        %v660 = vunpack.c.l.b16 %v412
        %v661 = vunpack.c.h.b16 %v412
        %v662 = vunpack.c.l.b16 %v413
        %v663 = vunpack.c.h.b16 %v413
        %v664 = vunpack.c.l.b16 %v414
        %v665 = vunpack.c.h.b16 %v414
        %v666 = vunpack.c.l.b16 %v415
        %v667 = vunpack.c.h.b16 %v415
        %v668 = vunpack.c.l.b16 %v416
        %v669 = vunpack.c.h.b16 %v416
        %v670 = vunpack.c.l.b16 %v417
        %v671 = vunpack.c.h.b16 %v417
        %v672 = vunpack.c.l.b16 %v418
        %v673 = vunpack.c.h.b16 %v418
        %v674 = vunpack.c.l.b16 %v419
        %v675 = vunpack.c.h.b16 %v419
        %v676 = vunpack.c.l.b16 %v420
        %v677 = vunpack.c.h.b16 %v420
        %v678 = vunpack.c.l.b16 %v421
        %v679 = vunpack.c.h.b16 %v421
        %v680 = vunpack.c.l.b16 %v422
        %v681 = vunpack.c.h.b16 %v422
        %v682 = vunpack.c.l.b16 %v423
        %v683 = vunpack.c.h.b16 %v423
        %v684 = vunpack.c.l.b16 %v424
        %v685 = vunpack.c.h.b16 %v424
        %v686 = vunpack.c.l.b16 %v425
        %v687 = vunpack.c.h.b16 %v425
        %v688 = vunpack.c.l.b16 %v426
        %v689 = vunpack.c.h.b16 %v426
        %v690 = vpack.c.b16 %v566, %v562
        %v691 = vpack.c.b16 %v567, %v563
        %v692 = vpack.c.b16 %v568, %v564
        %v693 = vpack.c.b16 %v569, %v565
        %v694 = vpack.c.b16 %v574, %v570
        %v695 = vpack.c.b16 %v575, %v571
        %v696 = vpack.c.b16 %v576, %v572
        %v697 = vpack.c.b16 %v577, %v573
        %v698 = vpack.c.b16 %v582, %v578
        %v699 = vpack.c.b16 %v583, %v579
        %v700 = vpack.c.b16 %v584, %v580
        %v701 = vpack.c.b16 %v585, %v581
        %v702 = vpack.c.b16 %v590, %v586
        %v703 = vpack.c.b16 %v591, %v587
        %v704 = vpack.c.b16 %v592, %v588
        %v705 = vpack.c.b16 %v593, %v589
        %v706 = vpack.c.b16 %v598, %v594
        %v707 = vpack.c.b16 %v599, %v595
        %v708 = vpack.c.b16 %v600, %v596
        %v709 = vpack.c.b16 %v601, %v597
        %v710 = vpack.c.b16 %v606, %v602
        %v711 = vpack.c.b16 %v607, %v603
        %v712 = vpack.c.b16 %v608, %v604
        %v713 = vpack.c.b16 %v609, %v605
        %v714 = vpack.c.b16 %v614, %v610
        %v715 = vpack.c.b16 %v615, %v611
        %v716 = vpack.c.b16 %v616, %v612
        %v717 = vpack.c.b16 %v617, %v613
        %v718 = vpack.c.b16 %v622, %v618
        %v719 = vpack.c.b16 %v623, %v619
        %v720 = vpack.c.b16 %v624, %v620
        %v721 = vpack.c.b16 %v625, %v621
        %v722 = vpack.c.b16 %v630, %v626
        %v723 = vpack.c.b16 %v631, %v627
        %v724 = vpack.c.b16 %v632, %v628
        %v725 = vpack.c.b16 %v633, %v629
        %v726 = vpack.c.b16 %v638, %v634
        %v727 = vpack.c.b16 %v639, %v635
        %v728 = vpack.c.b16 %v640, %v636
        %v729 = vpack.c.b16 %v641, %v637
        %v730 = vpack.c.b16 %v646, %v642
        %v731 = vpack.c.b16 %v647, %v643
        %v732 = vpack.c.b16 %v648, %v644
        %v733 = vpack.c.b16 %v649, %v645
        %v734 = vpack.c.b16 %v654, %v650
        %v735 = vpack.c.b16 %v655, %v651
        %v736 = vpack.c.b16 %v656, %v652
        %v737 = vpack.c.b16 %v657, %v653
        %v738 = vpack.c.b16 %v662, %v658
        %v739 = vpack.c.b16 %v663, %v659
        %v740 = vpack.c.b16 %v664, %v660
        %v741 = vpack.c.b16 %v665, %v661
        %v742 = vpack.c.b16 %v670, %v666
        %v743 = vpack.c.b16 %v671, %v667
        %v744 = vpack.c.b16 %v672, %v668
        %v745 = vpack.c.b16 %v673, %v669
        %v746 = vpack.c.b16 %v678, %v674
        %v747 = vpack.c.b16 %v679, %v675
        %v748 = vpack.c.b16 %v680, %v676
        %v749 = vpack.c.b16 %v681, %v677
        %v750 = vpack.c.b16 %v686, %v682
        %v751 = vpack.c.b16 %v687, %v683
        %v752 = vpack.c.b16 %v688, %v684
        %v753 = vpack.c.b16 %v689, %v685
        %v882 = vunpack.c.l.b16 %v427
        %v883 = vunpack.c.l.b16 %v428
        %v884 = vunpack.c.l.b16 %v429
        %v885 = vunpack.c.l.b16 %v430
        %v886 = vunpack.c.l.b16 %v431
        %v887 = vunpack.c.l.b16 %v432
        %v888 = vunpack.c.l.b16 %v433
        %v889 = vunpack.c.l.b16 %v434
        %v890 = vunpack.c.l.b16 %v435
        %v891 = vunpack.c.l.b16 %v436
        %v892 = vunpack.c.l.b16 %v437
        %v893 = vunpack.c.l.b16 %v438
        %v894 = vunpack.c.l.b16 %v439
        %v895 = vunpack.c.l.b16 %v440
        %v896 = vunpack.c.l.b16 %v441
        %v897 = vunpack.c.l.b16 %v442
        %v898 = vunpack.c.l.b16 %v443
        %v899 = vunpack.c.l.b16 %v444
        %v900 = vunpack.c.l.b16 %v445
        %v901 = vunpack.c.l.b16 %v446
        %v902 = vunpack.c.l.b16 %v447
        %v903 = vunpack.c.l.b16 %v448
        %v904 = vunpack.c.l.b16 %v449
        %v905 = vunpack.c.l.b16 %v450
        %v906 = vunpack.c.l.b16 %v451
        %v907 = vunpack.c.l.b16 %v452
        %v908 = vunpack.c.l.b16 %v453
        %v909 = vunpack.c.l.b16 %v454
        %v910 = vunpack.c.l.b16 %v455
        %v911 = vunpack.c.l.b16 %v456
        %v912 = vunpack.c.l.b16 %v457
        %v913 = vunpack.c.l.b16 %v458
        %v914 = vunpack.c.l.b16 %v459
        %v915 = vunpack.c.l.b16 %v460
        %v916 = vunpack.c.l.b16 %v461
        %v917 = vunpack.c.l.b16 %v462
        %v918 = vunpack.c.l.b16 %v463
        %v919 = vunpack.c.l.b16 %v464
        %v920 = vunpack.c.l.b16 %v465
        %v921 = vunpack.c.l.b16 %v466
        %v922 = vunpack.c.l.b16 %v467
        %v923 = vunpack.c.l.b16 %v468
        %v924 = vunpack.c.l.b16 %v469
        %v925 = vunpack.c.l.b16 %v470
        %v926 = vunpack.c.l.b16 %v471
        %v927 = vunpack.c.l.b16 %v472
        %v928 = vunpack.c.l.b16 %v473
        %v929 = vunpack.c.l.b16 %v474
        %v930 = vunpack.c.l.b16 %v475
        %v931 = vunpack.c.l.b16 %v476
        %v932 = vunpack.c.l.b16 %v477
        %v933 = vunpack.c.l.b16 %v478
        %v934 = vunpack.c.l.b16 %v479
        %v935 = vunpack.c.l.b16 %v480
        %v936 = vunpack.c.l.b16 %v481
        %v937 = vunpack.c.l.b16 %v482
        %v938 = vunpack.c.l.b16 %v483
        %v939 = vunpack.c.l.b16 %v484
        %v940 = vunpack.c.l.b16 %v485
        %v941 = vunpack.c.l.b16 %v486
        %v942 = vunpack.c.l.b16 %v487
        %v943 = vunpack.c.l.b16 %v488
        %v944 = vunpack.c.l.b16 %v489
        %v945 = vunpack.c.l.b16 %v490
        %v946 = vpack.c.b16 %v883, %v882
        %v947 = vpack.c.b16 %v885, %v884
        %v948 = vpack.c.b16 %v887, %v886
        %v949 = vpack.c.b16 %v889, %v888
        %v950 = vpack.c.b16 %v891, %v890
        %v951 = vpack.c.b16 %v893, %v892
        %v952 = vpack.c.b16 %v895, %v894
        %v953 = vpack.c.b16 %v897, %v896
        %v954 = vpack.c.b16 %v899, %v898
        %v955 = vpack.c.b16 %v901, %v900
        %v956 = vpack.c.b16 %v903, %v902
        %v957 = vpack.c.b16 %v905, %v904
        %v958 = vpack.c.b16 %v907, %v906
        %v959 = vpack.c.b16 %v909, %v908
        %v960 = vpack.c.b16 %v911, %v910
        %v961 = vpack.c.b16 %v913, %v912
        %v962 = vpack.c.b16 %v915, %v914
        %v963 = vpack.c.b16 %v917, %v916
        %v964 = vpack.c.b16 %v919, %v918
        %v965 = vpack.c.b16 %v921, %v920
        %v966 = vpack.c.b16 %v923, %v922
        %v967 = vpack.c.b16 %v925, %v924
        %v968 = vpack.c.b16 %v927, %v926
        %v969 = vpack.c.b16 %v929, %v928
        %v970 = vpack.c.b16 %v931, %v930
        %v971 = vpack.c.b16 %v933, %v932
        %v972 = vpack.c.b16 %v935, %v934
        %v973 = vpack.c.b16 %v937, %v936
        %v974 = vpack.c.b16 %v939, %v938
        %v975 = vpack.c.b16 %v941, %v940
        %v976 = vpack.c.b16 %v943, %v942
        %v977 = vpack.c.b16 %v945, %v944
        %1010 = vmatprep.subr.bf16.mxu0 0
        %1011 = vmatpush1.bf16.msra.mxu0 %v946
        %1012 = vmatprep.subr.bf16.mxu0 0
        %1013 = vmatpush1.bf16.msra.mxu0 %v947
        %1014 = vmatprep.subr.bf16.mxu0 0
        %1015 = vmatpush1.bf16.msra.mxu0 %v948
        %1016 = vmatprep.subr.bf16.mxu0 0
        %1017 = vmatpush1.bf16.msra.mxu0 %v949
        %1018 = vmatprep.subr.bf16.mxu0 0
        %1019 = vmatpush1.bf16.msra.mxu0 %v950
        %1020 = vmatprep.subr.bf16.mxu0 0
        %1021 = vmatpush1.bf16.msra.mxu0 %v951
        %1022 = vmatprep.subr.bf16.mxu0 0
        %1023 = vmatpush1.bf16.msra.mxu0 %v952
        %1024 = vmatprep.subr.bf16.mxu0 0
        %1025 = vmatpush1.bf16.msra.mxu0 %v953
        %1026 = vmatprep.subr.bf16.mxu0 0
        %1027 = vmatpush1.bf16.msra.mxu0 %v954
        %1028 = vmatprep.subr.bf16.mxu0 0
        %1029 = vmatpush1.bf16.msra.mxu0 %v955
        %1030 = vmatprep.subr.bf16.mxu0 0
        %1031 = vmatpush1.bf16.msra.mxu0 %v956
        %1032 = vmatprep.subr.bf16.mxu0 0
        %1033 = vmatpush1.bf16.msra.mxu0 %v957
        %1034 = vmatprep.subr.bf16.mxu0 0
        %1035 = vmatpush1.bf16.msra.mxu0 %v958
        %1036 = vmatprep.subr.bf16.mxu0 0
        %1037 = vmatpush1.bf16.msra.mxu0 %v959
        %1038 = vmatprep.subr.bf16.mxu0 0
        %1039 = vmatpush1.bf16.msra.mxu0 %v960
        %1040 = vmatprep.subr.bf16.mxu0 0
        %1041 = vmatpush1.bf16.msra.mxu0 %v961
        %1042 = vmatprep.mubr.bf16.mxu0 %v691
        %1043 = vmatmul.mubr.bf16.gmra.mrb[0].mxu0 %v690
        %v1044 = vpop.f32.mrb[0].mxu0
        %v1045 = vadd.f32 %v496, %v1044
        %v1046 = vpop.f32.mrb[0].mxu0
        %v1047 = vpop.f32.mrb[0].mxu0
        %v1048 = vadd.f32 %v496, %v1047
        %v1049 = vpop.f32.mrb[0].mxu0
        %1050 = vmatprep.mubr.bf16.mxu0 %v695
        %1051 = vmatmul.mubr.bf16.gmra.mrb[0].mxu0 %v694
        %v1052 = vpop.f32.mrb[0].mxu0
        %v1053 = vadd.f32 %v496, %v1052
        %v1054 = vpop.f32.mrb[0].mxu0
        %v1055 = vpop.f32.mrb[0].mxu0
        %v1056 = vadd.f32 %v496, %v1055
        %v1057 = vpop.f32.mrb[0].mxu0
        %1058 = vmatprep.mubr.bf16.mxu0 %v699
        %1059 = vmatmul.mubr.bf16.gmra.mrb[0].mxu0 %v698
        %v1060 = vpop.f32.mrb[0].mxu0
        %v1061 = vadd.f32 %v496, %v1060
        %v1062 = vpop.f32.mrb[0].mxu0
        %v1063 = vpop.f32.mrb[0].mxu0
        %v1064 = vadd.f32 %v496, %v1063
        %v1065 = vpop.f32.mrb[0].mxu0
        %1066 = vmatprep.mubr.bf16.mxu0 %v703
        %1067 = vmatmul.mubr.bf16.gmra.mrb[0].mxu0 %v702
        %v1068 = vpop.f32.mrb[0].mxu0
        %v1069 = vadd.f32 %v496, %v1068
        %v1070 = vpop.f32.mrb[0].mxu0
        %v1071 = vpop.f32.mrb[0].mxu0
        %v1072 = vadd.f32 %v496, %v1071
        %v1073 = vpop.f32.mrb[0].mxu0
        %1074 = vmatprep.mubr.bf16.mxu0 %v707
        %1075 = vmatmul.mubr.bf16.gmra.mrb[0].mxu0 %v706
        %v1076 = vpop.f32.mrb[0].mxu0
        %v1077 = vadd.f32 %v496, %v1076
        %v1078 = vpop.f32.mrb[0].mxu0
        %v1079 = vpop.f32.mrb[0].mxu0
        %v1080 = vadd.f32 %v496, %v1079
        %v1081 = vpop.f32.mrb[0].mxu0
        %1082 = vmatprep.mubr.bf16.mxu0 %v711
        %1083 = vmatmul.mubr.bf16.gmra.mrb[0].mxu0 %v710
        %v1084 = vpop.f32.mrb[0].mxu0
        %v1085 = vadd.f32 %v496, %v1084
        %v1086 = vpop.f32.mrb[0].mxu0
        %v1087 = vpop.f32.mrb[0].mxu0
        %v1088 = vadd.f32 %v496, %v1087
        %v1089 = vpop.f32.mrb[0].mxu0
        %1090 = vmatprep.mubr.bf16.mxu0 %v715
        %1091 = vmatmul.mubr.bf16.gmra.mrb[0].mxu0 %v714
        %v1092 = vpop.f32.mrb[0].mxu0
        %v1093 = vadd.f32 %v496, %v1092
        %v1094 = vpop.f32.mrb[0].mxu0
        %v1095 = vpop.f32.mrb[0].mxu0
        %v1096 = vadd.f32 %v496, %v1095
        %v1097 = vpop.f32.mrb[0].mxu0
        %1098 = vmatprep.mubr.bf16.mxu0 %v719
        %1099 = vmatmul.mubr.bf16.gmra.mrb[0].mxu0 %v718
        %v1100 = vpop.f32.mrb[0].mxu0
        %v1101 = vadd.f32 %v496, %v1100
        %v1102 = vpop.f32.mrb[0].mxu0
        %v1103 = vpop.f32.mrb[0].mxu0
        %v1104 = vadd.f32 %v496, %v1103
        %v1105 = vpop.f32.mrb[0].mxu0
        %1106 = vmatprep.mubr.bf16.mxu0 %v723
        %1107 = vmatmul.mubr.bf16.gmra.mrb[0].mxu0 %v722
        %v1108 = vpop.f32.mrb[0].mxu0
        %v1109 = vadd.f32 %v496, %v1108
        %v1110 = vpop.f32.mrb[0].mxu0
        %v1111 = vpop.f32.mrb[0].mxu0
        %v1112 = vadd.f32 %v496, %v1111
        %v1113 = vpop.f32.mrb[0].mxu0
        %1114 = vmatprep.mubr.bf16.mxu0 %v727
        %1115 = vmatmul.mubr.bf16.gmra.mrb[0].mxu0 %v726
        %v1116 = vpop.f32.mrb[0].mxu0
        %v1117 = vadd.f32 %v496, %v1116
        %v1118 = vpop.f32.mrb[0].mxu0
        %v1119 = vpop.f32.mrb[0].mxu0
        %v1120 = vadd.f32 %v496, %v1119
        %v1121 = vpop.f32.mrb[0].mxu0
        %1122 = vmatprep.mubr.bf16.mxu0 %v731
        %1123 = vmatmul.mubr.bf16.gmra.mrb[0].mxu0 %v730
        %v1124 = vpop.f32.mrb[0].mxu0
        %v1125 = vadd.f32 %v496, %v1124
        %v1126 = vpop.f32.mrb[0].mxu0
        %v1127 = vpop.f32.mrb[0].mxu0
        %v1128 = vadd.f32 %v496, %v1127
        %v1129 = vpop.f32.mrb[0].mxu0
        %1130 = vmatprep.mubr.bf16.mxu0 %v735
        %1131 = vmatmul.mubr.bf16.gmra.mrb[0].mxu0 %v734
        %v1132 = vpop.f32.mrb[0].mxu0
        %v1133 = vadd.f32 %v496, %v1132
        %v1134 = vpop.f32.mrb[0].mxu0
        %v1135 = vpop.f32.mrb[0].mxu0
        %v1136 = vadd.f32 %v496, %v1135
        %v1137 = vpop.f32.mrb[0].mxu0
        %1138 = vmatprep.mubr.bf16.mxu0 %v739
        %1139 = vmatmul.mubr.bf16.gmra.mrb[0].mxu0 %v738
        %v1140 = vpop.f32.mrb[0].mxu0
        %v1141 = vadd.f32 %v496, %v1140
        %v1142 = vpop.f32.mrb[0].mxu0
        %v1143 = vpop.f32.mrb[0].mxu0
        %v1144 = vadd.f32 %v496, %v1143
        %v1145 = vpop.f32.mrb[0].mxu0
        %1146 = vmatprep.mubr.bf16.mxu0 %v743
        %1147 = vmatmul.mubr.bf16.gmra.mrb[0].mxu0 %v742
        %v1148 = vpop.f32.mrb[0].mxu0
        %v1149 = vadd.f32 %v496, %v1148
        %v1150 = vpop.f32.mrb[0].mxu0
        %v1151 = vpop.f32.mrb[0].mxu0
        %v1152 = vadd.f32 %v496, %v1151
        %v1153 = vpop.f32.mrb[0].mxu0
        %1154 = vmatprep.mubr.bf16.mxu0 %v747
        %1155 = vmatmul.mubr.bf16.gmra.mrb[0].mxu0 %v746
        %v1156 = vpop.f32.mrb[0].mxu0
        %v1157 = vadd.f32 %v496, %v1156
        %v1158 = vpop.f32.mrb[0].mxu0
        %v1159 = vpop.f32.mrb[0].mxu0
        %v1160 = vadd.f32 %v496, %v1159
        %v1161 = vpop.f32.mrb[0].mxu0
        %1162 = vmatprep.mubr.bf16.mxu0 %v751
        %1163 = vmatmul.mubr.bf16.gmra.mrb[0].mxu0 %v750
        %v1164 = vpop.f32.mrb[0].mxu0
        %v1165 = vadd.f32 %v496, %v1164
        %v1166 = vpop.f32.mrb[0].mxu0
        %v1167 = vpop.f32.mrb[0].mxu0
        %v1168 = vadd.f32 %v496, %v1167
        %v1169 = vpop.f32.mrb[0].mxu0
        %1170 = vdwg.mxu0
        %1171 = vmatprep.subr.bf16.mxu0 0
        %1172 = vmatpush1.bf16.msra.mxu0 %v962
        %1173 = vmatprep.subr.bf16.mxu0 0
        %1174 = vmatpush1.bf16.msra.mxu0 %v963
        %1175 = vmatprep.subr.bf16.mxu0 0
        %1176 = vmatpush1.bf16.msra.mxu0 %v964
        %1177 = vmatprep.subr.bf16.mxu0 0
        %1178 = vmatpush1.bf16.msra.mxu0 %v965
        %1179 = vmatprep.subr.bf16.mxu0 0
        %1180 = vmatpush1.bf16.msra.mxu0 %v966
        %1181 = vmatprep.subr.bf16.mxu0 0
        %1182 = vmatpush1.bf16.msra.mxu0 %v967
        %1183 = vmatprep.subr.bf16.mxu0 0
        %1184 = vmatpush1.bf16.msra.mxu0 %v968
        %1185 = vmatprep.subr.bf16.mxu0 0
        %1186 = vmatpush1.bf16.msra.mxu0 %v969
        %1187 = vmatprep.subr.bf16.mxu0 0
        %1188 = vmatpush1.bf16.msra.mxu0 %v970
        %1189 = vmatprep.subr.bf16.mxu0 0
        %1190 = vmatpush1.bf16.msra.mxu0 %v971
        %1191 = vmatprep.subr.bf16.mxu0 0
        %1192 = vmatpush1.bf16.msra.mxu0 %v972
        %1193 = vmatprep.subr.bf16.mxu0 0
        %1194 = vmatpush1.bf16.msra.mxu0 %v973
        %1195 = vmatprep.subr.bf16.mxu0 0
        %1196 = vmatpush1.bf16.msra.mxu0 %v974
        %1197 = vmatprep.subr.bf16.mxu0 0
        %1198 = vmatpush1.bf16.msra.mxu0 %v975
        %1199 = vmatprep.subr.bf16.mxu0 0
        %1200 = vmatpush1.bf16.msra.mxu0 %v976
        %1201 = vmatprep.subr.bf16.mxu0 0
        %1202 = vmatpush1.bf16.msra.mxu0 %v977
        %1203 = vmatprep.mubr.bf16.mxu0 %v693
        %1204 = vmatmul.mubr.bf16.gmra.mrb[0].mxu0 %v692
        %v1205 = vpop.f32.mrb[0].mxu0
        %v1206 = vadd.f32 %v1045, %v1205
        %v1207 = vpop.f32.mrb[0].mxu0
        %v1208 = vpop.f32.mrb[0].mxu0
        %v1209 = vadd.f32 %v1048, %v1208
        %v1210 = vpop.f32.mrb[0].mxu0
        %1211 = vmatprep.mubr.bf16.mxu0 %v697
        %1212 = vmatmul.mubr.bf16.gmra.mrb[0].mxu0 %v696
        %v1213 = vpop.f32.mrb[0].mxu0
        %v1214 = vadd.f32 %v1053, %v1213
        %v1215 = vpop.f32.mrb[0].mxu0
        %v1216 = vpop.f32.mrb[0].mxu0
        %v1217 = vadd.f32 %v1056, %v1216
        %v1218 = vpop.f32.mrb[0].mxu0
        %1219 = vmatprep.mubr.bf16.mxu0 %v701
        %1220 = vmatmul.mubr.bf16.gmra.mrb[0].mxu0 %v700
        %v1221 = vpop.f32.mrb[0].mxu0
        %v1222 = vadd.f32 %v1061, %v1221
        %v1223 = vpop.f32.mrb[0].mxu0
        %v1224 = vpop.f32.mrb[0].mxu0
        %v1225 = vadd.f32 %v1064, %v1224
        %v1226 = vpop.f32.mrb[0].mxu0
        %1227 = vmatprep.mubr.bf16.mxu0 %v705
        %1228 = vmatmul.mubr.bf16.gmra.mrb[0].mxu0 %v704
        %v1229 = vpop.f32.mrb[0].mxu0
        %v1230 = vadd.f32 %v1069, %v1229
        %v1231 = vpop.f32.mrb[0].mxu0
        %v1232 = vpop.f32.mrb[0].mxu0
        %v1233 = vadd.f32 %v1072, %v1232
        %v1234 = vpop.f32.mrb[0].mxu0
        %1235 = vmatprep.mubr.bf16.mxu0 %v709
        %1236 = vmatmul.mubr.bf16.gmra.mrb[0].mxu0 %v708
        %v1237 = vpop.f32.mrb[0].mxu0
        %v1238 = vadd.f32 %v1077, %v1237
        %v1239 = vpop.f32.mrb[0].mxu0
        %v1240 = vpop.f32.mrb[0].mxu0
        %v1241 = vadd.f32 %v1080, %v1240
        %v1242 = vpop.f32.mrb[0].mxu0
        %1243 = vmatprep.mubr.bf16.mxu0 %v713
        %1244 = vmatmul.mubr.bf16.gmra.mrb[0].mxu0 %v712
        %v1245 = vpop.f32.mrb[0].mxu0
        %v1246 = vadd.f32 %v1085, %v1245
        %v1247 = vpop.f32.mrb[0].mxu0
        %v1248 = vpop.f32.mrb[0].mxu0
        %v1249 = vadd.f32 %v1088, %v1248
        %v1250 = vpop.f32.mrb[0].mxu0
        %1251 = vmatprep.mubr.bf16.mxu0 %v717
        %1252 = vmatmul.mubr.bf16.gmra.mrb[0].mxu0 %v716
        %v1253 = vpop.f32.mrb[0].mxu0
        %v1254 = vadd.f32 %v1093, %v1253
        %v1255 = vpop.f32.mrb[0].mxu0
        %v1256 = vpop.f32.mrb[0].mxu0
        %v1257 = vadd.f32 %v1096, %v1256
        %v1258 = vpop.f32.mrb[0].mxu0
        %1259 = vmatprep.mubr.bf16.mxu0 %v721
        %1260 = vmatmul.mubr.bf16.gmra.mrb[0].mxu0 %v720
        %v1261 = vpop.f32.mrb[0].mxu0
        %v1262 = vadd.f32 %v1101, %v1261
        %v1263 = vpop.f32.mrb[0].mxu0
        %v1264 = vpop.f32.mrb[0].mxu0
        %v1265 = vadd.f32 %v1104, %v1264
        %v1266 = vpop.f32.mrb[0].mxu0
        %1267 = vmatprep.mubr.bf16.mxu0 %v725
        %1268 = vmatmul.mubr.bf16.gmra.mrb[0].mxu0 %v724
        %v1269 = vpop.f32.mrb[0].mxu0
        %v1270 = vadd.f32 %v1109, %v1269
        %v1271 = vpop.f32.mrb[0].mxu0
        %v1272 = vpop.f32.mrb[0].mxu0
        %v1273 = vadd.f32 %v1112, %v1272
        %v1274 = vpop.f32.mrb[0].mxu0
        %1275 = vmatprep.mubr.bf16.mxu0 %v729
        %1276 = vmatmul.mubr.bf16.gmra.mrb[0].mxu0 %v728
        %v1277 = vpop.f32.mrb[0].mxu0
        %v1278 = vadd.f32 %v1117, %v1277
        %v1279 = vpop.f32.mrb[0].mxu0
        %v1280 = vpop.f32.mrb[0].mxu0
        %v1281 = vadd.f32 %v1120, %v1280
        %v1282 = vpop.f32.mrb[0].mxu0
        %1283 = vmatprep.mubr.bf16.mxu0 %v733
        %1284 = vmatmul.mubr.bf16.gmra.mrb[0].mxu0 %v732
        %v1285 = vpop.f32.mrb[0].mxu0
        %v1286 = vadd.f32 %v1125, %v1285
        %v1287 = vpop.f32.mrb[0].mxu0
        %v1288 = vpop.f32.mrb[0].mxu0
        %v1289 = vadd.f32 %v1128, %v1288
        %v1290 = vpop.f32.mrb[0].mxu0
        %1291 = vmatprep.mubr.bf16.mxu0 %v737
        %1292 = vmatmul.mubr.bf16.gmra.mrb[0].mxu0 %v736
        %v1293 = vpop.f32.mrb[0].mxu0
        %v1294 = vadd.f32 %v1133, %v1293
        %v1295 = vpop.f32.mrb[0].mxu0
        %v1296 = vpop.f32.mrb[0].mxu0
        %v1297 = vadd.f32 %v1136, %v1296
        %v1298 = vpop.f32.mrb[0].mxu0
        %1299 = vmatprep.mubr.bf16.mxu0 %v741
        %1300 = vmatmul.mubr.bf16.gmra.mrb[0].mxu0 %v740
        %v1301 = vpop.f32.mrb[0].mxu0
        %v1302 = vadd.f32 %v1141, %v1301
        %v1303 = vpop.f32.mrb[0].mxu0
        %v1304 = vpop.f32.mrb[0].mxu0
        %v1305 = vadd.f32 %v1144, %v1304
        %v1306 = vpop.f32.mrb[0].mxu0
        %1307 = vmatprep.mubr.bf16.mxu0 %v745
        %1308 = vmatmul.mubr.bf16.gmra.mrb[0].mxu0 %v744
        %v1309 = vpop.f32.mrb[0].mxu0
        %v1310 = vadd.f32 %v1149, %v1309
        %v1311 = vpop.f32.mrb[0].mxu0
        %v1312 = vpop.f32.mrb[0].mxu0
        %v1313 = vadd.f32 %v1152, %v1312
        %v1314 = vpop.f32.mrb[0].mxu0
        %1315 = vmatprep.mubr.bf16.mxu0 %v749
        %1316 = vmatmul.mubr.bf16.gmra.mrb[0].mxu0 %v748
        %v1317 = vpop.f32.mrb[0].mxu0
        %v1318 = vadd.f32 %v1157, %v1317
        %v1319 = vpop.f32.mrb[0].mxu0
        %v1320 = vpop.f32.mrb[0].mxu0
        %v1321 = vadd.f32 %v1160, %v1320
        %v1322 = vpop.f32.mrb[0].mxu0
        %1323 = vmatprep.mubr.bf16.mxu0 %v753
        %1324 = vmatmul.mubr.bf16.gmra.mrb[0].mxu0 %v752
        %v1325 = vpop.f32.mrb[0].mxu0
        %v1326 = vadd.f32 %v1165, %v1325
        %v1327 = vpop.f32.mrb[0].mxu0
        %v1328 = vpop.f32.mrb[0].mxu0
        %v1329 = vadd.f32 %v1168, %v1328
        %v1330 = vpop.f32.mrb[0].mxu0
        %1331 = vdwg.mxu0
        %v1332 = vmax.f32 %v1206, 0.0
        %v1333 = vmax.f32 %v1209, 0.0
        %v1334 = vmax.f32 %v1214, 0.0
        %v1335 = vmax.f32 %v1217, 0.0
        %v1336 = vmax.f32 %v1222, 0.0
        %v1337 = vmax.f32 %v1225, 0.0
        %v1338 = vmax.f32 %v1230, 0.0
        %v1339 = vmax.f32 %v1233, 0.0
        %v1340 = vmax.f32 %v1238, 0.0
        %v1341 = vmax.f32 %v1241, 0.0
        %v1342 = vmax.f32 %v1246, 0.0
        %v1343 = vmax.f32 %v1249, 0.0
        %v1344 = vmax.f32 %v1254, 0.0
        %v1345 = vmax.f32 %v1257, 0.0
        %v1346 = vmax.f32 %v1262, 0.0
        %v1347 = vmax.f32 %v1265, 0.0
        %v1348 = vmax.f32 %v1270, 0.0
        %v1349 = vmax.f32 %v1273, 0.0
        %v1350 = vmax.f32 %v1278, 0.0
        %v1351 = vmax.f32 %v1281, 0.0
        %v1352 = vmax.f32 %v1286, 0.0
        %v1353 = vmax.f32 %v1289, 0.0
        %v1354 = vmax.f32 %v1294, 0.0
        %v1355 = vmax.f32 %v1297, 0.0
        %v1356 = vmax.f32 %v1302, 0.0
        %v1357 = vmax.f32 %v1305, 0.0
        %v1358 = vmax.f32 %v1310, 0.0
        %v1359 = vmax.f32 %v1313, 0.0
        %v1360 = vmax.f32 %v1318, 0.0
        %v1361 = vmax.f32 %v1321, 0.0
        %v1362 = vmax.f32 %v1326, 0.0
        %v1363 = vmax.f32 %v1329, 0.0
        %s1364 = ssub.s32 %s359, 1
        %p1365 = scmp.gt.s32.totalorder %s1364, 0
        %s1366 = scalar_select %p1365, %s1364, 0
        %s1367 = smul.u32 %s1366, 8
        %s1368 = smul.addr %s1367, 4
        %s1369 = scalar_lea.vmem %s345, %s1368
        %v1370 = vld [vmem:[%s1369] sm:$0xff]
        %v1371 = vld [vmem:[%s1369 + $0x8] sm:$0xff]
        %v1372 = vld [vmem:[%s1369 + $0x10] sm:$0xff]
        %v1373 = vld [vmem:[%s1369 + $0x18] sm:$0xff]
        %v1378 = vunpack.c.l.b16 %v1370
        %v1379 = vunpack.c.h.b16 %v1370
        %v1380 = vunpack.c.l.b16 %v1371
        %v1381 = vunpack.c.h.b16 %v1371
        %v1382 = vunpack.c.l.b16 %v1372
        %v1383 = vunpack.c.h.b16 %v1372
        %v1384 = vunpack.c.l.b16 %v1373
        %v1385 = vunpack.c.h.b16 %v1373
        %v1386 = vpack.c.b16 %v1382, %v1378
        %v1387 = vpack.c.b16 %v1383, %v1379
        %v1388 = vpack.c.b16 %v1384, %v1380
        %v1389 = vpack.c.b16 %v1385, %v1381
        %1394 = vmatprep.subr.bf16.mxu0 0
        %1395 = vmatpush1.bf16.msra.mxu0 %v946
        %1396 = vmatprep.subr.bf16.mxu0 0
        %1397 = vmatpush1.bf16.msra.mxu0 %v947
        %1398 = vmatprep.subr.bf16.mxu0 0
        %1399 = vmatpush1.bf16.msra.mxu0 %v948
        %1400 = vmatprep.subr.bf16.mxu0 0
        %1401 = vmatpush1.bf16.msra.mxu0 %v949
        %1402 = vmatprep.subr.bf16.mxu0 0
        %1403 = vmatpush1.bf16.msra.mxu0 %v950
        %1404 = vmatprep.subr.bf16.mxu0 0
        %1405 = vmatpush1.bf16.msra.mxu0 %v951
        %1406 = vmatprep.subr.bf16.mxu0 0
        %1407 = vmatpush1.bf16.msra.mxu0 %v952
        %1408 = vmatprep.subr.bf16.mxu0 0
        %1409 = vmatpush1.bf16.msra.mxu0 %v953
        %1410 = vmatprep.subr.bf16.mxu0 0
        %1411 = vmatpush1.bf16.msra.mxu0 %v954
        %1412 = vmatprep.subr.bf16.mxu0 0
        %1413 = vmatpush1.bf16.msra.mxu0 %v955
        %1414 = vmatprep.subr.bf16.mxu0 0
        %1415 = vmatpush1.bf16.msra.mxu0 %v956
        %1416 = vmatprep.subr.bf16.mxu0 0
        %1417 = vmatpush1.bf16.msra.mxu0 %v957
        %1418 = vmatprep.subr.bf16.mxu0 0
        %1419 = vmatpush1.bf16.msra.mxu0 %v958
        %1420 = vmatprep.subr.bf16.mxu0 0
        %1421 = vmatpush1.bf16.msra.mxu0 %v959
        %1422 = vmatprep.subr.bf16.mxu0 0
        %1423 = vmatpush1.bf16.msra.mxu0 %v960
        %1424 = vmatprep.subr.bf16.mxu0 0
        %1425 = vmatpush1.bf16.msra.mxu0 %v961
        %1426 = vmatprep.mubr.bf16.mxu0 %v1387
        %1427 = vmatmul.mubr.bf16.gmra.mrb[0].mxu0 %v1386
        %v1428 = vpop.f32.mrb[0].mxu0
        %v1429 = vadd.f32 %v496, %v1428
        %v1430 = vpop.f32.mrb[0].mxu0
        %v1431 = vpop.f32.mrb[0].mxu0
        %v1432 = vadd.f32 %v496, %v1431
        %v1433 = vpop.f32.mrb[0].mxu0
        %1434 = vdwg.mxu0
        %1435 = vmatprep.subr.bf16.mxu0 0
        %1436 = vmatpush1.bf16.msra.mxu0 %v962
        %1437 = vmatprep.subr.bf16.mxu0 0
        %1438 = vmatpush1.bf16.msra.mxu0 %v963
        %1439 = vmatprep.subr.bf16.mxu0 0
        %1440 = vmatpush1.bf16.msra.mxu0 %v964
        %1441 = vmatprep.subr.bf16.mxu0 0
        %1442 = vmatpush1.bf16.msra.mxu0 %v965
        %1443 = vmatprep.subr.bf16.mxu0 0
        %1444 = vmatpush1.bf16.msra.mxu0 %v966
        %1445 = vmatprep.subr.bf16.mxu0 0
        %1446 = vmatpush1.bf16.msra.mxu0 %v967
        %1447 = vmatprep.subr.bf16.mxu0 0
        %1448 = vmatpush1.bf16.msra.mxu0 %v968
        %1449 = vmatprep.subr.bf16.mxu0 0
        %1450 = vmatpush1.bf16.msra.mxu0 %v969
        %1451 = vmatprep.subr.bf16.mxu0 0
        %1452 = vmatpush1.bf16.msra.mxu0 %v970
        %1453 = vmatprep.subr.bf16.mxu0 0
        %1454 = vmatpush1.bf16.msra.mxu0 %v971
        %1455 = vmatprep.subr.bf16.mxu0 0
        %1456 = vmatpush1.bf16.msra.mxu0 %v972
        %1457 = vmatprep.subr.bf16.mxu0 0
        %1458 = vmatpush1.bf16.msra.mxu0 %v973
        %1459 = vmatprep.subr.bf16.mxu0 0
        %1460 = vmatpush1.bf16.msra.mxu0 %v974
        %1461 = vmatprep.subr.bf16.mxu0 0
        %1462 = vmatpush1.bf16.msra.mxu0 %v975
        %1463 = vmatprep.subr.bf16.mxu0 0
        %1464 = vmatpush1.bf16.msra.mxu0 %v976
        %1465 = vmatprep.subr.bf16.mxu0 0
        %1466 = vmatpush1.bf16.msra.mxu0 %v977
        %1467 = vmatprep.mubr.bf16.mxu0 %v1389
        %1468 = vmatmul.mubr.bf16.gmra.mrb[0].mxu0 %v1388
        %v1469 = vpop.f32.mrb[0].mxu0
        %v1470 = vadd.f32 %v1429, %v1469
        %v1471 = vpop.f32.mrb[0].mxu0
        %v1472 = vpop.f32.mrb[0].mxu0
        %v1473 = vadd.f32 %v1432, %v1472
        %v1474 = vpop.f32.mrb[0].mxu0
        %1475 = vdwg.mxu0
        %v1476 = vmax.f32 %v1470, 0.0
        %v1477 = vmax.f32 %v1473, 0.0
        %s1478 = sadd.s32 %s359, 16
        %p1479 = scmp.lt.s32.totalorder %s1478, 31
        %s1480 = scalar_select %p1479, %s1478, 31
        %s1481 = smul.u32 %s1480, 8
        %s1482 = smul.addr %s1481, 4
        %s1483 = scalar_lea.vmem %s345, %s1482
        %v1484 = vld [vmem:[%s1483] sm:$0xff]
        %v1485 = vld [vmem:[%s1483 + $0x8] sm:$0xff]
        %v1486 = vld [vmem:[%s1483 + $0x10] sm:$0xff]
        %v1487 = vld [vmem:[%s1483 + $0x18] sm:$0xff]
        %v1492 = vunpack.c.l.b16 %v1484
        %v1493 = vunpack.c.h.b16 %v1484
        %v1494 = vunpack.c.l.b16 %v1485
        %v1495 = vunpack.c.h.b16 %v1485
        %v1496 = vunpack.c.l.b16 %v1486
        %v1497 = vunpack.c.h.b16 %v1486
        %v1498 = vunpack.c.l.b16 %v1487
        %v1499 = vunpack.c.h.b16 %v1487
        %v1500 = vpack.c.b16 %v1496, %v1492
        %v1501 = vpack.c.b16 %v1497, %v1493
        %v1502 = vpack.c.b16 %v1498, %v1494
        %v1503 = vpack.c.b16 %v1499, %v1495
        %1508 = vmatprep.subr.bf16.mxu0 0
        %1509 = vmatpush1.bf16.msra.mxu0 %v946
        %1510 = vmatprep.subr.bf16.mxu0 0
        %1511 = vmatpush1.bf16.msra.mxu0 %v947
        %1512 = vmatprep.subr.bf16.mxu0 0
        %1513 = vmatpush1.bf16.msra.mxu0 %v948
        %1514 = vmatprep.subr.bf16.mxu0 0
        %1515 = vmatpush1.bf16.msra.mxu0 %v949
        %1516 = vmatprep.subr.bf16.mxu0 0
        %1517 = vmatpush1.bf16.msra.mxu0 %v950
        %1518 = vmatprep.subr.bf16.mxu0 0
        %1519 = vmatpush1.bf16.msra.mxu0 %v951
        %1520 = vmatprep.subr.bf16.mxu0 0
        %1521 = vmatpush1.bf16.msra.mxu0 %v952
        %1522 = vmatprep.subr.bf16.mxu0 0
        %1523 = vmatpush1.bf16.msra.mxu0 %v953
        %1524 = vmatprep.subr.bf16.mxu0 0
        %1525 = vmatpush1.bf16.msra.mxu0 %v954
        %1526 = vmatprep.subr.bf16.mxu0 0
        %1527 = vmatpush1.bf16.msra.mxu0 %v955
        %1528 = vmatprep.subr.bf16.mxu0 0
        %1529 = vmatpush1.bf16.msra.mxu0 %v956
        %1530 = vmatprep.subr.bf16.mxu0 0
        %1531 = vmatpush1.bf16.msra.mxu0 %v957
        %1532 = vmatprep.subr.bf16.mxu0 0
        %1533 = vmatpush1.bf16.msra.mxu0 %v958
        %1534 = vmatprep.subr.bf16.mxu0 0
        %1535 = vmatpush1.bf16.msra.mxu0 %v959
        %1536 = vmatprep.subr.bf16.mxu0 0
        %1537 = vmatpush1.bf16.msra.mxu0 %v960
        %1538 = vmatprep.subr.bf16.mxu0 0
        %1539 = vmatpush1.bf16.msra.mxu0 %v961
        %1540 = vmatprep.mubr.bf16.mxu0 %v1501
        %1541 = vmatmul.mubr.bf16.gmra.mrb[0].mxu0 %v1500
        %v1542 = vpop.f32.mrb[0].mxu0
        %v1543 = vadd.f32 %v496, %v1542
        %v1544 = vpop.f32.mrb[0].mxu0
        %v1545 = vpop.f32.mrb[0].mxu0
        %v1546 = vadd.f32 %v496, %v1545
        %v1547 = vpop.f32.mrb[0].mxu0
        %1548 = vdwg.mxu0
        %1549 = vmatprep.subr.bf16.mxu0 0
        %1550 = vmatpush1.bf16.msra.mxu0 %v962
        %1551 = vmatprep.subr.bf16.mxu0 0
        %1552 = vmatpush1.bf16.msra.mxu0 %v963
        %1553 = vmatprep.subr.bf16.mxu0 0
        %1554 = vmatpush1.bf16.msra.mxu0 %v964
        %1555 = vmatprep.subr.bf16.mxu0 0
        %1556 = vmatpush1.bf16.msra.mxu0 %v965
        %1557 = vmatprep.subr.bf16.mxu0 0
        %1558 = vmatpush1.bf16.msra.mxu0 %v966
        %1559 = vmatprep.subr.bf16.mxu0 0
        %1560 = vmatpush1.bf16.msra.mxu0 %v967
        %1561 = vmatprep.subr.bf16.mxu0 0
        %1562 = vmatpush1.bf16.msra.mxu0 %v968
        %1563 = vmatprep.subr.bf16.mxu0 0
        %1564 = vmatpush1.bf16.msra.mxu0 %v969
        %1565 = vmatprep.subr.bf16.mxu0 0
        %1566 = vmatpush1.bf16.msra.mxu0 %v970
        %1567 = vmatprep.subr.bf16.mxu0 0
        %1568 = vmatpush1.bf16.msra.mxu0 %v971
        %1569 = vmatprep.subr.bf16.mxu0 0
        %1570 = vmatpush1.bf16.msra.mxu0 %v972
        %1571 = vmatprep.subr.bf16.mxu0 0
        %1572 = vmatpush1.bf16.msra.mxu0 %v973
        %1573 = vmatprep.subr.bf16.mxu0 0
        %1574 = vmatpush1.bf16.msra.mxu0 %v974
        %1575 = vmatprep.subr.bf16.mxu0 0
        %1576 = vmatpush1.bf16.msra.mxu0 %v975
        %1577 = vmatprep.subr.bf16.mxu0 0
        %1578 = vmatpush1.bf16.msra.mxu0 %v976
        %1579 = vmatprep.subr.bf16.mxu0 0
        %1580 = vmatpush1.bf16.msra.mxu0 %v977
        %1581 = vmatprep.mubr.bf16.mxu0 %v1503
        %1582 = vmatmul.mubr.bf16.gmra.mrb[0].mxu0 %v1502
        %v1583 = vpop.f32.mrb[0].mxu0
        %v1584 = vadd.f32 %v1543, %v1583
        %v1585 = vpop.f32.mrb[0].mxu0
        %v1586 = vpop.f32.mrb[0].mxu0
        %v1587 = vadd.f32 %v1546, %v1586
        %v1588 = vpop.f32.mrb[0].mxu0
        %1589 = vdwg.mxu0
        %v1590 = vmax.f32 %v1584, 0.0
        %v1591 = vmax.f32 %v1587, 0.0
        %p1592 = scmp.gt.s32.totalorder %s27, 0
        %s1593 = scalar_select %p1592, 1, 0
        %s1594 = scvt.s32.f32 %s1593
        %p1595 = scmp.lt.s32.totalorder %s27, 1
        %s1596 = scalar_select %p1595, 1, 0
        %s1597 = scvt.s32.f32 %s1596
        %v1598 = vpack.c.bf16 %v1333, %v1332
        %v1599 = vpack.c.bf16 %v1335, %v1334
        %v1600 = vpack.c.bf16 %v1337, %v1336
        %v1601 = vpack.c.bf16 %v1339, %v1338
        %v1602 = vpack.c.bf16 %v1341, %v1340
        %v1603 = vpack.c.bf16 %v1343, %v1342
        %v1604 = vpack.c.bf16 %v1345, %v1344
        %v1605 = vpack.c.bf16 %v1347, %v1346
        %v1606 = vpack.c.bf16 %v1349, %v1348
        %v1607 = vpack.c.bf16 %v1351, %v1350
        %v1608 = vpack.c.bf16 %v1353, %v1352
        %v1609 = vpack.c.bf16 %v1355, %v1354
        %v1610 = vpack.c.bf16 %v1357, %v1356
        %v1611 = vpack.c.bf16 %v1359, %v1358
        %v1612 = vpack.c.bf16 %v1361, %v1360
        %v1613 = vpack.c.bf16 %v1363, %v1362
        %v1630 = vunpack.c.l.b16 %v1598
        %v1631 = vunpack.c.h.b16 %v1598
        %v1632 = vunpack.c.l.b16 %v1599
        %v1633 = vunpack.c.h.b16 %v1599
        %v1634 = vunpack.c.l.b16 %v1600
        %v1635 = vunpack.c.h.b16 %v1600
        %v1636 = vunpack.c.l.b16 %v1601
        %v1637 = vunpack.c.h.b16 %v1601
        %v1638 = vunpack.c.l.b16 %v1602
        %v1639 = vunpack.c.h.b16 %v1602
        %v1640 = vunpack.c.l.b16 %v1603
        %v1641 = vunpack.c.h.b16 %v1603
        %v1642 = vunpack.c.l.b16 %v1604
        %v1643 = vunpack.c.h.b16 %v1604
        %v1644 = vunpack.c.l.b16 %v1605
        %v1645 = vunpack.c.h.b16 %v1605
        %v1646 = vunpack.c.l.b16 %v1606
        %v1647 = vunpack.c.h.b16 %v1606
        %v1648 = vunpack.c.l.b16 %v1607
        %v1649 = vunpack.c.h.b16 %v1607
        %v1650 = vunpack.c.l.b16 %v1608
        %v1651 = vunpack.c.h.b16 %v1608
        %v1652 = vunpack.c.l.b16 %v1609
        %v1653 = vunpack.c.h.b16 %v1609
        %v1654 = vunpack.c.l.b16 %v1610
        %v1655 = vunpack.c.h.b16 %v1610
        %v1656 = vunpack.c.l.b16 %v1611
        %v1657 = vunpack.c.h.b16 %v1611
        %v1658 = vunpack.c.l.b16 %v1612
        %v1659 = vunpack.c.h.b16 %v1612
        %v1660 = vunpack.c.l.b16 %v1613
        %v1661 = vunpack.c.h.b16 %v1613
        %v1662 = vpack.c.b16 %v1630, %v1630
        %v1663 = vpack.c.b16 %v1631, %v1631
        %v1664 = vpack.c.b16 %v1632, %v1632
        %v1665 = vpack.c.b16 %v1633, %v1633
        %v1666 = vpack.c.b16 %v1634, %v1634
        %v1667 = vpack.c.b16 %v1635, %v1635
        %v1668 = vpack.c.b16 %v1636, %v1636
        %v1669 = vpack.c.b16 %v1637, %v1637
        %v1670 = vpack.c.b16 %v1638, %v1638
        %v1671 = vpack.c.b16 %v1639, %v1639
        %v1672 = vpack.c.b16 %v1640, %v1640
        %v1673 = vpack.c.b16 %v1641, %v1641
        %v1674 = vpack.c.b16 %v1642, %v1642
        %v1675 = vpack.c.b16 %v1643, %v1643
        %v1676 = vpack.c.b16 %v1644, %v1644
        %v1677 = vpack.c.b16 %v1645, %v1645
        %v1678 = vpack.c.b16 %v1646, %v1646
        %v1679 = vpack.c.b16 %v1647, %v1647
        %v1680 = vpack.c.b16 %v1648, %v1648
        %v1681 = vpack.c.b16 %v1649, %v1649
        %v1682 = vpack.c.b16 %v1650, %v1650
        %v1683 = vpack.c.b16 %v1651, %v1651
        %v1684 = vpack.c.b16 %v1652, %v1652
        %v1685 = vpack.c.b16 %v1653, %v1653
        %v1686 = vpack.c.b16 %v1654, %v1654
        %v1687 = vpack.c.b16 %v1655, %v1655
        %v1688 = vpack.c.b16 %v1656, %v1656
        %v1689 = vpack.c.b16 %v1657, %v1657
        %v1690 = vpack.c.b16 %v1658, %v1658
        %v1691 = vpack.c.b16 %v1659, %v1659
        %v1692 = vpack.c.b16 %v1660, %v1660
        %v1693 = vpack.c.b16 %v1661, %v1661
        %vm1694 = vsmask.f32 256
        %vm1695 = vsmask.f32 4368
        %vm1696 = vmor %vm1694, %vm1695
        %v1698 = vshrl.u32 %v1662, 16
        %v1700 = vrot.slane %v1698, 7
        %v1701 = vshll.u32 %v1662, 16
        %v1703 = vor.u32 %v1700, %v1701
        %v1704 = vrot.slane %v1700, 4
        %v1706 = vshrl.u32 %v1663, 16
        %v1708 = vrot.slane %v1706, 7
        %v1709 = vshll.u32 %v1663, 16
        %v1711 = vor.u32 %v1708, %v1709
        %v1712 = vsel %vm1696, %v1704, %v1711
        %v1713 = vrot.slane %v1708, 4
        %v1715 = vshrl.u32 %v1664, 16
        %v1717 = vrot.slane %v1715, 7
        %v1718 = vshll.u32 %v1664, 16
        %v1720 = vor.u32 %v1717, %v1718
        %v1721 = vrot.slane %v1717, 4
        %v1723 = vshrl.u32 %v1665, 16
        %v1725 = vrot.slane %v1723, 7
        %v1726 = vshll.u32 %v1665, 16
        %v1728 = vor.u32 %v1725, %v1726
        %v1729 = vsel %vm1696, %v1721, %v1728
        %v1730 = vrot.slane %v1725, 4
        %v1732 = vshrl.u32 %v1666, 16
        %v1734 = vrot.slane %v1732, 7
        %v1735 = vshll.u32 %v1666, 16
        %v1737 = vor.u32 %v1734, %v1735
        %v1738 = vrot.slane %v1734, 4
        %v1740 = vshrl.u32 %v1667, 16
        %v1742 = vrot.slane %v1740, 7
        %v1743 = vshll.u32 %v1667, 16
        %v1745 = vor.u32 %v1742, %v1743
        %v1746 = vsel %vm1696, %v1738, %v1745
        %v1747 = vrot.slane %v1742, 4
        %v1749 = vshrl.u32 %v1668, 16
        %v1751 = vrot.slane %v1749, 7
        %v1752 = vshll.u32 %v1668, 16
        %v1754 = vor.u32 %v1751, %v1752
        %v1755 = vrot.slane %v1751, 4
        %v1757 = vshrl.u32 %v1669, 16
        %v1759 = vrot.slane %v1757, 7
        %v1760 = vshll.u32 %v1669, 16
        %v1762 = vor.u32 %v1759, %v1760
        %v1763 = vsel %vm1696, %v1755, %v1762
        %v1764 = vrot.slane %v1759, 4
        %v1766 = vshrl.u32 %v1670, 16
        %v1768 = vrot.slane %v1766, 7
        %v1769 = vshll.u32 %v1670, 16
        %v1771 = vor.u32 %v1768, %v1769
        %v1772 = vrot.slane %v1768, 4
        %v1774 = vshrl.u32 %v1671, 16
        %v1776 = vrot.slane %v1774, 7
        %v1777 = vshll.u32 %v1671, 16
        %v1779 = vor.u32 %v1776, %v1777
        %v1780 = vsel %vm1696, %v1772, %v1779
        %v1781 = vrot.slane %v1776, 4
        %v1783 = vshrl.u32 %v1672, 16
        %v1785 = vrot.slane %v1783, 7
        %v1786 = vshll.u32 %v1672, 16
        %v1788 = vor.u32 %v1785, %v1786
        %v1789 = vrot.slane %v1785, 4
        %v1791 = vshrl.u32 %v1673, 16
        %v1793 = vrot.slane %v1791, 7
        %v1794 = vshll.u32 %v1673, 16
        %v1796 = vor.u32 %v1793, %v1794
        %v1797 = vsel %vm1696, %v1789, %v1796
        %v1798 = vrot.slane %v1793, 4
        %v1800 = vshrl.u32 %v1674, 16
        %v1802 = vrot.slane %v1800, 7
        %v1803 = vshll.u32 %v1674, 16
        %v1805 = vor.u32 %v1802, %v1803
        %v1806 = vrot.slane %v1802, 4
        %v1808 = vshrl.u32 %v1675, 16
        %v1810 = vrot.slane %v1808, 7
        %v1811 = vshll.u32 %v1675, 16
        %v1813 = vor.u32 %v1810, %v1811
        %v1814 = vsel %vm1696, %v1806, %v1813
        %v1815 = vrot.slane %v1810, 4
        %v1817 = vshrl.u32 %v1676, 16
        %v1819 = vrot.slane %v1817, 7
        %v1820 = vshll.u32 %v1676, 16
        %v1822 = vor.u32 %v1819, %v1820
        %v1823 = vrot.slane %v1819, 4
        %v1825 = vshrl.u32 %v1677, 16
        %v1827 = vrot.slane %v1825, 7
        %v1828 = vshll.u32 %v1677, 16
        %v1830 = vor.u32 %v1827, %v1828
        %v1831 = vsel %vm1696, %v1823, %v1830
        %v1832 = vrot.slane %v1827, 4
        %v1834 = vshrl.u32 %v1678, 16
        %v1836 = vrot.slane %v1834, 7
        %v1837 = vshll.u32 %v1678, 16
        %v1839 = vor.u32 %v1836, %v1837
        %v1840 = vrot.slane %v1836, 4
        %v1842 = vshrl.u32 %v1679, 16
        %v1844 = vrot.slane %v1842, 7
        %v1845 = vshll.u32 %v1679, 16
        %v1847 = vor.u32 %v1844, %v1845
        %v1848 = vsel %vm1696, %v1840, %v1847
        %v1849 = vrot.slane %v1844, 4
        %v1851 = vshrl.u32 %v1680, 16
        %v1853 = vrot.slane %v1851, 7
        %v1854 = vshll.u32 %v1680, 16
        %v1856 = vor.u32 %v1853, %v1854
        %v1857 = vrot.slane %v1853, 4
        %v1859 = vshrl.u32 %v1681, 16
        %v1861 = vrot.slane %v1859, 7
        %v1862 = vshll.u32 %v1681, 16
        %v1864 = vor.u32 %v1861, %v1862
        %v1865 = vsel %vm1696, %v1857, %v1864
        %v1866 = vrot.slane %v1861, 4
        %v1868 = vshrl.u32 %v1682, 16
        %v1870 = vrot.slane %v1868, 7
        %v1871 = vshll.u32 %v1682, 16
        %v1873 = vor.u32 %v1870, %v1871
        %v1874 = vrot.slane %v1870, 4
        %v1876 = vshrl.u32 %v1683, 16
        %v1878 = vrot.slane %v1876, 7
        %v1879 = vshll.u32 %v1683, 16
        %v1881 = vor.u32 %v1878, %v1879
        %v1882 = vsel %vm1696, %v1874, %v1881
        %v1883 = vrot.slane %v1878, 4
        %v1885 = vshrl.u32 %v1684, 16
        %v1887 = vrot.slane %v1885, 7
        %v1888 = vshll.u32 %v1684, 16
        %v1890 = vor.u32 %v1887, %v1888
        %v1891 = vrot.slane %v1887, 4
        %v1893 = vshrl.u32 %v1685, 16
        %v1895 = vrot.slane %v1893, 7
        %v1896 = vshll.u32 %v1685, 16
        %v1898 = vor.u32 %v1895, %v1896
        %v1899 = vsel %vm1696, %v1891, %v1898
        %v1900 = vrot.slane %v1895, 4
        %v1902 = vshrl.u32 %v1686, 16
        %v1904 = vrot.slane %v1902, 7
        %v1905 = vshll.u32 %v1686, 16
        %v1907 = vor.u32 %v1904, %v1905
        %v1908 = vrot.slane %v1904, 4
        %v1910 = vshrl.u32 %v1687, 16
        %v1912 = vrot.slane %v1910, 7
        %v1913 = vshll.u32 %v1687, 16
        %v1915 = vor.u32 %v1912, %v1913
        %v1916 = vsel %vm1696, %v1908, %v1915
        %v1917 = vrot.slane %v1912, 4
        %v1919 = vshrl.u32 %v1688, 16
        %v1921 = vrot.slane %v1919, 7
        %v1922 = vshll.u32 %v1688, 16
        %v1924 = vor.u32 %v1921, %v1922
        %v1925 = vrot.slane %v1921, 4
        %v1927 = vshrl.u32 %v1689, 16
        %v1929 = vrot.slane %v1927, 7
        %v1930 = vshll.u32 %v1689, 16
        %v1932 = vor.u32 %v1929, %v1930
        %v1933 = vsel %vm1696, %v1925, %v1932
        %v1934 = vrot.slane %v1929, 4
        %v1936 = vshrl.u32 %v1690, 16
        %v1938 = vrot.slane %v1936, 7
        %v1939 = vshll.u32 %v1690, 16
        %v1941 = vor.u32 %v1938, %v1939
        %v1942 = vrot.slane %v1938, 4
        %v1944 = vshrl.u32 %v1691, 16
        %v1946 = vrot.slane %v1944, 7
        %v1947 = vshll.u32 %v1691, 16
        %v1949 = vor.u32 %v1946, %v1947
        %v1950 = vsel %vm1696, %v1942, %v1949
        %v1951 = vrot.slane %v1946, 4
        %v1953 = vshrl.u32 %v1692, 16
        %v1955 = vrot.slane %v1953, 7
        %v1956 = vshll.u32 %v1692, 16
        %v1958 = vor.u32 %v1955, %v1956
        %v1959 = vrot.slane %v1955, 4
        %v1961 = vshrl.u32 %v1693, 16
        %v1963 = vrot.slane %v1961, 7
        %v1964 = vshll.u32 %v1693, 16
        %v1966 = vor.u32 %v1963, %v1964
        %v1967 = vsel %vm1696, %v1959, %v1966
        %v1968 = vrot.slane %v1963, 4
        %s2017 = scalar_lea.vmem [#allocation2], 12
        %vm2018 = vcmask 1043456
        %vm2019 = vsmask.f32 7938
        %vm2020 = vmand %vm2018, %vm2019
        %v2021 = vld [vmem:[%s2017] sm:$0xf]
        %v2022 = vsel %vm2020, %v1703, %v2021
        %2023 = vst [vmem:[%s2017] sm:$0xf] %v2022
        %2024 = vst [vmem:[%s2017 + $0x4] sm:$0xf] %v1712
        %vm2025 = vcmask 1040384
        %vm2026 = vmand %vm2025, %vm1694
        %v2027 = vld [vmem:[%s2017 + $0x8] sm:$0x1]
        %v2028 = vsel %vm2026, %v1713, %v2027
        %2029 = vst [vmem:[%s2017 + $0x8] sm:$0x1] %v2028
        %v2030 = vld [vmem:[%s2017 + $0xc] sm:$0xf]
        %v2031 = vsel %vm2020, %v1720, %v2030
        %2032 = vst [vmem:[%s2017 + $0xc] sm:$0xf] %v2031
        %2033 = vst [vmem:[%s2017 + $0x10] sm:$0xf] %v1729
        %v2034 = vld [vmem:[%s2017 + $0x14] sm:$0x1]
        %v2035 = vsel %vm2026, %v1730, %v2034
        %2036 = vst [vmem:[%s2017 + $0x14] sm:$0x1] %v2035
        %v2037 = vld [vmem:[%s2017 + $0x18] sm:$0xf]
        %v2038 = vsel %vm2020, %v1737, %v2037
        %2039 = vst [vmem:[%s2017 + $0x18] sm:$0xf] %v2038
        %2040 = vst [vmem:[%s2017 + $0x1c] sm:$0xf] %v1746
        %v2041 = vld [vmem:[%s2017 + $0x20] sm:$0x1]
        %v2042 = vsel %vm2026, %v1747, %v2041
        %2043 = vst [vmem:[%s2017 + $0x20] sm:$0x1] %v2042
        %v2044 = vld [vmem:[%s2017 + $0x24] sm:$0xf]
        %v2045 = vsel %vm2020, %v1754, %v2044
        %2046 = vst [vmem:[%s2017 + $0x24] sm:$0xf] %v2045
        %2047 = vst [vmem:[%s2017 + $0x28] sm:$0xf] %v1763
        %v2048 = vld [vmem:[%s2017 + $0x2c] sm:$0x1]
        %v2049 = vsel %vm2026, %v1764, %v2048
        %2050 = vst [vmem:[%s2017 + $0x2c] sm:$0x1] %v2049
        %v2051 = vld [vmem:[%s2017 + $0x30] sm:$0xf]
        %v2052 = vsel %vm2020, %v1771, %v2051
        %2053 = vst [vmem:[%s2017 + $0x30] sm:$0xf] %v2052
        %2054 = vst [vmem:[%s2017 + $0x34] sm:$0xf] %v1780
        %v2055 = vld [vmem:[%s2017 + $0x38] sm:$0x1]
        %v2056 = vsel %vm2026, %v1781, %v2055
        %2057 = vst [vmem:[%s2017 + $0x38] sm:$0x1] %v2056
        %v2058 = vld [vmem:[%s2017 + $0x3c] sm:$0xf]
        %v2059 = vsel %vm2020, %v1788, %v2058
        %2060 = vst [vmem:[%s2017 + $0x3c] sm:$0xf] %v2059
        %2061 = vst [vmem:[%s2017 + $0x40] sm:$0xf] %v1797
        %v2062 = vld [vmem:[%s2017 + $0x44] sm:$0x1]
        %v2063 = vsel %vm2026, %v1798, %v2062
        %2064 = vst [vmem:[%s2017 + $0x44] sm:$0x1] %v2063
        %v2065 = vld [vmem:[%s2017 + $0x48] sm:$0xf]
        %v2066 = vsel %vm2020, %v1805, %v2065
        %2067 = vst [vmem:[%s2017 + $0x48] sm:$0xf] %v2066
        %2068 = vst [vmem:[%s2017 + $0x4c] sm:$0xf] %v1814
        %v2069 = vld [vmem:[%s2017 + $0x50] sm:$0x1]
        %v2070 = vsel %vm2026, %v1815, %v2069
        %2071 = vst [vmem:[%s2017 + $0x50] sm:$0x1] %v2070
        %v2072 = vld [vmem:[%s2017 + $0x54] sm:$0xf]
        %v2073 = vsel %vm2020, %v1822, %v2072
        %2074 = vst [vmem:[%s2017 + $0x54] sm:$0xf] %v2073
        %2075 = vst [vmem:[%s2017 + $0x58] sm:$0xf] %v1831
        %v2076 = vld [vmem:[%s2017 + $0x5c] sm:$0x1]
        %v2077 = vsel %vm2026, %v1832, %v2076
        %2078 = vst [vmem:[%s2017 + $0x5c] sm:$0x1] %v2077
        %v2079 = vld [vmem:[%s2017 + $0x60] sm:$0xf]
        %v2080 = vsel %vm2020, %v1839, %v2079
        %2081 = vst [vmem:[%s2017 + $0x60] sm:$0xf] %v2080
        %2082 = vst [vmem:[%s2017 + $0x64] sm:$0xf] %v1848
        %v2083 = vld [vmem:[%s2017 + $0x68] sm:$0x1]
        %v2084 = vsel %vm2026, %v1849, %v2083
        %2085 = vst [vmem:[%s2017 + $0x68] sm:$0x1] %v2084
        %v2086 = vld [vmem:[%s2017 + $0x6c] sm:$0xf]
        %v2087 = vsel %vm2020, %v1856, %v2086
        %2088 = vst [vmem:[%s2017 + $0x6c] sm:$0xf] %v2087
        %2089 = vst [vmem:[%s2017 + $0x70] sm:$0xf] %v1865
        %v2090 = vld [vmem:[%s2017 + $0x74] sm:$0x1]
        %v2091 = vsel %vm2026, %v1866, %v2090
        %2092 = vst [vmem:[%s2017 + $0x74] sm:$0x1] %v2091
        %v2093 = vld [vmem:[%s2017 + $0x78] sm:$0xf]
        %v2094 = vsel %vm2020, %v1873, %v2093
        %2095 = vst [vmem:[%s2017 + $0x78] sm:$0xf] %v2094
        %2096 = vst [vmem:[%s2017 + $0x7c] sm:$0xf] %v1882
        %v2097 = vld [vmem:[%s2017 + $0x80] sm:$0x1]
        %v2098 = vsel %vm2026, %v1883, %v2097
        %2099 = vst [vmem:[%s2017 + $0x80] sm:$0x1] %v2098
        %v2100 = vld [vmem:[%s2017 + $0x84] sm:$0xf]
        %v2101 = vsel %vm2020, %v1890, %v2100
        %2102 = vst [vmem:[%s2017 + $0x84] sm:$0xf] %v2101
        %2103 = vst [vmem:[%s2017 + $0x88] sm:$0xf] %v1899
        %v2104 = vld [vmem:[%s2017 + $0x8c] sm:$0x1]
        %v2105 = vsel %vm2026, %v1900, %v2104
        %2106 = vst [vmem:[%s2017 + $0x8c] sm:$0x1] %v2105
        %v2107 = vld [vmem:[%s2017 + $0x90] sm:$0xf]
        %v2108 = vsel %vm2020, %v1907, %v2107
        %2109 = vst [vmem:[%s2017 + $0x90] sm:$0xf] %v2108
        %2110 = vst [vmem:[%s2017 + $0x94] sm:$0xf] %v1916
        %v2111 = vld [vmem:[%s2017 + $0x98] sm:$0x1]
        %v2112 = vsel %vm2026, %v1917, %v2111
        %2113 = vst [vmem:[%s2017 + $0x98] sm:$0x1] %v2112
        %v2114 = vld [vmem:[%s2017 + $0x9c] sm:$0xf]
        %v2115 = vsel %vm2020, %v1924, %v2114
        %2116 = vst [vmem:[%s2017 + $0x9c] sm:$0xf] %v2115
        %2117 = vst [vmem:[%s2017 + $0xa0] sm:$0xf] %v1933
        %v2118 = vld [vmem:[%s2017 + $0xa4] sm:$0x1]
        %v2119 = vsel %vm2026, %v1934, %v2118
        %2120 = vst [vmem:[%s2017 + $0xa4] sm:$0x1] %v2119
        %v2121 = vld [vmem:[%s2017 + $0xa8] sm:$0xf]
        %v2122 = vsel %vm2020, %v1941, %v2121
        %2123 = vst [vmem:[%s2017 + $0xa8] sm:$0xf] %v2122
        %2124 = vst [vmem:[%s2017 + $0xac] sm:$0xf] %v1950
        %v2125 = vld [vmem:[%s2017 + $0xb0] sm:$0x1]
        %v2126 = vsel %vm2026, %v1951, %v2125
        %2127 = vst [vmem:[%s2017 + $0xb0] sm:$0x1] %v2126
        %v2128 = vld [vmem:[%s2017 + $0xb4] sm:$0xf]
        %v2129 = vsel %vm2020, %v1958, %v2128
        %2130 = vst [vmem:[%s2017 + $0xb4] sm:$0xf] %v2129
        %2131 = vst [vmem:[%s2017 + $0xb8] sm:$0xf] %v1967
        %v2132 = vld [vmem:[%s2017 + $0xbc] sm:$0x1]
        %v2133 = vsel %vm2026, %v1968, %v2132
        %2134 = vst [vmem:[%s2017 + $0xbc] sm:$0x1] %v2133
        %v2135 = vstv %s1594
        %v2136 = vmul.f32 %v1476, %v2135
        %v2137 = vmul.f32 %v1477, %v2135
        %v2138 = vpack.c.bf16 %v2137, %v2136
        %v2140 = vunpack.c.l.b16 %v2138
        %v2141 = vunpack.c.h.b16 %v2138
        %v2142 = vpack.c.b16 %v2140, %v2140
        %v2143 = vpack.c.b16 %v2141, %v2141
        %v2145 = vshrl.u32 %v2142, 16
        %v2147 = vrot.slane %v2145, 7
        %v2148 = vshll.u32 %v2142, 16
        %v2150 = vor.u32 %v2147, %v2148
        %v2151 = vrot.slane %v2147, 4
        %v2153 = vshrl.u32 %v2143, 16
        %v2155 = vrot.slane %v2153, 7
        %v2156 = vshll.u32 %v2143, 16
        %v2158 = vor.u32 %v2155, %v2156
        %v2159 = vsel %vm1696, %v2151, %v2158
        %v2160 = vrot.slane %v2155, 4
        %v2164 = vld [vmem:[#allocation2] sm:$0xf]
        %v2165 = vsel %vm2020, %v2150, %v2164
        %2166 = vst [vmem:[#allocation2] sm:$0xf] %v2165
        %2167 = vst [vmem:[#allocation2 + $0x4] sm:$0xf] %v2159
        %v2168 = vld [vmem:[#allocation2 + $0x8] sm:$0x1]
        %v2169 = vsel %vm2026, %v2160, %v2168
        %2170 = vst [vmem:[#allocation2 + $0x8] sm:$0x1] %v2169
        %v2171 = vstv %s1597
        %v2172 = vmul.f32 %v1590, %v2171
        %v2173 = vmul.f32 %v1591, %v2171
        %v2174 = vpack.c.bf16 %v2173, %v2172
        %v2176 = vunpack.c.l.b16 %v2174
        %v2177 = vunpack.c.h.b16 %v2174
        %v2178 = vpack.c.b16 %v2176, %v2176
        %v2179 = vpack.c.b16 %v2177, %v2177
        %v2181 = vshrl.u32 %v2178, 16
        %v2183 = vrot.slane %v2181, 7
        %v2184 = vshll.u32 %v2178, 16
        %v2186 = vor.u32 %v2183, %v2184
        %v2187 = vrot.slane %v2183, 4
        %v2189 = vshrl.u32 %v2179, 16
        %v2191 = vrot.slane %v2189, 7
        %v2192 = vshll.u32 %v2179, 16
        %v2194 = vor.u32 %v2191, %v2192
        %v2195 = vsel %vm1696, %v2187, %v2194
        %v2196 = vrot.slane %v2191, 4
        %s2200 = scalar_lea.vmem [#allocation2], 204
        %v2201 = vld [vmem:[%s2200] sm:$0xf]
        %v2202 = vsel %vm2020, %v2186, %v2201
        %2203 = vst [vmem:[%s2200] sm:$0xf] %v2202
        %2204 = vst [vmem:[%s2200 + $0x4] sm:$0xf] %v2195
        %v2205 = vld [vmem:[%s2200 + $0x8] sm:$0x1]
        %v2206 = vsel %vm2026, %v2196, %v2205
        %2207 = vst [vmem:[%s2200 + $0x8] sm:$0x1] %v2206
        %v2208 = vld [vmem:[#allocation2] sm:$0x1]
        %v2209 = vsel %vm2026, 0, %v2208
        %2210 = vst [vmem:[#allocation2] sm:$0x1] %v2209
        %v2211 = vld [vmem:[#allocation2 + $0xc] sm:$0x1]
        %v2212 = vsel %vm2026, 0, %v2211
        %2213 = vst [vmem:[#allocation2 + $0xc] sm:$0x1] %v2212
        %v2214 = vld [vmem:[#allocation2 + $0x18] sm:$0x1]
        %v2215 = vsel %vm2026, 0, %v2214
        %2216 = vst [vmem:[#allocation2 + $0x18] sm:$0x1] %v2215
        %v2217 = vld [vmem:[#allocation2 + $0x24] sm:$0x1]
        %v2218 = vsel %vm2026, 0, %v2217
        %2219 = vst [vmem:[#allocation2 + $0x24] sm:$0x1] %v2218
        %v2220 = vld [vmem:[#allocation2 + $0x30] sm:$0x1]
        %v2221 = vsel %vm2026, 0, %v2220
        %2222 = vst [vmem:[#allocation2 + $0x30] sm:$0x1] %v2221
        %v2223 = vld [vmem:[#allocation2 + $0x3c] sm:$0x1]
        %v2224 = vsel %vm2026, 0, %v2223
        %2225 = vst [vmem:[#allocation2 + $0x3c] sm:$0x1] %v2224
        %v2226 = vld [vmem:[#allocation2 + $0x48] sm:$0x1]
        %v2227 = vsel %vm2026, 0, %v2226
        %2228 = vst [vmem:[#allocation2 + $0x48] sm:$0x1] %v2227
        %v2229 = vld [vmem:[#allocation2 + $0x54] sm:$0x1]
        %v2230 = vsel %vm2026, 0, %v2229
        %2231 = vst [vmem:[#allocation2 + $0x54] sm:$0x1] %v2230
        %v2232 = vld [vmem:[#allocation2 + $0x60] sm:$0x1]
        %v2233 = vsel %vm2026, 0, %v2232
        %2234 = vst [vmem:[#allocation2 + $0x60] sm:$0x1] %v2233
        %v2235 = vld [vmem:[#allocation2 + $0x6c] sm:$0x1]
        %v2236 = vsel %vm2026, 0, %v2235
        %2237 = vst [vmem:[#allocation2 + $0x6c] sm:$0x1] %v2236
        %v2238 = vld [vmem:[#allocation2 + $0x78] sm:$0x1]
        %v2239 = vsel %vm2026, 0, %v2238
        %2240 = vst [vmem:[#allocation2 + $0x78] sm:$0x1] %v2239
        %v2241 = vld [vmem:[#allocation2 + $0x84] sm:$0x1]
        %v2242 = vsel %vm2026, 0, %v2241
        %2243 = vst [vmem:[#allocation2 + $0x84] sm:$0x1] %v2242
        %v2244 = vld [vmem:[#allocation2 + $0x90] sm:$0x1]
        %v2245 = vsel %vm2026, 0, %v2244
        %2246 = vst [vmem:[#allocation2 + $0x90] sm:$0x1] %v2245
        %v2247 = vld [vmem:[#allocation2 + $0x9c] sm:$0x1]
        %v2248 = vsel %vm2026, 0, %v2247
        %2249 = vst [vmem:[#allocation2 + $0x9c] sm:$0x1] %v2248
        %v2250 = vld [vmem:[#allocation2 + $0xa8] sm:$0x1]
        %v2251 = vsel %vm2026, 0, %v2250
        %2252 = vst [vmem:[#allocation2 + $0xa8] sm:$0x1] %v2251
        %v2253 = vld [vmem:[#allocation2 + $0xb4] sm:$0x1]
        %v2254 = vsel %vm2026, 0, %v2253
        %2255 = vst [vmem:[#allocation2 + $0xb4] sm:$0x1] %v2254
        %v2256 = vld [vmem:[#allocation2 + $0xc0] sm:$0x1]
        %v2257 = vsel %vm2026, 0, %v2256
        %2258 = vst [vmem:[#allocation2 + $0xc0] sm:$0x1] %v2257
        %v2259 = vld [vmem:[#allocation2 + $0xcc] sm:$0x1]
        %v2260 = vsel %vm2026, 0, %v2259
        %2261 = vst [vmem:[#allocation2 + $0xcc] sm:$0x1] %v2260
        %vm2262 = vmand %vm2025, %vm2019
        %v2263 = vld [vmem:[#allocation2 + $0x8] sm:$0x1]
        %v2264 = vsel %vm2262, 0, %v2263
        %2265 = vst [vmem:[#allocation2 + $0x8] sm:$0x1] %v2264
        %v2266 = vld [vmem:[#allocation2 + $0x14] sm:$0x1]
        %v2267 = vsel %vm2262, 0, %v2266
        %2268 = vst [vmem:[#allocation2 + $0x14] sm:$0x1] %v2267
        %v2269 = vld [vmem:[#allocation2 + $0x20] sm:$0x1]
        %v2270 = vsel %vm2262, 0, %v2269
        %2271 = vst [vmem:[#allocation2 + $0x20] sm:$0x1] %v2270
        %v2272 = vld [vmem:[#allocation2 + $0x2c] sm:$0x1]
        %v2273 = vsel %vm2262, 0, %v2272
        %2274 = vst [vmem:[#allocation2 + $0x2c] sm:$0x1] %v2273
        %v2275 = vld [vmem:[#allocation2 + $0x38] sm:$0x1]
        %v2276 = vsel %vm2262, 0, %v2275
        %2277 = vst [vmem:[#allocation2 + $0x38] sm:$0x1] %v2276
        %v2278 = vld [vmem:[#allocation2 + $0x44] sm:$0x1]
        %v2279 = vsel %vm2262, 0, %v2278
        %2280 = vst [vmem:[#allocation2 + $0x44] sm:$0x1] %v2279
        %v2281 = vld [vmem:[#allocation2 + $0x50] sm:$0x1]
        %v2282 = vsel %vm2262, 0, %v2281
        %2283 = vst [vmem:[#allocation2 + $0x50] sm:$0x1] %v2282
        %v2284 = vld [vmem:[#allocation2 + $0x5c] sm:$0x1]
        %v2285 = vsel %vm2262, 0, %v2284
        %2286 = vst [vmem:[#allocation2 + $0x5c] sm:$0x1] %v2285
        %v2287 = vld [vmem:[#allocation2 + $0x68] sm:$0x1]
        %v2288 = vsel %vm2262, 0, %v2287
        %2289 = vst [vmem:[#allocation2 + $0x68] sm:$0x1] %v2288
        %v2290 = vld [vmem:[#allocation2 + $0x74] sm:$0x1]
        %v2291 = vsel %vm2262, 0, %v2290
        %2292 = vst [vmem:[#allocation2 + $0x74] sm:$0x1] %v2291
        %v2293 = vld [vmem:[#allocation2 + $0x80] sm:$0x1]
        %v2294 = vsel %vm2262, 0, %v2293
        %2295 = vst [vmem:[#allocation2 + $0x80] sm:$0x1] %v2294
        %v2296 = vld [vmem:[#allocation2 + $0x8c] sm:$0x1]
        %v2297 = vsel %vm2262, 0, %v2296
        %2298 = vst [vmem:[#allocation2 + $0x8c] sm:$0x1] %v2297
        %v2299 = vld [vmem:[#allocation2 + $0x98] sm:$0x1]
        %v2300 = vsel %vm2262, 0, %v2299
        %2301 = vst [vmem:[#allocation2 + $0x98] sm:$0x1] %v2300
        %v2302 = vld [vmem:[#allocation2 + $0xa4] sm:$0x1]
        %v2303 = vsel %vm2262, 0, %v2302
        %2304 = vst [vmem:[#allocation2 + $0xa4] sm:$0x1] %v2303
        %v2305 = vld [vmem:[#allocation2 + $0xb0] sm:$0x1]
        %v2306 = vsel %vm2262, 0, %v2305
        %2307 = vst [vmem:[#allocation2 + $0xb0] sm:$0x1] %v2306
        %v2308 = vld [vmem:[#allocation2 + $0xbc] sm:$0x1]
        %v2309 = vsel %vm2262, 0, %v2308
        %2310 = vst [vmem:[#allocation2 + $0xbc] sm:$0x1] %v2309
        %v2311 = vld [vmem:[#allocation2 + $0xc8] sm:$0x1]
        %v2312 = vsel %vm2262, 0, %v2311
        %2313 = vst [vmem:[#allocation2 + $0xc8] sm:$0x1] %v2312
        %v2314 = vld [vmem:[#allocation2 + $0xd4] sm:$0x1]
        %v2315 = vsel %vm2262, 0, %v2314
        %2316 = vst [vmem:[#allocation2 + $0xd4] sm:$0x1] %v2315
        %v2317 = vld [vmem:[#allocation2] sm:$0xf]
        %v2318 = vld [vmem:[#allocation2 + $0x4] sm:$0xf]
        %v2319 = vld [vmem:[#allocation2 + $0x8] sm:$0x1]
        %v2320 = vld [vmem:[#allocation2 + $0xc] sm:$0xf]
        %v2321 = vld [vmem:[#allocation2 + $0x10] sm:$0xf]
        %v2322 = vld [vmem:[#allocation2 + $0x14] sm:$0x1]
        %v2323 = vld [vmem:[#allocation2 + $0x18] sm:$0xf]
        %v2324 = vld [vmem:[#allocation2 + $0x1c] sm:$0xf]
        %v2325 = vld [vmem:[#allocation2 + $0x20] sm:$0x1]
        %v2326 = vld [vmem:[#allocation2 + $0x24] sm:$0xf]
        %v2327 = vld [vmem:[#allocation2 + $0x28] sm:$0xf]
        %v2328 = vld [vmem:[#allocation2 + $0x2c] sm:$0x1]
        %v2329 = vld [vmem:[#allocation2 + $0x30] sm:$0xf]
        %v2330 = vld [vmem:[#allocation2 + $0x34] sm:$0xf]
        %v2331 = vld [vmem:[#allocation2 + $0x38] sm:$0x1]
        %v2332 = vld [vmem:[#allocation2 + $0x3c] sm:$0xf]
        %v2333 = vld [vmem:[#allocation2 + $0x40] sm:$0xf]
        %v2334 = vld [vmem:[#allocation2 + $0x44] sm:$0x1]
        %v2335 = vld [vmem:[#allocation2 + $0x48] sm:$0xf]
        %v2336 = vld [vmem:[#allocation2 + $0x4c] sm:$0xf]
        %v2337 = vld [vmem:[#allocation2 + $0x50] sm:$0x1]
        %v2338 = vld [vmem:[#allocation2 + $0x54] sm:$0xf]
        %v2339 = vld [vmem:[#allocation2 + $0x58] sm:$0xf]
        %v2340 = vld [vmem:[#allocation2 + $0x5c] sm:$0x1]
        %v2341 = vld [vmem:[#allocation2 + $0x60] sm:$0xf]
        %v2342 = vld [vmem:[#allocation2 + $0x64] sm:$0xf]
        %v2343 = vld [vmem:[#allocation2 + $0x68] sm:$0x1]
        %v2344 = vld [vmem:[#allocation2 + $0x6c] sm:$0xf]
        %v2345 = vld [vmem:[#allocation2 + $0x70] sm:$0xf]
        %v2346 = vld [vmem:[#allocation2 + $0x74] sm:$0x1]
        %v2347 = vld [vmem:[#allocation2 + $0x78] sm:$0xf]
        %v2348 = vld [vmem:[#allocation2 + $0x7c] sm:$0xf]
        %v2349 = vld [vmem:[#allocation2 + $0x80] sm:$0x1]
        %v2350 = vld [vmem:[#allocation2 + $0x84] sm:$0xf]
        %v2351 = vld [vmem:[#allocation2 + $0x88] sm:$0xf]
        %v2352 = vld [vmem:[#allocation2 + $0x8c] sm:$0x1]
        %v2353 = vld [vmem:[#allocation2 + $0x90] sm:$0xf]
        %v2354 = vld [vmem:[#allocation2 + $0x94] sm:$0xf]
        %v2355 = vld [vmem:[#allocation2 + $0x98] sm:$0x1]
        %v2356 = vld [vmem:[#allocation2 + $0x9c] sm:$0xf]
        %v2357 = vld [vmem:[#allocation2 + $0xa0] sm:$0xf]
        %v2358 = vld [vmem:[#allocation2 + $0xa4] sm:$0x1]
        %v2359 = vld [vmem:[#allocation2 + $0xa8] sm:$0xf]
        %v2360 = vld [vmem:[#allocation2 + $0xac] sm:$0xf]
        %v2361 = vld [vmem:[#allocation2 + $0xb0] sm:$0x1]
        %v2362 = vld [vmem:[#allocation2 + $0xb4] sm:$0xf]
        %v2363 = vld [vmem:[#allocation2 + $0xb8] sm:$0xf]
        %v2364 = vld [vmem:[#allocation2 + $0xbc] sm:$0x1]
        %v2365 = vld [vmem:[#allocation2 + $0xc0] sm:$0xf]
        %v2366 = vld [vmem:[#allocation2 + $0xc4] sm:$0xf]
        %v2367 = vld [vmem:[#allocation2 + $0xc8] sm:$0x1]
        %v2368 = vld [vmem:[#allocation2 + $0xcc] sm:$0xf]
        %v2369 = vld [vmem:[#allocation2 + $0xd0] sm:$0xf]
        %v2370 = vld [vmem:[#allocation2 + $0xd4] sm:$0x1]
        %v2403 = vunpack.c.l.b16 %v2317
        %v2404 = vunpack.c.l.b16 %v2318
        %v2405 = vunpack.c.l.b16 %v2320
        %v2406 = vunpack.c.l.b16 %v2321
        %v2407 = vunpack.c.l.b16 %v2323
        %v2408 = vunpack.c.l.b16 %v2324
        %v2409 = vunpack.c.l.b16 %v2326
        %v2410 = vunpack.c.l.b16 %v2327
        %v2411 = vunpack.c.l.b16 %v2329
        %v2412 = vunpack.c.l.b16 %v2330
        %v2413 = vunpack.c.l.b16 %v2332
        %v2414 = vunpack.c.l.b16 %v2333
        %v2415 = vunpack.c.l.b16 %v2335
        %v2416 = vunpack.c.l.b16 %v2336
        %v2417 = vunpack.c.l.b16 %v2338
        %v2418 = vunpack.c.l.b16 %v2339
        %v2419 = vunpack.c.l.b16 %v2341
        %v2420 = vunpack.c.l.b16 %v2342
        %v2421 = vunpack.c.l.b16 %v2344
        %v2422 = vunpack.c.l.b16 %v2345
        %v2423 = vunpack.c.l.b16 %v2347
        %v2424 = vunpack.c.l.b16 %v2348
        %v2425 = vunpack.c.l.b16 %v2350
        %v2426 = vunpack.c.l.b16 %v2351
        %v2427 = vunpack.c.l.b16 %v2353
        %v2428 = vunpack.c.l.b16 %v2354
        %v2429 = vunpack.c.l.b16 %v2356
        %v2430 = vunpack.c.l.b16 %v2357
        %v2431 = vunpack.c.l.b16 %v2359
        %v2432 = vunpack.c.l.b16 %v2360
        %v2433 = vunpack.c.l.b16 %v2362
        %v2434 = vunpack.c.l.b16 %v2363
        %v2435 = vpack.c.b16 %v2404, %v2403
        %v2436 = vpack.c.b16 %v2406, %v2405
        %v2437 = vpack.c.b16 %v2408, %v2407
        %v2438 = vpack.c.b16 %v2410, %v2409
        %v2439 = vpack.c.b16 %v2412, %v2411
        %v2440 = vpack.c.b16 %v2414, %v2413
        %v2441 = vpack.c.b16 %v2416, %v2415
        %v2442 = vpack.c.b16 %v2418, %v2417
        %v2443 = vpack.c.b16 %v2420, %v2419
        %v2444 = vpack.c.b16 %v2422, %v2421
        %v2445 = vpack.c.b16 %v2424, %v2423
        %v2446 = vpack.c.b16 %v2426, %v2425
        %v2447 = vpack.c.b16 %v2428, %v2427
        %v2448 = vpack.c.b16 %v2430, %v2429
        %v2449 = vpack.c.b16 %v2432, %v2431
        %v2450 = vpack.c.b16 %v2434, %v2433
        %v2483 = vunpack.c.l.b16 %v2319
        %v2484 = vunpack.c.l.b16 %v2322
        %v2485 = vunpack.c.l.b16 %v2325
        %v2486 = vunpack.c.l.b16 %v2328
        %v2487 = vunpack.c.l.b16 %v2331
        %v2488 = vunpack.c.l.b16 %v2334
        %v2489 = vunpack.c.l.b16 %v2337
        %v2490 = vunpack.c.l.b16 %v2340
        %v2491 = vunpack.c.l.b16 %v2343
        %v2492 = vunpack.c.l.b16 %v2346
        %v2493 = vunpack.c.l.b16 %v2349
        %v2494 = vunpack.c.l.b16 %v2352
        %v2495 = vunpack.c.l.b16 %v2355
        %v2496 = vunpack.c.l.b16 %v2358
        %v2497 = vunpack.c.l.b16 %v2361
        %v2498 = vunpack.c.l.b16 %v2364
        %v2499 = vpack.c.b16 %v2483, %v2483
        %v2500 = vpack.c.b16 %v2484, %v2484
        %v2501 = vpack.c.b16 %v2485, %v2485
        %v2502 = vpack.c.b16 %v2486, %v2486
        %v2503 = vpack.c.b16 %v2487, %v2487
        %v2504 = vpack.c.b16 %v2488, %v2488
        %v2505 = vpack.c.b16 %v2489, %v2489
        %v2506 = vpack.c.b16 %v2490, %v2490
        %v2507 = vpack.c.b16 %v2491, %v2491
        %v2508 = vpack.c.b16 %v2492, %v2492
        %v2509 = vpack.c.b16 %v2493, %v2493
        %v2510 = vpack.c.b16 %v2494, %v2494
        %v2511 = vpack.c.b16 %v2495, %v2495
        %v2512 = vpack.c.b16 %v2496, %v2496
        %v2513 = vpack.c.b16 %v2497, %v2497
        %v2514 = vpack.c.b16 %v2498, %v2498
        %vm2515 = vsmask.f32 7424
        %v2517 = vshrl.u32 %v2435, 16
        %v2519 = vshll.u32 %v2435, 16
        %v2521 = vrot.slane %v2519, 1
        %v2522 = vor.u32 %v2517, %v2521
        %v2524 = vshll.u32 %v2499, 16
        %v2526 = vrot.slane %v2524, 1
        %v2527 = vsel %vm2515, %v2522, %v2526
        %v2529 = vshrl.u32 %v2436, 16
        %v2531 = vshll.u32 %v2436, 16
        %v2533 = vrot.slane %v2531, 1
        %v2534 = vor.u32 %v2529, %v2533
        %v2536 = vshll.u32 %v2500, 16
        %v2538 = vrot.slane %v2536, 1
        %v2539 = vsel %vm2515, %v2534, %v2538
        %v2541 = vshrl.u32 %v2437, 16
        %v2543 = vshll.u32 %v2437, 16
        %v2545 = vrot.slane %v2543, 1
        %v2546 = vor.u32 %v2541, %v2545
        %v2548 = vshll.u32 %v2501, 16
        %v2550 = vrot.slane %v2548, 1
        %v2551 = vsel %vm2515, %v2546, %v2550
        %v2553 = vshrl.u32 %v2438, 16
        %v2555 = vshll.u32 %v2438, 16
        %v2557 = vrot.slane %v2555, 1
        %v2558 = vor.u32 %v2553, %v2557
        %v2560 = vshll.u32 %v2502, 16
        %v2562 = vrot.slane %v2560, 1
        %v2563 = vsel %vm2515, %v2558, %v2562
        %v2565 = vshrl.u32 %v2439, 16
        %v2567 = vshll.u32 %v2439, 16
        %v2569 = vrot.slane %v2567, 1
        %v2570 = vor.u32 %v2565, %v2569
        %v2572 = vshll.u32 %v2503, 16
        %v2574 = vrot.slane %v2572, 1
        %v2575 = vsel %vm2515, %v2570, %v2574
        %v2577 = vshrl.u32 %v2440, 16
        %v2579 = vshll.u32 %v2440, 16
        %v2581 = vrot.slane %v2579, 1
        %v2582 = vor.u32 %v2577, %v2581
        %v2584 = vshll.u32 %v2504, 16
        %v2586 = vrot.slane %v2584, 1
        %v2587 = vsel %vm2515, %v2582, %v2586
        %v2589 = vshrl.u32 %v2441, 16
        %v2591 = vshll.u32 %v2441, 16
        %v2593 = vrot.slane %v2591, 1
        %v2594 = vor.u32 %v2589, %v2593
        %v2596 = vshll.u32 %v2505, 16
        %v2598 = vrot.slane %v2596, 1
        %v2599 = vsel %vm2515, %v2594, %v2598
        %v2601 = vshrl.u32 %v2442, 16
        %v2603 = vshll.u32 %v2442, 16
        %v2605 = vrot.slane %v2603, 1
        %v2606 = vor.u32 %v2601, %v2605
        %v2608 = vshll.u32 %v2506, 16
        %v2610 = vrot.slane %v2608, 1
        %v2611 = vsel %vm2515, %v2606, %v2610
        %v2613 = vshrl.u32 %v2443, 16
        %v2615 = vshll.u32 %v2443, 16
        %v2617 = vrot.slane %v2615, 1
        %v2618 = vor.u32 %v2613, %v2617
        %v2620 = vshll.u32 %v2507, 16
        %v2622 = vrot.slane %v2620, 1
        %v2623 = vsel %vm2515, %v2618, %v2622
        %v2625 = vshrl.u32 %v2444, 16
        %v2627 = vshll.u32 %v2444, 16
        %v2629 = vrot.slane %v2627, 1
        %v2630 = vor.u32 %v2625, %v2629
        %v2632 = vshll.u32 %v2508, 16
        %v2634 = vrot.slane %v2632, 1
        %v2635 = vsel %vm2515, %v2630, %v2634
        %v2637 = vshrl.u32 %v2445, 16
        %v2639 = vshll.u32 %v2445, 16
        %v2641 = vrot.slane %v2639, 1
        %v2642 = vor.u32 %v2637, %v2641
        %v2644 = vshll.u32 %v2509, 16
        %v2646 = vrot.slane %v2644, 1
        %v2647 = vsel %vm2515, %v2642, %v2646
        %v2649 = vshrl.u32 %v2446, 16
        %v2651 = vshll.u32 %v2446, 16
        %v2653 = vrot.slane %v2651, 1
        %v2654 = vor.u32 %v2649, %v2653
        %v2656 = vshll.u32 %v2510, 16
        %v2658 = vrot.slane %v2656, 1
        %v2659 = vsel %vm2515, %v2654, %v2658
        %v2661 = vshrl.u32 %v2447, 16
        %v2663 = vshll.u32 %v2447, 16
        %v2665 = vrot.slane %v2663, 1
        %v2666 = vor.u32 %v2661, %v2665
        %v2668 = vshll.u32 %v2511, 16
        %v2670 = vrot.slane %v2668, 1
        %v2671 = vsel %vm2515, %v2666, %v2670
        %v2673 = vshrl.u32 %v2448, 16
        %v2675 = vshll.u32 %v2448, 16
        %v2677 = vrot.slane %v2675, 1
        %v2678 = vor.u32 %v2673, %v2677
        %v2680 = vshll.u32 %v2512, 16
        %v2682 = vrot.slane %v2680, 1
        %v2683 = vsel %vm2515, %v2678, %v2682
        %v2685 = vshrl.u32 %v2449, 16
        %v2687 = vshll.u32 %v2449, 16
        %v2689 = vrot.slane %v2687, 1
        %v2690 = vor.u32 %v2685, %v2689
        %v2692 = vshll.u32 %v2513, 16
        %v2694 = vrot.slane %v2692, 1
        %v2695 = vsel %vm2515, %v2690, %v2694
        %v2697 = vshrl.u32 %v2450, 16
        %v2699 = vshll.u32 %v2450, 16
        %v2701 = vrot.slane %v2699, 1
        %v2702 = vor.u32 %v2697, %v2701
        %v2704 = vshll.u32 %v2514, 16
        %v2706 = vrot.slane %v2704, 1
        %v2707 = vsel %vm2515, %v2702, %v2706
        %vm2724 = vcmask 1046528
        %v2725 = vrot.slane %v2435, 1
        %v2726 = vrot.slane %v2499, 1
        %v2727 = vsel %vm2724, %v2725, %v2726
        %v2728 = vrot.slane %v2436, 1
        %v2729 = vrot.slane %v2500, 1
        %v2730 = vsel %vm2724, %v2728, %v2729
        %v2731 = vrot.slane %v2437, 1
        %v2732 = vrot.slane %v2501, 1
        %v2733 = vsel %vm2724, %v2731, %v2732
        %v2734 = vrot.slane %v2438, 1
        %v2735 = vrot.slane %v2502, 1
        %v2736 = vsel %vm2724, %v2734, %v2735
        %v2737 = vrot.slane %v2439, 1
        %v2738 = vrot.slane %v2503, 1
        %v2739 = vsel %vm2724, %v2737, %v2738
        %v2740 = vrot.slane %v2440, 1
        %v2741 = vrot.slane %v2504, 1
        %v2742 = vsel %vm2724, %v2740, %v2741
        %v2743 = vrot.slane %v2441, 1
        %v2744 = vrot.slane %v2505, 1
        %v2745 = vsel %vm2724, %v2743, %v2744
        %v2746 = vrot.slane %v2442, 1
        %v2747 = vrot.slane %v2506, 1
        %v2748 = vsel %vm2724, %v2746, %v2747
        %v2749 = vrot.slane %v2443, 1
        %v2750 = vrot.slane %v2507, 1
        %v2751 = vsel %vm2724, %v2749, %v2750
        %v2752 = vrot.slane %v2444, 1
        %v2753 = vrot.slane %v2508, 1
        %v2754 = vsel %vm2724, %v2752, %v2753
        %v2755 = vrot.slane %v2445, 1
        %v2756 = vrot.slane %v2509, 1
        %v2757 = vsel %vm2724, %v2755, %v2756
        %v2758 = vrot.slane %v2446, 1
        %v2759 = vrot.slane %v2510, 1
        %v2760 = vsel %vm2724, %v2758, %v2759
        %v2761 = vrot.slane %v2447, 1
        %v2762 = vrot.slane %v2511, 1
        %v2763 = vsel %vm2724, %v2761, %v2762
        %v2764 = vrot.slane %v2448, 1
        %v2765 = vrot.slane %v2512, 1
        %v2766 = vsel %vm2724, %v2764, %v2765
        %v2767 = vrot.slane %v2449, 1
        %v2768 = vrot.slane %v2513, 1
        %v2769 = vsel %vm2724, %v2767, %v2768
        %v2770 = vrot.slane %v2450, 1
        %v2771 = vrot.slane %v2514, 1
        %v2772 = vsel %vm2724, %v2770, %v2771
        %v2791 = vunpack.c.l.b16 %v2365
        %v2792 = vunpack.c.l.b16 %v2366
        %v2793 = vpack.c.b16 %v2792, %v2791
        %v2796 = vunpack.c.l.b16 %v2367
        %v2797 = vpack.c.b16 %v2796, %v2796
        %v2799 = vshrl.u32 %v2793, 16
        %v2801 = vshll.u32 %v2793, 16
        %v2803 = vrot.slane %v2801, 1
        %v2804 = vor.u32 %v2799, %v2803
        %v2806 = vshll.u32 %v2797, 16
        %v2808 = vrot.slane %v2806, 1
        %v2809 = vsel %vm2515, %v2804, %v2808
        %v2811 = vrot.slane %v2793, 1
        %v2812 = vrot.slane %v2797, 1
        %v2813 = vsel %vm2724, %v2811, %v2812
        %v2817 = vunpack.c.l.b16 %v2368
        %v2818 = vunpack.c.l.b16 %v2369
        %v2819 = vpack.c.b16 %v2818, %v2817
        %v2822 = vunpack.c.l.b16 %v2370
        %v2823 = vpack.c.b16 %v2822, %v2822
        %v2825 = vshrl.u32 %v2819, 16
        %v2827 = vshll.u32 %v2819, 16
        %v2829 = vrot.slane %v2827, 1
        %v2830 = vor.u32 %v2825, %v2829
        %v2832 = vshll.u32 %v2823, 16
        %v2834 = vrot.slane %v2832, 1
        %v2835 = vsel %vm2515, %v2830, %v2834
        %v2837 = vrot.slane %v2819, 1
        %v2838 = vrot.slane %v2823, 1
        %v2839 = vsel %vm2724, %v2837, %v2838
        %v2841 = vld [vmem:[%s4] sm:$0xf]
        %v2842 = vld [vmem:[%s4 + $0x4] sm:$0xf]
        %v2843 = vld [vmem:[%s4 + $0x8] sm:$0xf]
        %v2844 = vld [vmem:[%s4 + $0xc] sm:$0xf]
        %v2845 = vld [vmem:[%s4 + $0x10] sm:$0xf]
        %v2846 = vld [vmem:[%s4 + $0x14] sm:$0xf]
        %v2847 = vld [vmem:[%s4 + $0x18] sm:$0xf]
        %v2848 = vld [vmem:[%s4 + $0x1c] sm:$0xf]
        %v2849 = vld [vmem:[%s4 + $0x20] sm:$0xf]
        %v2850 = vld [vmem:[%s4 + $0x24] sm:$0xf]
        %v2851 = vld [vmem:[%s4 + $0x28] sm:$0xf]
        %v2852 = vld [vmem:[%s4 + $0x2c] sm:$0xf]
        %v2853 = vld [vmem:[%s4 + $0x30] sm:$0xf]
        %v2854 = vld [vmem:[%s4 + $0x34] sm:$0xf]
        %v2855 = vld [vmem:[%s4 + $0x38] sm:$0xf]
        %v2856 = vld [vmem:[%s4 + $0x3c] sm:$0xf]
        %v2857 = vld [vmem:[%s4 + $0x40] sm:$0xf]
        %v2858 = vld [vmem:[%s4 + $0x44] sm:$0xf]
        %v2859 = vld [vmem:[%s4 + $0x48] sm:$0xf]
        %v2860 = vld [vmem:[%s4 + $0x4c] sm:$0xf]
        %v2861 = vld [vmem:[%s4 + $0x50] sm:$0xf]
        %v2862 = vld [vmem:[%s4 + $0x54] sm:$0xf]
        %v2863 = vld [vmem:[%s4 + $0x58] sm:$0xf]
        %v2864 = vld [vmem:[%s4 + $0x5c] sm:$0xf]
        %v2865 = vld [vmem:[%s4 + $0x60] sm:$0xf]
        %v2866 = vld [vmem:[%s4 + $0x64] sm:$0xf]
        %v2867 = vld [vmem:[%s4 + $0x68] sm:$0xf]
        %v2868 = vld [vmem:[%s4 + $0x6c] sm:$0xf]
        %v2869 = vld [vmem:[%s4 + $0x70] sm:$0xf]
        %v2870 = vld [vmem:[%s4 + $0x74] sm:$0xf]
        %v2871 = vld [vmem:[%s4 + $0x78] sm:$0xf]
        %v2872 = vld [vmem:[%s4 + $0x7c] sm:$0xf]
        %v2873 = vld [vmem:[%s4 + $0x80] sm:$0xf]
        %v2874 = vld [vmem:[%s4 + $0x84] sm:$0xf]
        %v2875 = vld [vmem:[%s4 + $0x88] sm:$0xf]
        %v2876 = vld [vmem:[%s4 + $0x8c] sm:$0xf]
        %v2877 = vld [vmem:[%s4 + $0x90] sm:$0xf]
        %v2878 = vld [vmem:[%s4 + $0x94] sm:$0xf]
        %v2879 = vld [vmem:[%s4 + $0x98] sm:$0xf]
        %v2880 = vld [vmem:[%s4 + $0x9c] sm:$0xf]
        %v2881 = vld [vmem:[%s4 + $0xa0] sm:$0xf]
        %v2882 = vld [vmem:[%s4 + $0xa4] sm:$0xf]
        %v2883 = vld [vmem:[%s4 + $0xa8] sm:$0xf]
        %v2884 = vld [vmem:[%s4 + $0xac] sm:$0xf]
        %v2885 = vld [vmem:[%s4 + $0xb0] sm:$0xf]
        %v2886 = vld [vmem:[%s4 + $0xb4] sm:$0xf]
        %v2887 = vld [vmem:[%s4 + $0xb8] sm:$0xf]
        %v2888 = vld [vmem:[%s4 + $0xbc] sm:$0xf]
        %v2889 = vld [vmem:[%s4 + $0xc0] sm:$0xf]
        %v2890 = vld [vmem:[%s4 + $0xc4] sm:$0xf]
        %v2891 = vld [vmem:[%s4 + $0xc8] sm:$0xf]
        %v2892 = vld [vmem:[%s4 + $0xcc] sm:$0xf]
        %v2893 = vld [vmem:[%s4 + $0xd0] sm:$0xf]
        %v2894 = vld [vmem:[%s4 + $0xd4] sm:$0xf]
        %v2895 = vld [vmem:[%s4 + $0xd8] sm:$0xf]
        %v2896 = vld [vmem:[%s4 + $0xdc] sm:$0xf]
        %v2897 = vld [vmem:[%s4 + $0xe0] sm:$0xf]
        %v2898 = vld [vmem:[%s4 + $0xe4] sm:$0xf]
        %v2899 = vld [vmem:[%s4 + $0xe8] sm:$0xf]
        %v2900 = vld [vmem:[%s4 + $0xec] sm:$0xf]
        %v2901 = vld [vmem:[%s4 + $0xf0] sm:$0xf]
        %v2902 = vld [vmem:[%s4 + $0xf4] sm:$0xf]
        %v2903 = vld [vmem:[%s4 + $0xf8] sm:$0xf]
        %v2904 = vld [vmem:[%s4 + $0xfc] sm:$0xf]
        %v2905 = vld [vmem:[%s4 + $0x100] sm:$0xf]
        %v2906 = vld [vmem:[%s4 + $0x104] sm:$0xf]
        %v2907 = vld [vmem:[%s4 + $0x108] sm:$0xf]
        %v2908 = vld [vmem:[%s4 + $0x10c] sm:$0xf]
        %v2909 = vld [vmem:[%s4 + $0x110] sm:$0xf]
        %v2910 = vld [vmem:[%s4 + $0x114] sm:$0xf]
        %v2911 = vld [vmem:[%s4 + $0x118] sm:$0xf]
        %v2912 = vld [vmem:[%s4 + $0x11c] sm:$0xf]
        %v2913 = vld [vmem:[%s4 + $0x120] sm:$0xf]
        %v2914 = vld [vmem:[%s4 + $0x124] sm:$0xf]
        %v2915 = vld [vmem:[%s4 + $0x128] sm:$0xf]
        %v2916 = vld [vmem:[%s4 + $0x12c] sm:$0xf]
        %v2917 = vld [vmem:[%s4 + $0x130] sm:$0xf]
        %v2918 = vld [vmem:[%s4 + $0x134] sm:$0xf]
        %v2919 = vld [vmem:[%s4 + $0x138] sm:$0xf]
        %v2920 = vld [vmem:[%s4 + $0x13c] sm:$0xf]
        %v2921 = vld [vmem:[%s4 + $0x140] sm:$0xf]
        %v2922 = vld [vmem:[%s4 + $0x144] sm:$0xf]
        %v2923 = vld [vmem:[%s4 + $0x148] sm:$0xf]
        %v2924 = vld [vmem:[%s4 + $0x14c] sm:$0xf]
        %v2925 = vld [vmem:[%s4 + $0x150] sm:$0xf]
        %v2926 = vld [vmem:[%s4 + $0x154] sm:$0xf]
        %v2927 = vld [vmem:[%s4 + $0x158] sm:$0xf]
        %v2928 = vld [vmem:[%s4 + $0x15c] sm:$0xf]
        %v2929 = vld [vmem:[%s4 + $0x160] sm:$0xf]
        %v2930 = vld [vmem:[%s4 + $0x164] sm:$0xf]
        %v2931 = vld [vmem:[%s4 + $0x168] sm:$0xf]
        %v2932 = vld [vmem:[%s4 + $0x16c] sm:$0xf]
        %v2933 = vld [vmem:[%s4 + $0x170] sm:$0xf]
        %v2934 = vld [vmem:[%s4 + $0x174] sm:$0xf]
        %v2935 = vld [vmem:[%s4 + $0x178] sm:$0xf]
        %v2936 = vld [vmem:[%s4 + $0x17c] sm:$0xf]
        %v2937 = vld [vmem:[%s4 + $0x180] sm:$0xf]
        %v2938 = vld [vmem:[%s4 + $0x184] sm:$0xf]
        %v2939 = vld [vmem:[%s4 + $0x188] sm:$0xf]
        %v2940 = vld [vmem:[%s4 + $0x18c] sm:$0xf]
        %v2941 = vld [vmem:[%s4 + $0x190] sm:$0xf]
        %v2942 = vld [vmem:[%s4 + $0x194] sm:$0xf]
        %v2943 = vld [vmem:[%s4 + $0x198] sm:$0xf]
        %v2944 = vld [vmem:[%s4 + $0x19c] sm:$0xf]
        %v2945 = vld [vmem:[%s4 + $0x1a0] sm:$0xf]
        %v2946 = vld [vmem:[%s4 + $0x1a4] sm:$0xf]
        %v2947 = vld [vmem:[%s4 + $0x1a8] sm:$0xf]
        %v2948 = vld [vmem:[%s4 + $0x1ac] sm:$0xf]
        %v2949 = vld [vmem:[%s4 + $0x1b0] sm:$0xf]
        %v2950 = vld [vmem:[%s4 + $0x1b4] sm:$0xf]
        %v2951 = vld [vmem:[%s4 + $0x1b8] sm:$0xf]
        %v2952 = vld [vmem:[%s4 + $0x1bc] sm:$0xf]
        %v2953 = vld [vmem:[%s4 + $0x1c0] sm:$0xf]
        %v2954 = vld [vmem:[%s4 + $0x1c4] sm:$0xf]
        %v2955 = vld [vmem:[%s4 + $0x1c8] sm:$0xf]
        %v2956 = vld [vmem:[%s4 + $0x1cc] sm:$0xf]
        %v2957 = vld [vmem:[%s4 + $0x1d0] sm:$0xf]
        %v2958 = vld [vmem:[%s4 + $0x1d4] sm:$0xf]
        %v2959 = vld [vmem:[%s4 + $0x1d8] sm:$0xf]
        %v2960 = vld [vmem:[%s4 + $0x1dc] sm:$0xf]
        %v2961 = vld [vmem:[%s4 + $0x1e0] sm:$0xf]
        %v2962 = vld [vmem:[%s4 + $0x1e4] sm:$0xf]
        %v2963 = vld [vmem:[%s4 + $0x1e8] sm:$0xf]
        %v2964 = vld [vmem:[%s4 + $0x1ec] sm:$0xf]
        %v2965 = vld [vmem:[%s4 + $0x1f0] sm:$0xf]
        %v2966 = vld [vmem:[%s4 + $0x1f4] sm:$0xf]
        %v2967 = vld [vmem:[%s4 + $0x1f8] sm:$0xf]
        %v2968 = vld [vmem:[%s4 + $0x1fc] sm:$0xf]
        %v2969 = vld [vmem:[%s4 + $0x200] sm:$0xf]
        %v2970 = vld [vmem:[%s4 + $0x204] sm:$0xf]
        %v2971 = vld [vmem:[%s4 + $0x208] sm:$0xf]
        %v2972 = vld [vmem:[%s4 + $0x20c] sm:$0xf]
        %v2973 = vld [vmem:[%s4 + $0x210] sm:$0xf]
        %v2974 = vld [vmem:[%s4 + $0x214] sm:$0xf]
        %v2975 = vld [vmem:[%s4 + $0x218] sm:$0xf]
        %v2976 = vld [vmem:[%s4 + $0x21c] sm:$0xf]
        %v2977 = vld [vmem:[%s4 + $0x220] sm:$0xf]
        %v2978 = vld [vmem:[%s4 + $0x224] sm:$0xf]
        %v2979 = vld [vmem:[%s4 + $0x228] sm:$0xf]
        %v2980 = vld [vmem:[%s4 + $0x22c] sm:$0xf]
        %v2981 = vld [vmem:[%s4 + $0x230] sm:$0xf]
        %v2982 = vld [vmem:[%s4 + $0x234] sm:$0xf]
        %v2983 = vld [vmem:[%s4 + $0x238] sm:$0xf]
        %v2984 = vld [vmem:[%s4 + $0x23c] sm:$0xf]
        %v2985 = vld [vmem:[%s5] sm:$0x1]
        %v2987 = vlaneseq
        %v2988 = vshrl.u32 %v2987, 7
        %v2989 = vsub.s32 0, %v2988
        %v2990 = vrot.slane %v2985, %v2989
        %v3136 = vunpack.c.l.b16 %v2841
        %v3137 = vunpack.c.l.b16 %v2842
        %v3138 = vunpack.c.l.b16 %v2843
        %v3139 = vunpack.c.l.b16 %v2844
        %v3140 = vunpack.c.l.b16 %v2845
        %v3141 = vunpack.c.l.b16 %v2846
        %v3142 = vunpack.c.l.b16 %v2847
        %v3143 = vunpack.c.l.b16 %v2848
        %v3144 = vunpack.c.l.b16 %v2849
        %v3145 = vunpack.c.l.b16 %v2850
        %v3146 = vunpack.c.l.b16 %v2851
        %v3147 = vunpack.c.l.b16 %v2852
        %v3148 = vunpack.c.l.b16 %v2853
        %v3149 = vunpack.c.l.b16 %v2854
        %v3150 = vunpack.c.l.b16 %v2855
        %v3151 = vunpack.c.l.b16 %v2856
        %v3152 = vunpack.c.l.b16 %v2857
        %v3153 = vunpack.c.l.b16 %v2858
        %v3154 = vunpack.c.l.b16 %v2859
        %v3155 = vunpack.c.l.b16 %v2860
        %v3156 = vunpack.c.l.b16 %v2861
        %v3157 = vunpack.c.l.b16 %v2862
        %v3158 = vunpack.c.l.b16 %v2863
        %v3159 = vunpack.c.l.b16 %v2864
        %v3160 = vunpack.c.l.b16 %v2865
        %v3161 = vunpack.c.l.b16 %v2866
        %v3162 = vunpack.c.l.b16 %v2867
        %v3163 = vunpack.c.l.b16 %v2868
        %v3164 = vunpack.c.l.b16 %v2869
        %v3165 = vunpack.c.l.b16 %v2870
        %v3166 = vunpack.c.l.b16 %v2871
        %v3167 = vunpack.c.l.b16 %v2872
        %v3168 = vunpack.c.l.b16 %v2873
        %v3169 = vunpack.c.l.b16 %v2874
        %v3170 = vunpack.c.l.b16 %v2875
        %v3171 = vunpack.c.l.b16 %v2876
        %v3172 = vunpack.c.l.b16 %v2877
        %v3173 = vunpack.c.l.b16 %v2878
        %v3174 = vunpack.c.l.b16 %v2879
        %v3175 = vunpack.c.l.b16 %v2880
        %v3176 = vunpack.c.l.b16 %v2881
        %v3177 = vunpack.c.l.b16 %v2882
        %v3178 = vunpack.c.l.b16 %v2883
        %v3179 = vunpack.c.l.b16 %v2884
        %v3180 = vunpack.c.l.b16 %v2885
        %v3181 = vunpack.c.l.b16 %v2886
        %v3182 = vunpack.c.l.b16 %v2887
        %v3183 = vunpack.c.l.b16 %v2888
        %v3184 = vunpack.c.l.b16 %v2889
        %v3185 = vunpack.c.l.b16 %v2890
        %v3186 = vunpack.c.l.b16 %v2891
        %v3187 = vunpack.c.l.b16 %v2892
        %v3188 = vunpack.c.l.b16 %v2893
        %v3189 = vunpack.c.l.b16 %v2894
        %v3190 = vunpack.c.l.b16 %v2895
        %v3191 = vunpack.c.l.b16 %v2896
        %v3192 = vunpack.c.l.b16 %v2897
        %v3193 = vunpack.c.l.b16 %v2898
        %v3194 = vunpack.c.l.b16 %v2899
        %v3195 = vunpack.c.l.b16 %v2900
        %v3196 = vunpack.c.l.b16 %v2901
        %v3197 = vunpack.c.l.b16 %v2902
        %v3198 = vunpack.c.l.b16 %v2903
        %v3199 = vunpack.c.l.b16 %v2904
        %v3200 = vunpack.c.l.b16 %v2905
        %v3201 = vunpack.c.l.b16 %v2906
        %v3202 = vunpack.c.l.b16 %v2907
        %v3203 = vunpack.c.l.b16 %v2908
        %v3204 = vunpack.c.l.b16 %v2909
        %v3205 = vunpack.c.l.b16 %v2910
        %v3206 = vunpack.c.l.b16 %v2911
        %v3207 = vunpack.c.l.b16 %v2912
        %v3208 = vunpack.c.l.b16 %v2913
        %v3209 = vunpack.c.l.b16 %v2914
        %v3210 = vunpack.c.l.b16 %v2915
        %v3211 = vunpack.c.l.b16 %v2916
        %v3212 = vunpack.c.l.b16 %v2917
        %v3213 = vunpack.c.l.b16 %v2918
        %v3214 = vunpack.c.l.b16 %v2919
        %v3215 = vunpack.c.l.b16 %v2920
        %v3216 = vunpack.c.l.b16 %v2921
        %v3217 = vunpack.c.l.b16 %v2922
        %v3218 = vunpack.c.l.b16 %v2923
        %v3219 = vunpack.c.l.b16 %v2924
        %v3220 = vunpack.c.l.b16 %v2925
        %v3221 = vunpack.c.l.b16 %v2926
        %v3222 = vunpack.c.l.b16 %v2927
        %v3223 = vunpack.c.l.b16 %v2928
        %v3224 = vunpack.c.l.b16 %v2929
        %v3225 = vunpack.c.l.b16 %v2930
        %v3226 = vunpack.c.l.b16 %v2931
        %v3227 = vunpack.c.l.b16 %v2932
        %v3228 = vunpack.c.l.b16 %v2933
        %v3229 = vunpack.c.l.b16 %v2934
        %v3230 = vunpack.c.l.b16 %v2935
        %v3231 = vunpack.c.l.b16 %v2936
        %v3232 = vunpack.c.l.b16 %v2937
        %v3233 = vunpack.c.l.b16 %v2938
        %v3234 = vunpack.c.l.b16 %v2939
        %v3235 = vunpack.c.l.b16 %v2940
        %v3236 = vunpack.c.l.b16 %v2941
        %v3237 = vunpack.c.l.b16 %v2942
        %v3238 = vunpack.c.l.b16 %v2943
        %v3239 = vunpack.c.l.b16 %v2944
        %v3240 = vunpack.c.l.b16 %v2945
        %v3241 = vunpack.c.l.b16 %v2946
        %v3242 = vunpack.c.l.b16 %v2947
        %v3243 = vunpack.c.l.b16 %v2948
        %v3244 = vunpack.c.l.b16 %v2949
        %v3245 = vunpack.c.l.b16 %v2950
        %v3246 = vunpack.c.l.b16 %v2951
        %v3247 = vunpack.c.l.b16 %v2952
        %v3248 = vunpack.c.l.b16 %v2953
        %v3249 = vunpack.c.l.b16 %v2954
        %v3250 = vunpack.c.l.b16 %v2955
        %v3251 = vunpack.c.l.b16 %v2956
        %v3252 = vunpack.c.l.b16 %v2957
        %v3253 = vunpack.c.l.b16 %v2958
        %v3254 = vunpack.c.l.b16 %v2959
        %v3255 = vunpack.c.l.b16 %v2960
        %v3256 = vunpack.c.l.b16 %v2961
        %v3257 = vunpack.c.l.b16 %v2962
        %v3258 = vunpack.c.l.b16 %v2963
        %v3259 = vunpack.c.l.b16 %v2964
        %v3260 = vunpack.c.l.b16 %v2965
        %v3261 = vunpack.c.l.b16 %v2966
        %v3262 = vunpack.c.l.b16 %v2967
        %v3263 = vunpack.c.l.b16 %v2968
        %v3264 = vunpack.c.l.b16 %v2969
        %v3265 = vunpack.c.l.b16 %v2970
        %v3266 = vunpack.c.l.b16 %v2971
        %v3267 = vunpack.c.l.b16 %v2972
        %v3268 = vunpack.c.l.b16 %v2973
        %v3269 = vunpack.c.l.b16 %v2974
        %v3270 = vunpack.c.l.b16 %v2975
        %v3271 = vunpack.c.l.b16 %v2976
        %v3272 = vunpack.c.l.b16 %v2977
        %v3273 = vunpack.c.l.b16 %v2978
        %v3274 = vunpack.c.l.b16 %v2979
        %v3275 = vunpack.c.l.b16 %v2980
        %v3276 = vunpack.c.l.b16 %v2981
        %v3277 = vunpack.c.l.b16 %v2982
        %v3278 = vunpack.c.l.b16 %v2983
        %v3279 = vunpack.c.l.b16 %v2984
        %v3280 = vpack.c.b16 %v3137, %v3136
        %v3281 = vpack.c.b16 %v3139, %v3138
        %v3282 = vpack.c.b16 %v3141, %v3140
        %v3283 = vpack.c.b16 %v3143, %v3142
        %v3284 = vpack.c.b16 %v3145, %v3144
        %v3285 = vpack.c.b16 %v3147, %v3146
        %v3286 = vpack.c.b16 %v3149, %v3148
        %v3287 = vpack.c.b16 %v3151, %v3150
        %v3288 = vpack.c.b16 %v3153, %v3152
        %v3289 = vpack.c.b16 %v3155, %v3154
        %v3290 = vpack.c.b16 %v3157, %v3156
        %v3291 = vpack.c.b16 %v3159, %v3158
        %v3292 = vpack.c.b16 %v3161, %v3160
        %v3293 = vpack.c.b16 %v3163, %v3162
        %v3294 = vpack.c.b16 %v3165, %v3164
        %v3295 = vpack.c.b16 %v3167, %v3166
        %v3296 = vpack.c.b16 %v3169, %v3168
        %v3297 = vpack.c.b16 %v3171, %v3170
        %v3298 = vpack.c.b16 %v3173, %v3172
        %v3299 = vpack.c.b16 %v3175, %v3174
        %v3300 = vpack.c.b16 %v3177, %v3176
        %v3301 = vpack.c.b16 %v3179, %v3178
        %v3302 = vpack.c.b16 %v3181, %v3180
        %v3303 = vpack.c.b16 %v3183, %v3182
        %v3304 = vpack.c.b16 %v3185, %v3184
        %v3305 = vpack.c.b16 %v3187, %v3186
        %v3306 = vpack.c.b16 %v3189, %v3188
        %v3307 = vpack.c.b16 %v3191, %v3190
        %v3308 = vpack.c.b16 %v3193, %v3192
        %v3309 = vpack.c.b16 %v3195, %v3194
        %v3310 = vpack.c.b16 %v3197, %v3196
        %v3311 = vpack.c.b16 %v3199, %v3198
        %v3312 = vpack.c.b16 %v3201, %v3200
        %v3313 = vpack.c.b16 %v3203, %v3202
        %v3314 = vpack.c.b16 %v3205, %v3204
        %v3315 = vpack.c.b16 %v3207, %v3206
        %v3316 = vpack.c.b16 %v3209, %v3208
        %v3317 = vpack.c.b16 %v3211, %v3210
        %v3318 = vpack.c.b16 %v3213, %v3212
        %v3319 = vpack.c.b16 %v3215, %v3214
        %v3320 = vpack.c.b16 %v3217, %v3216
        %v3321 = vpack.c.b16 %v3219, %v3218
        %v3322 = vpack.c.b16 %v3221, %v3220
        %v3323 = vpack.c.b16 %v3223, %v3222
        %v3324 = vpack.c.b16 %v3225, %v3224
        %v3325 = vpack.c.b16 %v3227, %v3226
        %v3326 = vpack.c.b16 %v3229, %v3228
        %v3327 = vpack.c.b16 %v3231, %v3230
        %v3328 = vpack.c.b16 %v3233, %v3232
        %v3329 = vpack.c.b16 %v3235, %v3234
        %v3330 = vpack.c.b16 %v3237, %v3236
        %v3331 = vpack.c.b16 %v3239, %v3238
        %v3332 = vpack.c.b16 %v3241, %v3240
        %v3333 = vpack.c.b16 %v3243, %v3242
        %v3334 = vpack.c.b16 %v3245, %v3244
        %v3335 = vpack.c.b16 %v3247, %v3246
        %v3336 = vpack.c.b16 %v3249, %v3248
        %v3337 = vpack.c.b16 %v3251, %v3250
        %v3338 = vpack.c.b16 %v3253, %v3252
        %v3339 = vpack.c.b16 %v3255, %v3254
        %v3340 = vpack.c.b16 %v3257, %v3256
        %v3341 = vpack.c.b16 %v3259, %v3258
        %v3342 = vpack.c.b16 %v3261, %v3260
        %v3343 = vpack.c.b16 %v3263, %v3262
        %v3344 = vpack.c.b16 %v3265, %v3264
        %v3345 = vpack.c.b16 %v3267, %v3266
        %v3346 = vpack.c.b16 %v3269, %v3268
        %v3347 = vpack.c.b16 %v3271, %v3270
        %v3348 = vpack.c.b16 %v3273, %v3272
        %v3349 = vpack.c.b16 %v3275, %v3274
        %v3350 = vpack.c.b16 %v3277, %v3276
        %v3351 = vpack.c.b16 %v3279, %v3278
        %3424 = vmatprep.subr.bf16.mxu0 0
        %3425 = vmatpush1.bf16.msra.mxu0 %v3280
        %3426 = vmatprep.subr.bf16.mxu0 0
        %3427 = vmatpush1.bf16.msra.mxu0 %v3281
        %3428 = vmatprep.subr.bf16.mxu0 0
        %3429 = vmatpush1.bf16.msra.mxu0 %v3282
        %3430 = vmatprep.subr.bf16.mxu0 0
        %3431 = vmatpush1.bf16.msra.mxu0 %v3283
        %3432 = vmatprep.subr.bf16.mxu0 0
        %3433 = vmatpush1.bf16.msra.mxu0 %v3284
        %3434 = vmatprep.subr.bf16.mxu0 0
        %3435 = vmatpush1.bf16.msra.mxu0 %v3285
        %3436 = vmatprep.subr.bf16.mxu0 0
        %3437 = vmatpush1.bf16.msra.mxu0 %v3286
        %3438 = vmatprep.subr.bf16.mxu0 0
        %3439 = vmatpush1.bf16.msra.mxu0 %v3287
        %3440 = vmatprep.subr.bf16.mxu0 0
        %3441 = vmatpush1.bf16.msra.mxu0 %v3288
        %3442 = vmatprep.subr.bf16.mxu0 0
        %3443 = vmatpush1.bf16.msra.mxu0 %v3289
        %3444 = vmatprep.subr.bf16.mxu0 0
        %3445 = vmatpush1.bf16.msra.mxu0 %v3290
        %3446 = vmatprep.subr.bf16.mxu0 0
        %3447 = vmatpush1.bf16.msra.mxu0 %v3291
        %3448 = vmatprep.subr.bf16.mxu0 0
        %3449 = vmatpush1.bf16.msra.mxu0 %v3292
        %3450 = vmatprep.subr.bf16.mxu0 0
        %3451 = vmatpush1.bf16.msra.mxu0 %v3293
        %3452 = vmatprep.subr.bf16.mxu0 0
        %3453 = vmatpush1.bf16.msra.mxu0 %v3294
        %3454 = vmatprep.subr.bf16.mxu0 0
        %3455 = vmatpush1.bf16.msra.mxu0 %v3295
        %3456 = vmatprep.mubr.bf16.mxu0 %v2527
        %3457 = vmatmul.mubr.bf16.gmra.mrb[0].mxu0 %v2435
        %v3458 = vpop.f32.mrb[0].mxu0
        %v3459 = vadd.f32 %v2990, %v3458
        %v3460 = vpop.f32.mrb[0].mxu0
        %v3461 = vpop.f32.mrb[0].mxu0
        %v3462 = vadd.f32 %v2990, %v3461
        %v3463 = vpop.f32.mrb[0].mxu0
        %3464 = vmatprep.mubr.bf16.mxu0 %v2539
        %3465 = vmatmul.mubr.bf16.gmra.mrb[0].mxu0 %v2436
        %v3466 = vpop.f32.mrb[0].mxu0
        %v3467 = vadd.f32 %v2990, %v3466
        %v3468 = vpop.f32.mrb[0].mxu0
        %v3469 = vpop.f32.mrb[0].mxu0
        %v3470 = vadd.f32 %v2990, %v3469
        %v3471 = vpop.f32.mrb[0].mxu0
        %3472 = vmatprep.mubr.bf16.mxu0 %v2551
        %3473 = vmatmul.mubr.bf16.gmra.mrb[0].mxu0 %v2437
        %v3474 = vpop.f32.mrb[0].mxu0
        %v3475 = vadd.f32 %v2990, %v3474
        %v3476 = vpop.f32.mrb[0].mxu0
        %v3477 = vpop.f32.mrb[0].mxu0
        %v3478 = vadd.f32 %v2990, %v3477
        %v3479 = vpop.f32.mrb[0].mxu0
        %3480 = vmatprep.mubr.bf16.mxu0 %v2563
        %3481 = vmatmul.mubr.bf16.gmra.mrb[0].mxu0 %v2438
        %v3482 = vpop.f32.mrb[0].mxu0
        %v3483 = vadd.f32 %v2990, %v3482
        %v3484 = vpop.f32.mrb[0].mxu0
        %v3485 = vpop.f32.mrb[0].mxu0
        %v3486 = vadd.f32 %v2990, %v3485
        %v3487 = vpop.f32.mrb[0].mxu0
        %3488 = vmatprep.mubr.bf16.mxu0 %v2575
        %3489 = vmatmul.mubr.bf16.gmra.mrb[0].mxu0 %v2439
        %v3490 = vpop.f32.mrb[0].mxu0
        %v3491 = vadd.f32 %v2990, %v3490
        %v3492 = vpop.f32.mrb[0].mxu0
        %v3493 = vpop.f32.mrb[0].mxu0
        %v3494 = vadd.f32 %v2990, %v3493
        %v3495 = vpop.f32.mrb[0].mxu0
        %3496 = vmatprep.mubr.bf16.mxu0 %v2587
        %3497 = vmatmul.mubr.bf16.gmra.mrb[0].mxu0 %v2440
        %v3498 = vpop.f32.mrb[0].mxu0
        %v3499 = vadd.f32 %v2990, %v3498
        %v3500 = vpop.f32.mrb[0].mxu0
        %v3501 = vpop.f32.mrb[0].mxu0
        %v3502 = vadd.f32 %v2990, %v3501
        %v3503 = vpop.f32.mrb[0].mxu0
        %3504 = vmatprep.mubr.bf16.mxu0 %v2599
        %3505 = vmatmul.mubr.bf16.gmra.mrb[0].mxu0 %v2441
        %v3506 = vpop.f32.mrb[0].mxu0
        %v3507 = vadd.f32 %v2990, %v3506
        %v3508 = vpop.f32.mrb[0].mxu0
        %v3509 = vpop.f32.mrb[0].mxu0
        %v3510 = vadd.f32 %v2990, %v3509
        %v3511 = vpop.f32.mrb[0].mxu0
        %3512 = vmatprep.mubr.bf16.mxu0 %v2611
        %3513 = vmatmul.mubr.bf16.gmra.mrb[0].mxu0 %v2442
        %v3514 = vpop.f32.mrb[0].mxu0
        %v3515 = vadd.f32 %v2990, %v3514
        %v3516 = vpop.f32.mrb[0].mxu0
        %v3517 = vpop.f32.mrb[0].mxu0
        %v3518 = vadd.f32 %v2990, %v3517
        %v3519 = vpop.f32.mrb[0].mxu0
        %3520 = vmatprep.mubr.bf16.mxu0 %v2623
        %3521 = vmatmul.mubr.bf16.gmra.mrb[0].mxu0 %v2443
        %v3522 = vpop.f32.mrb[0].mxu0
        %v3523 = vadd.f32 %v2990, %v3522
        %v3524 = vpop.f32.mrb[0].mxu0
        %v3525 = vpop.f32.mrb[0].mxu0
        %v3526 = vadd.f32 %v2990, %v3525
        %v3527 = vpop.f32.mrb[0].mxu0
        %3528 = vmatprep.mubr.bf16.mxu0 %v2635
        %3529 = vmatmul.mubr.bf16.gmra.mrb[0].mxu0 %v2444
        %v3530 = vpop.f32.mrb[0].mxu0
        %v3531 = vadd.f32 %v2990, %v3530
        %v3532 = vpop.f32.mrb[0].mxu0
        %v3533 = vpop.f32.mrb[0].mxu0
        %v3534 = vadd.f32 %v2990, %v3533
        %v3535 = vpop.f32.mrb[0].mxu0
        %3536 = vmatprep.mubr.bf16.mxu0 %v2647
        %3537 = vmatmul.mubr.bf16.gmra.mrb[0].mxu0 %v2445
        %v3538 = vpop.f32.mrb[0].mxu0
        %v3539 = vadd.f32 %v2990, %v3538
        %v3540 = vpop.f32.mrb[0].mxu0
        %v3541 = vpop.f32.mrb[0].mxu0
        %v3542 = vadd.f32 %v2990, %v3541
        %v3543 = vpop.f32.mrb[0].mxu0
        %3544 = vmatprep.mubr.bf16.mxu0 %v2659
        %3545 = vmatmul.mubr.bf16.gmra.mrb[0].mxu0 %v2446
        %v3546 = vpop.f32.mrb[0].mxu0
        %v3547 = vadd.f32 %v2990, %v3546
        %v3548 = vpop.f32.mrb[0].mxu0
        %v3549 = vpop.f32.mrb[0].mxu0
        %v3550 = vadd.f32 %v2990, %v3549
        %v3551 = vpop.f32.mrb[0].mxu0
        %3552 = vmatprep.mubr.bf16.mxu0 %v2671
        %3553 = vmatmul.mubr.bf16.gmra.mrb[0].mxu0 %v2447
        %v3554 = vpop.f32.mrb[0].mxu0
        %v3555 = vadd.f32 %v2990, %v3554
        %v3556 = vpop.f32.mrb[0].mxu0
        %v3557 = vpop.f32.mrb[0].mxu0
        %v3558 = vadd.f32 %v2990, %v3557
        %v3559 = vpop.f32.mrb[0].mxu0
        %3560 = vmatprep.mubr.bf16.mxu0 %v2683
        %3561 = vmatmul.mubr.bf16.gmra.mrb[0].mxu0 %v2448
        %v3562 = vpop.f32.mrb[0].mxu0
        %v3563 = vadd.f32 %v2990, %v3562
        %v3564 = vpop.f32.mrb[0].mxu0
        %v3565 = vpop.f32.mrb[0].mxu0
        %v3566 = vadd.f32 %v2990, %v3565
        %v3567 = vpop.f32.mrb[0].mxu0
        %3568 = vmatprep.mubr.bf16.mxu0 %v2695
        %3569 = vmatmul.mubr.bf16.gmra.mrb[0].mxu0 %v2449
        %v3570 = vpop.f32.mrb[0].mxu0
        %v3571 = vadd.f32 %v2990, %v3570
        %v3572 = vpop.f32.mrb[0].mxu0
        %v3573 = vpop.f32.mrb[0].mxu0
        %v3574 = vadd.f32 %v2990, %v3573
        %v3575 = vpop.f32.mrb[0].mxu0
        %3576 = vmatprep.mubr.bf16.mxu0 %v2707
        %3577 = vmatmul.mubr.bf16.gmra.mrb[0].mxu0 %v2450
        %v3578 = vpop.f32.mrb[0].mxu0
        %v3579 = vadd.f32 %v2990, %v3578
        %v3580 = vpop.f32.mrb[0].mxu0
        %v3581 = vpop.f32.mrb[0].mxu0
        %v3582 = vadd.f32 %v2990, %v3581
        %v3583 = vpop.f32.mrb[0].mxu0
        %3584 = vdwg.mxu0
        %3585 = vmatprep.subr.bf16.mxu0 0
        %3586 = vmatpush1.bf16.msra.mxu0 %v3296
        %3587 = vmatprep.subr.bf16.mxu0 0
        %3588 = vmatpush1.bf16.msra.mxu0 %v3297
        %3589 = vmatprep.subr.bf16.mxu0 0
        %3590 = vmatpush1.bf16.msra.mxu0 %v3298
        %3591 = vmatprep.subr.bf16.mxu0 0
        %3592 = vmatpush1.bf16.msra.mxu0 %v3299
        %3593 = vmatprep.subr.bf16.mxu0 0
        %3594 = vmatpush1.bf16.msra.mxu0 %v3300
        %3595 = vmatprep.subr.bf16.mxu0 0
        %3596 = vmatpush1.bf16.msra.mxu0 %v3301
        %3597 = vmatprep.subr.bf16.mxu0 0
        %3598 = vmatpush1.bf16.msra.mxu0 %v3302
        %3599 = vmatprep.subr.bf16.mxu0 0
        %3600 = vmatpush1.bf16.msra.mxu0 %v3303
        %3601 = vmatprep.subr.bf16.mxu0 0
        %3602 = vmatpush1.bf16.msra.mxu0 %v3304
        %3603 = vmatprep.subr.bf16.mxu0 0
        %3604 = vmatpush1.bf16.msra.mxu0 %v3305
        %3605 = vmatprep.subr.bf16.mxu0 0
        %3606 = vmatpush1.bf16.msra.mxu0 %v3306
        %3607 = vmatprep.subr.bf16.mxu0 0
        %3608 = vmatpush1.bf16.msra.mxu0 %v3307
        %3609 = vmatprep.subr.bf16.mxu0 0
        %3610 = vmatpush1.bf16.msra.mxu0 %v3308
        %3611 = vmatprep.subr.bf16.mxu0 0
        %3612 = vmatpush1.bf16.msra.mxu0 %v3309
        %3613 = vmatprep.subr.bf16.mxu0 0
        %3614 = vmatpush1.bf16.msra.mxu0 %v3310
        %3615 = vmatprep.subr.bf16.mxu0 0
        %3616 = vmatpush1.bf16.msra.mxu0 %v3311
        %3617 = vmatprep.mubr.bf16.mxu0 %v2436
        %3618 = vmatmul.mubr.bf16.gmra.mrb[0].mxu0 %v2727
        %v3619 = vpop.f32.mrb[0].mxu0
        %v3620 = vadd.f32 %v3459, %v3619
        %v3621 = vpop.f32.mrb[0].mxu0
        %v3622 = vpop.f32.mrb[0].mxu0
        %v3623 = vadd.f32 %v3462, %v3622
        %v3624 = vpop.f32.mrb[0].mxu0
        %3625 = vmatprep.mubr.bf16.mxu0 %v2437
        %3626 = vmatmul.mubr.bf16.gmra.mrb[0].mxu0 %v2730
        %v3627 = vpop.f32.mrb[0].mxu0
        %v3628 = vadd.f32 %v3467, %v3627
        %v3629 = vpop.f32.mrb[0].mxu0
        %v3630 = vpop.f32.mrb[0].mxu0
        %v3631 = vadd.f32 %v3470, %v3630
        %v3632 = vpop.f32.mrb[0].mxu0
        %3633 = vmatprep.mubr.bf16.mxu0 %v2438
        %3634 = vmatmul.mubr.bf16.gmra.mrb[0].mxu0 %v2733
        %v3635 = vpop.f32.mrb[0].mxu0
        %v3636 = vadd.f32 %v3475, %v3635
        %v3637 = vpop.f32.mrb[0].mxu0
        %v3638 = vpop.f32.mrb[0].mxu0
        %v3639 = vadd.f32 %v3478, %v3638
        %v3640 = vpop.f32.mrb[0].mxu0
        %3641 = vmatprep.mubr.bf16.mxu0 %v2439
        %3642 = vmatmul.mubr.bf16.gmra.mrb[0].mxu0 %v2736
        %v3643 = vpop.f32.mrb[0].mxu0
        %v3644 = vadd.f32 %v3483, %v3643
        %v3645 = vpop.f32.mrb[0].mxu0
        %v3646 = vpop.f32.mrb[0].mxu0
        %v3647 = vadd.f32 %v3486, %v3646
        %v3648 = vpop.f32.mrb[0].mxu0
        %3649 = vmatprep.mubr.bf16.mxu0 %v2440
        %3650 = vmatmul.mubr.bf16.gmra.mrb[0].mxu0 %v2739
        %v3651 = vpop.f32.mrb[0].mxu0
        %v3652 = vadd.f32 %v3491, %v3651
        %v3653 = vpop.f32.mrb[0].mxu0
        %v3654 = vpop.f32.mrb[0].mxu0
        %v3655 = vadd.f32 %v3494, %v3654
        %v3656 = vpop.f32.mrb[0].mxu0
        %3657 = vmatprep.mubr.bf16.mxu0 %v2441
        %3658 = vmatmul.mubr.bf16.gmra.mrb[0].mxu0 %v2742
        %v3659 = vpop.f32.mrb[0].mxu0
        %v3660 = vadd.f32 %v3499, %v3659
        %v3661 = vpop.f32.mrb[0].mxu0
        %v3662 = vpop.f32.mrb[0].mxu0
        %v3663 = vadd.f32 %v3502, %v3662
        %v3664 = vpop.f32.mrb[0].mxu0
        %3665 = vmatprep.mubr.bf16.mxu0 %v2442
        %3666 = vmatmul.mubr.bf16.gmra.mrb[0].mxu0 %v2745
        %v3667 = vpop.f32.mrb[0].mxu0
        %v3668 = vadd.f32 %v3507, %v3667
        %v3669 = vpop.f32.mrb[0].mxu0
        %v3670 = vpop.f32.mrb[0].mxu0
        %v3671 = vadd.f32 %v3510, %v3670
        %v3672 = vpop.f32.mrb[0].mxu0
        %3673 = vmatprep.mubr.bf16.mxu0 %v2443
        %3674 = vmatmul.mubr.bf16.gmra.mrb[0].mxu0 %v2748
        %v3675 = vpop.f32.mrb[0].mxu0
        %v3676 = vadd.f32 %v3515, %v3675
        %v3677 = vpop.f32.mrb[0].mxu0
        %v3678 = vpop.f32.mrb[0].mxu0
        %v3679 = vadd.f32 %v3518, %v3678
        %v3680 = vpop.f32.mrb[0].mxu0
        %3681 = vmatprep.mubr.bf16.mxu0 %v2444
        %3682 = vmatmul.mubr.bf16.gmra.mrb[0].mxu0 %v2751
        %v3683 = vpop.f32.mrb[0].mxu0
        %v3684 = vadd.f32 %v3523, %v3683
        %v3685 = vpop.f32.mrb[0].mxu0
        %v3686 = vpop.f32.mrb[0].mxu0
        %v3687 = vadd.f32 %v3526, %v3686
        %v3688 = vpop.f32.mrb[0].mxu0
        %3689 = vmatprep.mubr.bf16.mxu0 %v2445
        %3690 = vmatmul.mubr.bf16.gmra.mrb[0].mxu0 %v2754
        %v3691 = vpop.f32.mrb[0].mxu0
        %v3692 = vadd.f32 %v3531, %v3691
        %v3693 = vpop.f32.mrb[0].mxu0
        %v3694 = vpop.f32.mrb[0].mxu0
        %v3695 = vadd.f32 %v3534, %v3694
        %v3696 = vpop.f32.mrb[0].mxu0
        %3697 = vmatprep.mubr.bf16.mxu0 %v2446
        %3698 = vmatmul.mubr.bf16.gmra.mrb[0].mxu0 %v2757
        %v3699 = vpop.f32.mrb[0].mxu0
        %v3700 = vadd.f32 %v3539, %v3699
        %v3701 = vpop.f32.mrb[0].mxu0
        %v3702 = vpop.f32.mrb[0].mxu0
        %v3703 = vadd.f32 %v3542, %v3702
        %v3704 = vpop.f32.mrb[0].mxu0
        %3705 = vmatprep.mubr.bf16.mxu0 %v2447
        %3706 = vmatmul.mubr.bf16.gmra.mrb[0].mxu0 %v2760
        %v3707 = vpop.f32.mrb[0].mxu0
        %v3708 = vadd.f32 %v3547, %v3707
        %v3709 = vpop.f32.mrb[0].mxu0
        %v3710 = vpop.f32.mrb[0].mxu0
        %v3711 = vadd.f32 %v3550, %v3710
        %v3712 = vpop.f32.mrb[0].mxu0
        %3713 = vmatprep.mubr.bf16.mxu0 %v2448
        %3714 = vmatmul.mubr.bf16.gmra.mrb[0].mxu0 %v2763
        %v3715 = vpop.f32.mrb[0].mxu0
        %v3716 = vadd.f32 %v3555, %v3715
        %v3717 = vpop.f32.mrb[0].mxu0
        %v3718 = vpop.f32.mrb[0].mxu0
        %v3719 = vadd.f32 %v3558, %v3718
        %v3720 = vpop.f32.mrb[0].mxu0
        %3721 = vmatprep.mubr.bf16.mxu0 %v2449
        %3722 = vmatmul.mubr.bf16.gmra.mrb[0].mxu0 %v2766
        %v3723 = vpop.f32.mrb[0].mxu0
        %v3724 = vadd.f32 %v3563, %v3723
        %v3725 = vpop.f32.mrb[0].mxu0
        %v3726 = vpop.f32.mrb[0].mxu0
        %v3727 = vadd.f32 %v3566, %v3726
        %v3728 = vpop.f32.mrb[0].mxu0
        %3729 = vmatprep.mubr.bf16.mxu0 %v2450
        %3730 = vmatmul.mubr.bf16.gmra.mrb[0].mxu0 %v2769
        %v3731 = vpop.f32.mrb[0].mxu0
        %v3732 = vadd.f32 %v3571, %v3731
        %v3733 = vpop.f32.mrb[0].mxu0
        %v3734 = vpop.f32.mrb[0].mxu0
        %v3735 = vadd.f32 %v3574, %v3734
        %v3736 = vpop.f32.mrb[0].mxu0
        %3737 = vmatprep.mubr.bf16.mxu0 %v2793
        %3738 = vmatmul.mubr.bf16.gmra.mrb[0].mxu0 %v2772
        %v3739 = vpop.f32.mrb[0].mxu0
        %v3740 = vadd.f32 %v3579, %v3739
        %v3741 = vpop.f32.mrb[0].mxu0
        %v3742 = vpop.f32.mrb[0].mxu0
        %v3743 = vadd.f32 %v3582, %v3742
        %v3744 = vpop.f32.mrb[0].mxu0
        %3745 = vdwg.mxu0
        %3746 = vmatprep.subr.bf16.mxu0 0
        %3747 = vmatpush1.bf16.msra.mxu0 %v3312
        %3748 = vmatprep.subr.bf16.mxu0 0
        %3749 = vmatpush1.bf16.msra.mxu0 %v3313
        %3750 = vmatprep.subr.bf16.mxu0 0
        %3751 = vmatpush1.bf16.msra.mxu0 %v3314
        %3752 = vmatprep.subr.bf16.mxu0 0
        %3753 = vmatpush1.bf16.msra.mxu0 %v3315
        %3754 = vmatprep.subr.bf16.mxu0 0
        %3755 = vmatpush1.bf16.msra.mxu0 %v3316
        %3756 = vmatprep.subr.bf16.mxu0 0
        %3757 = vmatpush1.bf16.msra.mxu0 %v3317
        %3758 = vmatprep.subr.bf16.mxu0 0
        %3759 = vmatpush1.bf16.msra.mxu0 %v3318
        %3760 = vmatprep.subr.bf16.mxu0 0
        %3761 = vmatpush1.bf16.msra.mxu0 %v3319
        %3762 = vmatprep.subr.bf16.mxu0 0
        %3763 = vmatpush1.bf16.msra.mxu0 %v3320
        %3764 = vmatprep.subr.bf16.mxu0 0
        %3765 = vmatpush1.bf16.msra.mxu0 %v3321
        %3766 = vmatprep.subr.bf16.mxu0 0
        %3767 = vmatpush1.bf16.msra.mxu0 %v3322
        %3768 = vmatprep.subr.bf16.mxu0 0
        %3769 = vmatpush1.bf16.msra.mxu0 %v3323
        %3770 = vmatprep.subr.bf16.mxu0 0
        %3771 = vmatpush1.bf16.msra.mxu0 %v3324
        %3772 = vmatprep.subr.bf16.mxu0 0
        %3773 = vmatpush1.bf16.msra.mxu0 %v3325
        %3774 = vmatprep.subr.bf16.mxu0 0
        %3775 = vmatpush1.bf16.msra.mxu0 %v3326
        %3776 = vmatprep.subr.bf16.mxu0 0
        %3777 = vmatpush1.bf16.msra.mxu0 %v3327
        %3778 = vmatprep.mubr.bf16.mxu0 %v2730
        %3779 = vmatmul.mubr.bf16.gmra.mrb[0].mxu0 %v2539
        %v3780 = vpop.f32.mrb[0].mxu0
        %v3781 = vadd.f32 %v3620, %v3780
        %v3782 = vpop.f32.mrb[0].mxu0
        %v3783 = vpop.f32.mrb[0].mxu0
        %v3784 = vadd.f32 %v3623, %v3783
        %v3785 = vpop.f32.mrb[0].mxu0
        %3786 = vmatprep.mubr.bf16.mxu0 %v2733
        %3787 = vmatmul.mubr.bf16.gmra.mrb[0].mxu0 %v2551
        %v3788 = vpop.f32.mrb[0].mxu0
        %v3789 = vadd.f32 %v3628, %v3788
        %v3790 = vpop.f32.mrb[0].mxu0
        %v3791 = vpop.f32.mrb[0].mxu0
        %v3792 = vadd.f32 %v3631, %v3791
        %v3793 = vpop.f32.mrb[0].mxu0
        %3794 = vmatprep.mubr.bf16.mxu0 %v2736
        %3795 = vmatmul.mubr.bf16.gmra.mrb[0].mxu0 %v2563
        %v3796 = vpop.f32.mrb[0].mxu0
        %v3797 = vadd.f32 %v3636, %v3796
        %v3798 = vpop.f32.mrb[0].mxu0
        %v3799 = vpop.f32.mrb[0].mxu0
        %v3800 = vadd.f32 %v3639, %v3799
        %v3801 = vpop.f32.mrb[0].mxu0
        %3802 = vmatprep.mubr.bf16.mxu0 %v2739
        %3803 = vmatmul.mubr.bf16.gmra.mrb[0].mxu0 %v2575
        %v3804 = vpop.f32.mrb[0].mxu0
        %v3805 = vadd.f32 %v3644, %v3804
        %v3806 = vpop.f32.mrb[0].mxu0
        %v3807 = vpop.f32.mrb[0].mxu0
        %v3808 = vadd.f32 %v3647, %v3807
        %v3809 = vpop.f32.mrb[0].mxu0
        %3810 = vmatprep.mubr.bf16.mxu0 %v2742
        %3811 = vmatmul.mubr.bf16.gmra.mrb[0].mxu0 %v2587
        %v3812 = vpop.f32.mrb[0].mxu0
        %v3813 = vadd.f32 %v3652, %v3812
        %v3814 = vpop.f32.mrb[0].mxu0
        %v3815 = vpop.f32.mrb[0].mxu0
        %v3816 = vadd.f32 %v3655, %v3815
        %v3817 = vpop.f32.mrb[0].mxu0
        %3818 = vmatprep.mubr.bf16.mxu0 %v2745
        %3819 = vmatmul.mubr.bf16.gmra.mrb[0].mxu0 %v2599
        %v3820 = vpop.f32.mrb[0].mxu0
        %v3821 = vadd.f32 %v3660, %v3820
        %v3822 = vpop.f32.mrb[0].mxu0
        %v3823 = vpop.f32.mrb[0].mxu0
        %v3824 = vadd.f32 %v3663, %v3823
        %v3825 = vpop.f32.mrb[0].mxu0
        %3826 = vmatprep.mubr.bf16.mxu0 %v2748
        %3827 = vmatmul.mubr.bf16.gmra.mrb[0].mxu0 %v2611
        %v3828 = vpop.f32.mrb[0].mxu0
        %v3829 = vadd.f32 %v3668, %v3828
        %v3830 = vpop.f32.mrb[0].mxu0
        %v3831 = vpop.f32.mrb[0].mxu0
        %v3832 = vadd.f32 %v3671, %v3831
        %v3833 = vpop.f32.mrb[0].mxu0
        %3834 = vmatprep.mubr.bf16.mxu0 %v2751
        %3835 = vmatmul.mubr.bf16.gmra.mrb[0].mxu0 %v2623
        %v3836 = vpop.f32.mrb[0].mxu0
        %v3837 = vadd.f32 %v3676, %v3836
        %v3838 = vpop.f32.mrb[0].mxu0
        %v3839 = vpop.f32.mrb[0].mxu0
        %v3840 = vadd.f32 %v3679, %v3839
        %v3841 = vpop.f32.mrb[0].mxu0
        %3842 = vmatprep.mubr.bf16.mxu0 %v2754
        %3843 = vmatmul.mubr.bf16.gmra.mrb[0].mxu0 %v2635
        %v3844 = vpop.f32.mrb[0].mxu0
        %v3845 = vadd.f32 %v3684, %v3844
        %v3846 = vpop.f32.mrb[0].mxu0
        %v3847 = vpop.f32.mrb[0].mxu0
        %v3848 = vadd.f32 %v3687, %v3847
        %v3849 = vpop.f32.mrb[0].mxu0
        %3850 = vmatprep.mubr.bf16.mxu0 %v2757
        %3851 = vmatmul.mubr.bf16.gmra.mrb[0].mxu0 %v2647
        %v3852 = vpop.f32.mrb[0].mxu0
        %v3853 = vadd.f32 %v3692, %v3852
        %v3854 = vpop.f32.mrb[0].mxu0
        %v3855 = vpop.f32.mrb[0].mxu0
        %v3856 = vadd.f32 %v3695, %v3855
        %v3857 = vpop.f32.mrb[0].mxu0
        %3858 = vmatprep.mubr.bf16.mxu0 %v2760
        %3859 = vmatmul.mubr.bf16.gmra.mrb[0].mxu0 %v2659
        %v3860 = vpop.f32.mrb[0].mxu0
        %v3861 = vadd.f32 %v3700, %v3860
        %v3862 = vpop.f32.mrb[0].mxu0
        %v3863 = vpop.f32.mrb[0].mxu0
        %v3864 = vadd.f32 %v3703, %v3863
        %v3865 = vpop.f32.mrb[0].mxu0
        %3866 = vmatprep.mubr.bf16.mxu0 %v2763
        %3867 = vmatmul.mubr.bf16.gmra.mrb[0].mxu0 %v2671
        %v3868 = vpop.f32.mrb[0].mxu0
        %v3869 = vadd.f32 %v3708, %v3868
        %v3870 = vpop.f32.mrb[0].mxu0
        %v3871 = vpop.f32.mrb[0].mxu0
        %v3872 = vadd.f32 %v3711, %v3871
        %v3873 = vpop.f32.mrb[0].mxu0
        %3874 = vmatprep.mubr.bf16.mxu0 %v2766
        %3875 = vmatmul.mubr.bf16.gmra.mrb[0].mxu0 %v2683
        %v3876 = vpop.f32.mrb[0].mxu0
        %v3877 = vadd.f32 %v3716, %v3876
        %v3878 = vpop.f32.mrb[0].mxu0
        %v3879 = vpop.f32.mrb[0].mxu0
        %v3880 = vadd.f32 %v3719, %v3879
        %v3881 = vpop.f32.mrb[0].mxu0
        %3882 = vmatprep.mubr.bf16.mxu0 %v2769
        %3883 = vmatmul.mubr.bf16.gmra.mrb[0].mxu0 %v2695
        %v3884 = vpop.f32.mrb[0].mxu0
        %v3885 = vadd.f32 %v3724, %v3884
        %v3886 = vpop.f32.mrb[0].mxu0
        %v3887 = vpop.f32.mrb[0].mxu0
        %v3888 = vadd.f32 %v3727, %v3887
        %v3889 = vpop.f32.mrb[0].mxu0
        %3890 = vmatprep.mubr.bf16.mxu0 %v2772
        %3891 = vmatmul.mubr.bf16.gmra.mrb[0].mxu0 %v2707
        %v3892 = vpop.f32.mrb[0].mxu0
        %v3893 = vadd.f32 %v3732, %v3892
        %v3894 = vpop.f32.mrb[0].mxu0
        %v3895 = vpop.f32.mrb[0].mxu0
        %v3896 = vadd.f32 %v3735, %v3895
        %v3897 = vpop.f32.mrb[0].mxu0
        %3898 = vmatprep.mubr.bf16.mxu0 %v2813
        %3899 = vmatmul.mubr.bf16.gmra.mrb[0].mxu0 %v2809
        %v3900 = vpop.f32.mrb[0].mxu0
        %v3901 = vadd.f32 %v3740, %v3900
        %v3902 = vpop.f32.mrb[0].mxu0
        %v3903 = vpop.f32.mrb[0].mxu0
        %v3904 = vadd.f32 %v3743, %v3903
        %v3905 = vpop.f32.mrb[0].mxu0
        %3906 = vdwg.mxu0
        %3907 = vmatprep.subr.bf16.mxu0 0
        %3908 = vmatpush1.bf16.msra.mxu0 %v3328
        %3909 = vmatprep.subr.bf16.mxu0 0
        %3910 = vmatpush1.bf16.msra.mxu0 %v3329
        %3911 = vmatprep.subr.bf16.mxu0 0
        %3912 = vmatpush1.bf16.msra.mxu0 %v3330
        %3913 = vmatprep.subr.bf16.mxu0 0
        %3914 = vmatpush1.bf16.msra.mxu0 %v3331
        %3915 = vmatprep.subr.bf16.mxu0 0
        %3916 = vmatpush1.bf16.msra.mxu0 %v3332
        %3917 = vmatprep.subr.bf16.mxu0 0
        %3918 = vmatpush1.bf16.msra.mxu0 %v3333
        %3919 = vmatprep.subr.bf16.mxu0 0
        %3920 = vmatpush1.bf16.msra.mxu0 %v3334
        %3921 = vmatprep.subr.bf16.mxu0 0
        %3922 = vmatpush1.bf16.msra.mxu0 %v3335
        %3923 = vmatprep.subr.bf16.mxu0 0
        %3924 = vmatpush1.bf16.msra.mxu0 %v3336
        %3925 = vmatprep.subr.bf16.mxu0 0
        %3926 = vmatpush1.bf16.msra.mxu0 %v3337
        %3927 = vmatprep.subr.bf16.mxu0 0
        %3928 = vmatpush1.bf16.msra.mxu0 %v3338
        %3929 = vmatprep.subr.bf16.mxu0 0
        %3930 = vmatpush1.bf16.msra.mxu0 %v3339
        %3931 = vmatprep.subr.bf16.mxu0 0
        %3932 = vmatpush1.bf16.msra.mxu0 %v3340
        %3933 = vmatprep.subr.bf16.mxu0 0
        %3934 = vmatpush1.bf16.msra.mxu0 %v3341
        %3935 = vmatprep.subr.bf16.mxu0 0
        %3936 = vmatpush1.bf16.msra.mxu0 %v3342
        %3937 = vmatprep.subr.bf16.mxu0 0
        %3938 = vmatpush1.bf16.msra.mxu0 %v3343
        %3939 = vmatprep.mubr.bf16.mxu0 %v2551
        %3940 = vmatmul.mubr.bf16.gmra.mrb[0].mxu0 %v2437
        %v3941 = vpop.f32.mrb[0].mxu0
        %v3942 = vadd.f32 %v3781, %v3941
        %v3943 = vpop.f32.mrb[0].mxu0
        %v3944 = vpop.f32.mrb[0].mxu0
        %v3945 = vadd.f32 %v3784, %v3944
        %v3946 = vpop.f32.mrb[0].mxu0
        %3947 = vmatprep.mubr.bf16.mxu0 %v2563
        %3948 = vmatmul.mubr.bf16.gmra.mrb[0].mxu0 %v2438
        %v3949 = vpop.f32.mrb[0].mxu0
        %v3950 = vadd.f32 %v3789, %v3949
        %v3951 = vpop.f32.mrb[0].mxu0
        %v3952 = vpop.f32.mrb[0].mxu0
        %v3953 = vadd.f32 %v3792, %v3952
        %v3954 = vpop.f32.mrb[0].mxu0
        %3955 = vmatprep.mubr.bf16.mxu0 %v2575
        %3956 = vmatmul.mubr.bf16.gmra.mrb[0].mxu0 %v2439
        %v3957 = vpop.f32.mrb[0].mxu0
        %v3958 = vadd.f32 %v3797, %v3957
        %v3959 = vpop.f32.mrb[0].mxu0
        %v3960 = vpop.f32.mrb[0].mxu0
        %v3961 = vadd.f32 %v3800, %v3960
        %v3962 = vpop.f32.mrb[0].mxu0
        %3963 = vmatprep.mubr.bf16.mxu0 %v2587
        %3964 = vmatmul.mubr.bf16.gmra.mrb[0].mxu0 %v2440
        %v3965 = vpop.f32.mrb[0].mxu0
        %v3966 = vadd.f32 %v3805, %v3965
        %v3967 = vpop.f32.mrb[0].mxu0
        %v3968 = vpop.f32.mrb[0].mxu0
        %v3969 = vadd.f32 %v3808, %v3968
        %v3970 = vpop.f32.mrb[0].mxu0
        %3971 = vmatprep.mubr.bf16.mxu0 %v2599
        %3972 = vmatmul.mubr.bf16.gmra.mrb[0].mxu0 %v2441
        %v3973 = vpop.f32.mrb[0].mxu0
        %v3974 = vadd.f32 %v3813, %v3973
        %v3975 = vpop.f32.mrb[0].mxu0
        %v3976 = vpop.f32.mrb[0].mxu0
        %v3977 = vadd.f32 %v3816, %v3976
        %v3978 = vpop.f32.mrb[0].mxu0
        %3979 = vmatprep.mubr.bf16.mxu0 %v2611
        %3980 = vmatmul.mubr.bf16.gmra.mrb[0].mxu0 %v2442
        %v3981 = vpop.f32.mrb[0].mxu0
        %v3982 = vadd.f32 %v3821, %v3981
        %v3983 = vpop.f32.mrb[0].mxu0
        %v3984 = vpop.f32.mrb[0].mxu0
        %v3985 = vadd.f32 %v3824, %v3984
        %v3986 = vpop.f32.mrb[0].mxu0
        %3987 = vmatprep.mubr.bf16.mxu0 %v2623
        %3988 = vmatmul.mubr.bf16.gmra.mrb[0].mxu0 %v2443
        %v3989 = vpop.f32.mrb[0].mxu0
        %v3990 = vadd.f32 %v3829, %v3989
        %v3991 = vpop.f32.mrb[0].mxu0
        %v3992 = vpop.f32.mrb[0].mxu0
        %v3993 = vadd.f32 %v3832, %v3992
        %v3994 = vpop.f32.mrb[0].mxu0
        %3995 = vmatprep.mubr.bf16.mxu0 %v2635
        %3996 = vmatmul.mubr.bf16.gmra.mrb[0].mxu0 %v2444
        %v3997 = vpop.f32.mrb[0].mxu0
        %v3998 = vadd.f32 %v3837, %v3997
        %v3999 = vpop.f32.mrb[0].mxu0
        %v4000 = vpop.f32.mrb[0].mxu0
        %v4001 = vadd.f32 %v3840, %v4000
        %v4002 = vpop.f32.mrb[0].mxu0
        %4003 = vmatprep.mubr.bf16.mxu0 %v2647
        %4004 = vmatmul.mubr.bf16.gmra.mrb[0].mxu0 %v2445
        %v4005 = vpop.f32.mrb[0].mxu0
        %v4006 = vadd.f32 %v3845, %v4005
        %v4007 = vpop.f32.mrb[0].mxu0
        %v4008 = vpop.f32.mrb[0].mxu0
        %v4009 = vadd.f32 %v3848, %v4008
        %v4010 = vpop.f32.mrb[0].mxu0
        %4011 = vmatprep.mubr.bf16.mxu0 %v2659
        %4012 = vmatmul.mubr.bf16.gmra.mrb[0].mxu0 %v2446
        %v4013 = vpop.f32.mrb[0].mxu0
        %v4014 = vadd.f32 %v3853, %v4013
        %v4015 = vpop.f32.mrb[0].mxu0
        %v4016 = vpop.f32.mrb[0].mxu0
        %v4017 = vadd.f32 %v3856, %v4016
        %v4018 = vpop.f32.mrb[0].mxu0
        %4019 = vmatprep.mubr.bf16.mxu0 %v2671
        %4020 = vmatmul.mubr.bf16.gmra.mrb[0].mxu0 %v2447
        %v4021 = vpop.f32.mrb[0].mxu0
        %v4022 = vadd.f32 %v3861, %v4021
        %v4023 = vpop.f32.mrb[0].mxu0
        %v4024 = vpop.f32.mrb[0].mxu0
        %v4025 = vadd.f32 %v3864, %v4024
        %v4026 = vpop.f32.mrb[0].mxu0
        %4027 = vmatprep.mubr.bf16.mxu0 %v2683
        %4028 = vmatmul.mubr.bf16.gmra.mrb[0].mxu0 %v2448
        %v4029 = vpop.f32.mrb[0].mxu0
        %v4030 = vadd.f32 %v3869, %v4029
        %v4031 = vpop.f32.mrb[0].mxu0
        %v4032 = vpop.f32.mrb[0].mxu0
        %v4033 = vadd.f32 %v3872, %v4032
        %v4034 = vpop.f32.mrb[0].mxu0
        %4035 = vmatprep.mubr.bf16.mxu0 %v2695
        %4036 = vmatmul.mubr.bf16.gmra.mrb[0].mxu0 %v2449
        %v4037 = vpop.f32.mrb[0].mxu0
        %v4038 = vadd.f32 %v3877, %v4037
        %v4039 = vpop.f32.mrb[0].mxu0
        %v4040 = vpop.f32.mrb[0].mxu0
        %v4041 = vadd.f32 %v3880, %v4040
        %v4042 = vpop.f32.mrb[0].mxu0
        %4043 = vmatprep.mubr.bf16.mxu0 %v2707
        %4044 = vmatmul.mubr.bf16.gmra.mrb[0].mxu0 %v2450
        %v4045 = vpop.f32.mrb[0].mxu0
        %v4046 = vadd.f32 %v3885, %v4045
        %v4047 = vpop.f32.mrb[0].mxu0
        %v4048 = vpop.f32.mrb[0].mxu0
        %v4049 = vadd.f32 %v3888, %v4048
        %v4050 = vpop.f32.mrb[0].mxu0
        %4051 = vmatprep.mubr.bf16.mxu0 %v2809
        %4052 = vmatmul.mubr.bf16.gmra.mrb[0].mxu0 %v2793
        %v4053 = vpop.f32.mrb[0].mxu0
        %v4054 = vadd.f32 %v3893, %v4053
        %v4055 = vpop.f32.mrb[0].mxu0
        %v4056 = vpop.f32.mrb[0].mxu0
        %v4057 = vadd.f32 %v3896, %v4056
        %v4058 = vpop.f32.mrb[0].mxu0
        %4059 = vmatprep.mubr.bf16.mxu0 %v2835
        %4060 = vmatmul.mubr.bf16.gmra.mrb[0].mxu0 %v2819
        %v4061 = vpop.f32.mrb[0].mxu0
        %v4062 = vadd.f32 %v3901, %v4061
        %v4063 = vpop.f32.mrb[0].mxu0
        %v4064 = vpop.f32.mrb[0].mxu0
        %v4065 = vadd.f32 %v3904, %v4064
        %v4066 = vpop.f32.mrb[0].mxu0
        %4067 = vdwg.mxu0
        %4068 = vmatprep.subr.bf16.mxu0 0
        %4069 = vmatpush1.bf16.msra.mxu0 %v3344
        %4070 = vmatprep.subr.bf16.mxu0 0
        %4071 = vmatpush1.bf16.msra.mxu0 %v3345
        %4072 = vmatprep.subr.bf16.mxu0 0
        %4073 = vmatpush1.bf16.msra.mxu0 %v3346
        %4074 = vmatprep.subr.bf16.mxu0 0
        %4075 = vmatpush1.bf16.msra.mxu0 %v3347
        %4076 = vmatprep.subr.bf16.mxu0 0
        %4077 = vmatpush1.bf16.msra.mxu0 %v3348
        %4078 = vmatprep.subr.bf16.mxu0 0
        %4079 = vmatpush1.bf16.msra.mxu0 %v3349
        %4080 = vmatprep.subr.bf16.mxu0 0
        %4081 = vmatpush1.bf16.msra.mxu0 %v3350
        %4082 = vmatprep.subr.bf16.mxu0 0
        %4083 = vmatpush1.bf16.msra.mxu0 %v3351
        %4084 = vmatprep.subr.bf16.mxu0 0
        %4085 = vmatpush1.bf16.msra.mxu0 0
        %4086 = vmatprep.subr.bf16.mxu0 0
        %4087 = vmatpush1.bf16.msra.mxu0 0
        %4088 = vmatprep.subr.bf16.mxu0 0
        %4089 = vmatpush1.bf16.msra.mxu0 0
        %4090 = vmatprep.subr.bf16.mxu0 0
        %4091 = vmatpush1.bf16.msra.mxu0 0
        %4092 = vmatprep.subr.bf16.mxu0 0
        %4093 = vmatpush1.bf16.msra.mxu0 0
        %4094 = vmatprep.subr.bf16.mxu0 0
        %4095 = vmatpush1.bf16.msra.mxu0 0
        %4096 = vmatprep.subr.bf16.mxu0 0
        %4097 = vmatpush1.bf16.msra.mxu0 0
        %4098 = vmatprep.subr.bf16.mxu0 0
        %4099 = vmatpush1.bf16.msra.mxu0 0
        %4100 = vmatprep.mubr.bf16.mxu0 0
        %4101 = vmatmul.mubr.bf16.gmra.mrb[0].mxu0 %v2733
        %v4102 = vpop.f32.mrb[0].mxu0
        %v4103 = vadd.f32 %v3942, %v4102
        %v4104 = vpop.f32.mrb[0].mxu0
        %v4105 = vpop.f32.mrb[0].mxu0
        %v4106 = vadd.f32 %v3945, %v4105
        %v4107 = vpop.f32.mrb[0].mxu0
        %4108 = vmatprep.mubr.bf16.mxu0 0
        %4109 = vmatmul.mubr.bf16.gmra.mrb[0].mxu0 %v2736
        %v4110 = vpop.f32.mrb[0].mxu0
        %v4111 = vadd.f32 %v3950, %v4110
        %v4112 = vpop.f32.mrb[0].mxu0
        %v4113 = vpop.f32.mrb[0].mxu0
        %v4114 = vadd.f32 %v3953, %v4113
        %v4115 = vpop.f32.mrb[0].mxu0
        %4116 = vmatprep.mubr.bf16.mxu0 0
        %4117 = vmatmul.mubr.bf16.gmra.mrb[0].mxu0 %v2739
        %v4118 = vpop.f32.mrb[0].mxu0
        %v4119 = vadd.f32 %v3958, %v4118
        %v4120 = vpop.f32.mrb[0].mxu0
        %v4121 = vpop.f32.mrb[0].mxu0
        %v4122 = vadd.f32 %v3961, %v4121
        %v4123 = vpop.f32.mrb[0].mxu0
        %4124 = vmatprep.mubr.bf16.mxu0 0
        %4125 = vmatmul.mubr.bf16.gmra.mrb[0].mxu0 %v2742
        %v4126 = vpop.f32.mrb[0].mxu0
        %v4127 = vadd.f32 %v3966, %v4126
        %v4128 = vpop.f32.mrb[0].mxu0
        %v4129 = vpop.f32.mrb[0].mxu0
        %v4130 = vadd.f32 %v3969, %v4129
        %v4131 = vpop.f32.mrb[0].mxu0
        %4132 = vmatprep.mubr.bf16.mxu0 0
        %4133 = vmatmul.mubr.bf16.gmra.mrb[0].mxu0 %v2745
        %v4134 = vpop.f32.mrb[0].mxu0
        %v4135 = vadd.f32 %v3974, %v4134
        %v4136 = vpop.f32.mrb[0].mxu0
        %v4137 = vpop.f32.mrb[0].mxu0
        %v4138 = vadd.f32 %v3977, %v4137
        %v4139 = vpop.f32.mrb[0].mxu0
        %4140 = vmatprep.mubr.bf16.mxu0 0
        %4141 = vmatmul.mubr.bf16.gmra.mrb[0].mxu0 %v2748
        %v4142 = vpop.f32.mrb[0].mxu0
        %v4143 = vadd.f32 %v3982, %v4142
        %v4144 = vpop.f32.mrb[0].mxu0
        %v4145 = vpop.f32.mrb[0].mxu0
        %v4146 = vadd.f32 %v3985, %v4145
        %v4147 = vpop.f32.mrb[0].mxu0
        %4148 = vmatprep.mubr.bf16.mxu0 0
        %4149 = vmatmul.mubr.bf16.gmra.mrb[0].mxu0 %v2751
        %v4150 = vpop.f32.mrb[0].mxu0
        %v4151 = vadd.f32 %v3990, %v4150
        %v4152 = vpop.f32.mrb[0].mxu0
        %v4153 = vpop.f32.mrb[0].mxu0
        %v4154 = vadd.f32 %v3993, %v4153
        %v4155 = vpop.f32.mrb[0].mxu0
        %4156 = vmatprep.mubr.bf16.mxu0 0
        %4157 = vmatmul.mubr.bf16.gmra.mrb[0].mxu0 %v2754
        %v4158 = vpop.f32.mrb[0].mxu0
        %v4159 = vadd.f32 %v3998, %v4158
        %v4160 = vpop.f32.mrb[0].mxu0
        %v4161 = vpop.f32.mrb[0].mxu0
        %v4162 = vadd.f32 %v4001, %v4161
        %v4163 = vpop.f32.mrb[0].mxu0
        %4164 = vmatprep.mubr.bf16.mxu0 0
        %4165 = vmatmul.mubr.bf16.gmra.mrb[0].mxu0 %v2757
        %v4166 = vpop.f32.mrb[0].mxu0
        %v4167 = vadd.f32 %v4006, %v4166
        %v4168 = vpop.f32.mrb[0].mxu0
        %v4169 = vpop.f32.mrb[0].mxu0
        %v4170 = vadd.f32 %v4009, %v4169
        %v4171 = vpop.f32.mrb[0].mxu0
        %4172 = vmatprep.mubr.bf16.mxu0 0
        %4173 = vmatmul.mubr.bf16.gmra.mrb[0].mxu0 %v2760
        %v4174 = vpop.f32.mrb[0].mxu0
        %v4175 = vadd.f32 %v4014, %v4174
        %v4176 = vpop.f32.mrb[0].mxu0
        %v4177 = vpop.f32.mrb[0].mxu0
        %v4178 = vadd.f32 %v4017, %v4177
        %v4179 = vpop.f32.mrb[0].mxu0
        %4180 = vmatprep.mubr.bf16.mxu0 0
        %4181 = vmatmul.mubr.bf16.gmra.mrb[0].mxu0 %v2763
        %v4182 = vpop.f32.mrb[0].mxu0
        %v4183 = vadd.f32 %v4022, %v4182
        %v4184 = vpop.f32.mrb[0].mxu0
        %v4185 = vpop.f32.mrb[0].mxu0
        %v4186 = vadd.f32 %v4025, %v4185
        %v4187 = vpop.f32.mrb[0].mxu0
        %4188 = vmatprep.mubr.bf16.mxu0 0
        %4189 = vmatmul.mubr.bf16.gmra.mrb[0].mxu0 %v2766
        %v4190 = vpop.f32.mrb[0].mxu0
        %v4191 = vadd.f32 %v4030, %v4190
        %v4192 = vpop.f32.mrb[0].mxu0
        %v4193 = vpop.f32.mrb[0].mxu0
        %v4194 = vadd.f32 %v4033, %v4193
        %v4195 = vpop.f32.mrb[0].mxu0
        %4196 = vmatprep.mubr.bf16.mxu0 0
        %4197 = vmatmul.mubr.bf16.gmra.mrb[0].mxu0 %v2769
        %v4198 = vpop.f32.mrb[0].mxu0
        %v4199 = vadd.f32 %v4038, %v4198
        %v4200 = vpop.f32.mrb[0].mxu0
        %v4201 = vpop.f32.mrb[0].mxu0
        %v4202 = vadd.f32 %v4041, %v4201
        %v4203 = vpop.f32.mrb[0].mxu0
        %4204 = vmatprep.mubr.bf16.mxu0 0
        %4205 = vmatmul.mubr.bf16.gmra.mrb[0].mxu0 %v2772
        %v4206 = vpop.f32.mrb[0].mxu0
        %v4207 = vadd.f32 %v4046, %v4206
        %v4208 = vpop.f32.mrb[0].mxu0
        %v4209 = vpop.f32.mrb[0].mxu0
        %v4210 = vadd.f32 %v4049, %v4209
        %v4211 = vpop.f32.mrb[0].mxu0
        %4212 = vmatprep.mubr.bf16.mxu0 0
        %4213 = vmatmul.mubr.bf16.gmra.mrb[0].mxu0 %v2813
        %v4214 = vpop.f32.mrb[0].mxu0
        %v4215 = vadd.f32 %v4054, %v4214
        %v4216 = vpop.f32.mrb[0].mxu0
        %v4217 = vpop.f32.mrb[0].mxu0
        %v4218 = vadd.f32 %v4057, %v4217
        %v4219 = vpop.f32.mrb[0].mxu0
        %4220 = vmatprep.mubr.bf16.mxu0 0
        %4221 = vmatmul.mubr.bf16.gmra.mrb[0].mxu0 %v2839
        %v4222 = vpop.f32.mrb[0].mxu0
        %v4223 = vadd.f32 %v4062, %v4222
        %v4224 = vpop.f32.mrb[0].mxu0
        %v4225 = vpop.f32.mrb[0].mxu0
        %v4226 = vadd.f32 %v4065, %v4225
        %v4227 = vpop.f32.mrb[0].mxu0
        %4228 = vdwg.mxu0
        %v4229 = vmax.f32 %v4103, 0.0
        %v4230 = vmax.f32 %v4106, 0.0
        %v4231 = vmax.f32 %v4111, 0.0
        %v4232 = vmax.f32 %v4114, 0.0
        %v4233 = vmax.f32 %v4119, 0.0
        %v4234 = vmax.f32 %v4122, 0.0
        %v4235 = vmax.f32 %v4127, 0.0
        %v4236 = vmax.f32 %v4130, 0.0
        %v4237 = vmax.f32 %v4135, 0.0
        %v4238 = vmax.f32 %v4138, 0.0
        %v4239 = vmax.f32 %v4143, 0.0
        %v4240 = vmax.f32 %v4146, 0.0
        %v4241 = vmax.f32 %v4151, 0.0
        %v4242 = vmax.f32 %v4154, 0.0
        %v4243 = vmax.f32 %v4159, 0.0
        %v4244 = vmax.f32 %v4162, 0.0
        %v4245 = vmax.f32 %v4167, 0.0
        %v4246 = vmax.f32 %v4170, 0.0
        %v4247 = vmax.f32 %v4175, 0.0
        %v4248 = vmax.f32 %v4178, 0.0
        %v4249 = vmax.f32 %v4183, 0.0
        %v4250 = vmax.f32 %v4186, 0.0
        %v4251 = vmax.f32 %v4191, 0.0
        %v4252 = vmax.f32 %v4194, 0.0
        %v4253 = vmax.f32 %v4199, 0.0
        %v4254 = vmax.f32 %v4202, 0.0
        %v4255 = vmax.f32 %v4207, 0.0
        %v4256 = vmax.f32 %v4210, 0.0
        %v4257 = vmax.f32 %v4215, 0.0
        %v4258 = vmax.f32 %v4218, 0.0
        %v4259 = vmax.f32 %v4223, 0.0
        %v4260 = vmax.f32 %v4226, 0.0
        %v4261 = vpack.c.bf16 %v4230, %v4229
        %v4262 = vpack.c.bf16 %v4232, %v4231
        %v4263 = vpack.c.bf16 %v4234, %v4233
        %v4264 = vpack.c.bf16 %v4236, %v4235
        %v4265 = vpack.c.bf16 %v4238, %v4237
        %v4266 = vpack.c.bf16 %v4240, %v4239
        %v4267 = vpack.c.bf16 %v4242, %v4241
        %v4268 = vpack.c.bf16 %v4244, %v4243
        %v4269 = vpack.c.bf16 %v4246, %v4245
        %v4270 = vpack.c.bf16 %v4248, %v4247
        %v4271 = vpack.c.bf16 %v4250, %v4249
        %v4272 = vpack.c.bf16 %v4252, %v4251
        %v4273 = vpack.c.bf16 %v4254, %v4253
        %v4274 = vpack.c.bf16 %v4256, %v4255
        %v4275 = vpack.c.bf16 %v4258, %v4257
        %v4276 = vpack.c.bf16 %v4260, %v4259
        %v4277 = vld [vmem:[%s6] sm:$0xff]
        %v4278 = vld [vmem:[%s6 + $0x8] sm:$0xff]
        %v4279 = vld [vmem:[%s6 + $0x10] sm:$0xff]
        %v4280 = vld [vmem:[%s6 + $0x18] sm:$0xff]
        %v4281 = vld [vmem:[%s6 + $0x20] sm:$0xff]
        %v4282 = vld [vmem:[%s6 + $0x28] sm:$0xff]
        %v4283 = vld [vmem:[%s6 + $0x30] sm:$0xff]
        %v4284 = vld [vmem:[%s6 + $0x38] sm:$0xff]
        %v4285 = vld [vmem:[%s6 + $0x40] sm:$0xff]
        %v4286 = vld [vmem:[%s6 + $0x48] sm:$0xff]
        %v4287 = vld [vmem:[%s6 + $0x50] sm:$0xff]
        %v4288 = vld [vmem:[%s6 + $0x58] sm:$0xff]
        %v4289 = vld [vmem:[%s6 + $0x60] sm:$0xff]
        %v4290 = vld [vmem:[%s6 + $0x68] sm:$0xff]
        %v4291 = vld [vmem:[%s6 + $0x70] sm:$0xff]
        %v4292 = vld [vmem:[%s6 + $0x78] sm:$0xff]
        %v4293 = vld [vmem:[%s6 + $0x80] sm:$0xff]
        %v4294 = vld [vmem:[%s6 + $0x88] sm:$0xff]
        %v4295 = vld [vmem:[%s6 + $0x90] sm:$0xff]
        %v4296 = vld [vmem:[%s6 + $0x98] sm:$0xff]
        %v4297 = vld [vmem:[%s6 + $0xa0] sm:$0xff]
        %v4298 = vld [vmem:[%s6 + $0xa8] sm:$0xff]
        %v4299 = vld [vmem:[%s6 + $0xb0] sm:$0xff]
        %v4300 = vld [vmem:[%s6 + $0xb8] sm:$0xff]
        %v4301 = vld [vmem:[%s6 + $0xc0] sm:$0xff]
        %v4302 = vld [vmem:[%s6 + $0xc8] sm:$0xff]
        %v4303 = vld [vmem:[%s6 + $0xd0] sm:$0xff]
        %v4304 = vld [vmem:[%s6 + $0xd8] sm:$0xff]
        %v4305 = vld [vmem:[%s6 + $0xe0] sm:$0xff]
        %v4306 = vld [vmem:[%s6 + $0xe8] sm:$0xff]
        %v4307 = vld [vmem:[%s6 + $0xf0] sm:$0xff]
        %v4308 = vld [vmem:[%s6 + $0xf8] sm:$0xff]
        %v4309 = vld [vmem:[%s7] sm:$0xf]
        %v4311 = vlaneseq
        %v4312 = vshrl.u32 %v4311, 7
        %v4313 = vsub.s32 0, %v4312
        %v4314 = vrot.slane %v4309, %v4313
        %v4315 = vlaneseq
        %v4316 = vshrl.u32 %v4315, 7
        %v4317 = vsub.s32 1, %v4316
        %v4318 = vrot.slane %v4309, %v4317
        %v4319 = vlaneseq
        %v4320 = vshrl.u32 %v4319, 7
        %v4321 = vsub.s32 2, %v4320
        %v4322 = vrot.slane %v4309, %v4321
        %v4323 = vlaneseq
        %v4324 = vshrl.u32 %v4323, 7
        %v4325 = vsub.s32 3, %v4324
        %v4326 = vrot.slane %v4309, %v4325
        %v4363 = vunpack.c.l.b16 %v4277
        %v4364 = vunpack.c.h.b16 %v4277
        %v4365 = vunpack.c.l.b16 %v4278
        %v4366 = vunpack.c.h.b16 %v4278
        %v4367 = vunpack.c.l.b16 %v4279
        %v4368 = vunpack.c.h.b16 %v4279
        %v4369 = vunpack.c.l.b16 %v4280
        %v4370 = vunpack.c.h.b16 %v4280
        %v4371 = vunpack.c.l.b16 %v4281
        %v4372 = vunpack.c.h.b16 %v4281
        %v4373 = vunpack.c.l.b16 %v4282
        %v4374 = vunpack.c.h.b16 %v4282
        %v4375 = vunpack.c.l.b16 %v4283
        %v4376 = vunpack.c.h.b16 %v4283
        %v4377 = vunpack.c.l.b16 %v4284
        %v4378 = vunpack.c.h.b16 %v4284
        %v4379 = vunpack.c.l.b16 %v4285
        %v4380 = vunpack.c.h.b16 %v4285
        %v4381 = vunpack.c.l.b16 %v4286
        %v4382 = vunpack.c.h.b16 %v4286
        %v4383 = vunpack.c.l.b16 %v4287
        %v4384 = vunpack.c.h.b16 %v4287
        %v4385 = vunpack.c.l.b16 %v4288
        %v4386 = vunpack.c.h.b16 %v4288
        %v4387 = vunpack.c.l.b16 %v4289
        %v4388 = vunpack.c.h.b16 %v4289
        %v4389 = vunpack.c.l.b16 %v4290
        %v4390 = vunpack.c.h.b16 %v4290
        %v4391 = vunpack.c.l.b16 %v4291
        %v4392 = vunpack.c.h.b16 %v4291
        %v4393 = vunpack.c.l.b16 %v4292
        %v4394 = vunpack.c.h.b16 %v4292
        %v4395 = vunpack.c.l.b16 %v4293
        %v4396 = vunpack.c.h.b16 %v4293
        %v4397 = vunpack.c.l.b16 %v4294
        %v4398 = vunpack.c.h.b16 %v4294
        %v4399 = vunpack.c.l.b16 %v4295
        %v4400 = vunpack.c.h.b16 %v4295
        %v4401 = vunpack.c.l.b16 %v4296
        %v4402 = vunpack.c.h.b16 %v4296
        %v4403 = vunpack.c.l.b16 %v4297
        %v4404 = vunpack.c.h.b16 %v4297
        %v4405 = vunpack.c.l.b16 %v4298
        %v4406 = vunpack.c.h.b16 %v4298
        %v4407 = vunpack.c.l.b16 %v4299
        %v4408 = vunpack.c.h.b16 %v4299
        %v4409 = vunpack.c.l.b16 %v4300
        %v4410 = vunpack.c.h.b16 %v4300
        %v4411 = vunpack.c.l.b16 %v4301
        %v4412 = vunpack.c.h.b16 %v4301
        %v4413 = vunpack.c.l.b16 %v4302
        %v4414 = vunpack.c.h.b16 %v4302
        %v4415 = vunpack.c.l.b16 %v4303
        %v4416 = vunpack.c.h.b16 %v4303
        %v4417 = vunpack.c.l.b16 %v4304
        %v4418 = vunpack.c.h.b16 %v4304
        %v4419 = vunpack.c.l.b16 %v4305
        %v4420 = vunpack.c.h.b16 %v4305
        %v4421 = vunpack.c.l.b16 %v4306
        %v4422 = vunpack.c.h.b16 %v4306
        %v4423 = vunpack.c.l.b16 %v4307
        %v4424 = vunpack.c.h.b16 %v4307
        %v4425 = vunpack.c.l.b16 %v4308
        %v4426 = vunpack.c.h.b16 %v4308
        %v4427 = vpack.c.b16 %v4367, %v4363
        %v4428 = vpack.c.b16 %v4368, %v4364
        %v4429 = vpack.c.b16 %v4369, %v4365
        %v4430 = vpack.c.b16 %v4370, %v4366
        %v4431 = vpack.c.b16 %v4375, %v4371
        %v4432 = vpack.c.b16 %v4376, %v4372
        %v4433 = vpack.c.b16 %v4377, %v4373
        %v4434 = vpack.c.b16 %v4378, %v4374
        %v4435 = vpack.c.b16 %v4383, %v4379
        %v4436 = vpack.c.b16 %v4384, %v4380
        %v4437 = vpack.c.b16 %v4385, %v4381
        %v4438 = vpack.c.b16 %v4386, %v4382
        %v4439 = vpack.c.b16 %v4391, %v4387
        %v4440 = vpack.c.b16 %v4392, %v4388
        %v4441 = vpack.c.b16 %v4393, %v4389
        %v4442 = vpack.c.b16 %v4394, %v4390
        %v4443 = vpack.c.b16 %v4399, %v4395
        %v4444 = vpack.c.b16 %v4400, %v4396
        %v4445 = vpack.c.b16 %v4401, %v4397
        %v4446 = vpack.c.b16 %v4402, %v4398
        %v4447 = vpack.c.b16 %v4407, %v4403
        %v4448 = vpack.c.b16 %v4408, %v4404
        %v4449 = vpack.c.b16 %v4409, %v4405
        %v4450 = vpack.c.b16 %v4410, %v4406
        %v4451 = vpack.c.b16 %v4415, %v4411
        %v4452 = vpack.c.b16 %v4416, %v4412
        %v4453 = vpack.c.b16 %v4417, %v4413
        %v4454 = vpack.c.b16 %v4418, %v4414
        %v4455 = vpack.c.b16 %v4423, %v4419
        %v4456 = vpack.c.b16 %v4424, %v4420
        %v4457 = vpack.c.b16 %v4425, %v4421
        %v4458 = vpack.c.b16 %v4426, %v4422
        %4491 = vmatprep.subr.bf16.mxu0 %v4428
        %4492 = vmatpush1.bf16.msra.mxu0 %v4427
        %4493 = vmatprep.subr.bf16.mxu0 %v4432
        %4494 = vmatpush1.bf16.msra.mxu0 %v4431
        %4495 = vmatprep.subr.bf16.mxu0 %v4436
        %4496 = vmatpush1.bf16.msra.mxu0 %v4435
        %4497 = vmatprep.subr.bf16.mxu0 %v4440
        %4498 = vmatpush1.bf16.msra.mxu0 %v4439
        %4499 = vmatprep.subr.bf16.mxu0 %v4444
        %4500 = vmatpush1.bf16.msra.mxu0 %v4443
        %4501 = vmatprep.subr.bf16.mxu0 %v4448
        %4502 = vmatpush1.bf16.msra.mxu0 %v4447
        %4503 = vmatprep.subr.bf16.mxu0 %v4452
        %4504 = vmatpush1.bf16.msra.mxu0 %v4451
        %4505 = vmatprep.subr.bf16.mxu0 %v4456
        %4506 = vmatpush1.bf16.msra.mxu0 %v4455
        %4507 = vmatprep.subr.bf16.mxu0 0
        %4508 = vmatpush1.bf16.msra.mxu0 0
        %4509 = vmatprep.subr.bf16.mxu0 0
        %4510 = vmatpush1.bf16.msra.mxu0 0
        %4511 = vmatprep.subr.bf16.mxu0 0
        %4512 = vmatpush1.bf16.msra.mxu0 0
        %4513 = vmatprep.subr.bf16.mxu0 0
        %4514 = vmatpush1.bf16.msra.mxu0 0
        %4515 = vmatprep.subr.bf16.mxu0 0
        %4516 = vmatpush1.bf16.msra.mxu0 0
        %4517 = vmatprep.subr.bf16.mxu0 0
        %4518 = vmatpush1.bf16.msra.mxu0 0
        %4519 = vmatprep.subr.bf16.mxu0 0
        %4520 = vmatpush1.bf16.msra.mxu0 0
        %4521 = vmatprep.subr.bf16.mxu0 0
        %4522 = vmatpush1.bf16.msra.mxu0 0
        %4523 = vmatprep.mubr.bf16.mxu0 0
        %4524 = vmatmul.mubr.bf16.gmra.mrb[0].mxu0 %v4261
        %v4525 = vpop.f32.mrb[0].mxu0
        %v4526 = vadd.f32 %v4314, %v4525
        %v4527 = vpop.f32.mrb[0].mxu0
        %v4528 = vadd.f32 %v4318, %v4527
        %v4529 = vpop.f32.mrb[0].mxu0
        %v4530 = vadd.f32 %v4314, %v4529
        %v4531 = vpop.f32.mrb[0].mxu0
        %v4532 = vadd.f32 %v4318, %v4531
        %4533 = vmatprep.mubr.bf16.mxu0 0
        %4534 = vmatmul.mubr.bf16.gmra.mrb[0].mxu0 %v4262
        %v4535 = vpop.f32.mrb[0].mxu0
        %v4536 = vadd.f32 %v4314, %v4535
        %v4537 = vpop.f32.mrb[0].mxu0
        %v4538 = vadd.f32 %v4318, %v4537
        %v4539 = vpop.f32.mrb[0].mxu0
        %v4540 = vadd.f32 %v4314, %v4539
        %v4541 = vpop.f32.mrb[0].mxu0
        %v4542 = vadd.f32 %v4318, %v4541
        %4543 = vmatprep.mubr.bf16.mxu0 0
        %4544 = vmatmul.mubr.bf16.gmra.mrb[0].mxu0 %v4263
        %v4545 = vpop.f32.mrb[0].mxu0
        %v4546 = vadd.f32 %v4314, %v4545
        %v4547 = vpop.f32.mrb[0].mxu0
        %v4548 = vadd.f32 %v4318, %v4547
        %v4549 = vpop.f32.mrb[0].mxu0
        %v4550 = vadd.f32 %v4314, %v4549
        %v4551 = vpop.f32.mrb[0].mxu0
        %v4552 = vadd.f32 %v4318, %v4551
        %4553 = vmatprep.mubr.bf16.mxu0 0
        %4554 = vmatmul.mubr.bf16.gmra.mrb[0].mxu0 %v4264
        %v4555 = vpop.f32.mrb[0].mxu0
        %v4556 = vadd.f32 %v4314, %v4555
        %v4557 = vpop.f32.mrb[0].mxu0
        %v4558 = vadd.f32 %v4318, %v4557
        %v4559 = vpop.f32.mrb[0].mxu0
        %v4560 = vadd.f32 %v4314, %v4559
        %v4561 = vpop.f32.mrb[0].mxu0
        %v4562 = vadd.f32 %v4318, %v4561
        %4563 = vmatprep.mubr.bf16.mxu0 0
        %4564 = vmatmul.mubr.bf16.gmra.mrb[0].mxu0 %v4265
        %v4565 = vpop.f32.mrb[0].mxu0
        %v4566 = vadd.f32 %v4314, %v4565
        %v4567 = vpop.f32.mrb[0].mxu0
        %v4568 = vadd.f32 %v4318, %v4567
        %v4569 = vpop.f32.mrb[0].mxu0
        %v4570 = vadd.f32 %v4314, %v4569
        %v4571 = vpop.f32.mrb[0].mxu0
        %v4572 = vadd.f32 %v4318, %v4571
        %4573 = vmatprep.mubr.bf16.mxu0 0
        %4574 = vmatmul.mubr.bf16.gmra.mrb[0].mxu0 %v4266
        %v4575 = vpop.f32.mrb[0].mxu0
        %v4576 = vadd.f32 %v4314, %v4575
        %v4577 = vpop.f32.mrb[0].mxu0
        %v4578 = vadd.f32 %v4318, %v4577
        %v4579 = vpop.f32.mrb[0].mxu0
        %v4580 = vadd.f32 %v4314, %v4579
        %v4581 = vpop.f32.mrb[0].mxu0
        %v4582 = vadd.f32 %v4318, %v4581
        %4583 = vmatprep.mubr.bf16.mxu0 0
        %4584 = vmatmul.mubr.bf16.gmra.mrb[0].mxu0 %v4267
        %v4585 = vpop.f32.mrb[0].mxu0
        %v4586 = vadd.f32 %v4314, %v4585
        %v4587 = vpop.f32.mrb[0].mxu0
        %v4588 = vadd.f32 %v4318, %v4587
        %v4589 = vpop.f32.mrb[0].mxu0
        %v4590 = vadd.f32 %v4314, %v4589
        %v4591 = vpop.f32.mrb[0].mxu0
        %v4592 = vadd.f32 %v4318, %v4591
        %4593 = vmatprep.mubr.bf16.mxu0 0
        %4594 = vmatmul.mubr.bf16.gmra.mrb[0].mxu0 %v4268
        %v4595 = vpop.f32.mrb[0].mxu0
        %v4596 = vadd.f32 %v4314, %v4595
        %v4597 = vpop.f32.mrb[0].mxu0
        %v4598 = vadd.f32 %v4318, %v4597
        %v4599 = vpop.f32.mrb[0].mxu0
        %v4600 = vadd.f32 %v4314, %v4599
        %v4601 = vpop.f32.mrb[0].mxu0
        %v4602 = vadd.f32 %v4318, %v4601
        %4603 = vmatprep.mubr.bf16.mxu0 0
        %4604 = vmatmul.mubr.bf16.gmra.mrb[0].mxu0 %v4269
        %v4605 = vpop.f32.mrb[0].mxu0
        %v4606 = vadd.f32 %v4314, %v4605
        %v4607 = vpop.f32.mrb[0].mxu0
        %v4608 = vadd.f32 %v4318, %v4607
        %v4609 = vpop.f32.mrb[0].mxu0
        %v4610 = vadd.f32 %v4314, %v4609
        %v4611 = vpop.f32.mrb[0].mxu0
        %v4612 = vadd.f32 %v4318, %v4611
        %4613 = vmatprep.mubr.bf16.mxu0 0
        %4614 = vmatmul.mubr.bf16.gmra.mrb[0].mxu0 %v4270
        %v4615 = vpop.f32.mrb[0].mxu0
        %v4616 = vadd.f32 %v4314, %v4615
        %v4617 = vpop.f32.mrb[0].mxu0
        %v4618 = vadd.f32 %v4318, %v4617
        %v4619 = vpop.f32.mrb[0].mxu0
        %v4620 = vadd.f32 %v4314, %v4619
        %v4621 = vpop.f32.mrb[0].mxu0
        %v4622 = vadd.f32 %v4318, %v4621
        %4623 = vmatprep.mubr.bf16.mxu0 0
        %4624 = vmatmul.mubr.bf16.gmra.mrb[0].mxu0 %v4271
        %v4625 = vpop.f32.mrb[0].mxu0
        %v4626 = vadd.f32 %v4314, %v4625
        %v4627 = vpop.f32.mrb[0].mxu0
        %v4628 = vadd.f32 %v4318, %v4627
        %v4629 = vpop.f32.mrb[0].mxu0
        %v4630 = vadd.f32 %v4314, %v4629
        %v4631 = vpop.f32.mrb[0].mxu0
        %v4632 = vadd.f32 %v4318, %v4631
        %4633 = vmatprep.mubr.bf16.mxu0 0
        %4634 = vmatmul.mubr.bf16.gmra.mrb[0].mxu0 %v4272
        %v4635 = vpop.f32.mrb[0].mxu0
        %v4636 = vadd.f32 %v4314, %v4635
        %v4637 = vpop.f32.mrb[0].mxu0
        %v4638 = vadd.f32 %v4318, %v4637
        %v4639 = vpop.f32.mrb[0].mxu0
        %v4640 = vadd.f32 %v4314, %v4639
        %v4641 = vpop.f32.mrb[0].mxu0
        %v4642 = vadd.f32 %v4318, %v4641
        %4643 = vmatprep.mubr.bf16.mxu0 0
        %4644 = vmatmul.mubr.bf16.gmra.mrb[0].mxu0 %v4273
        %v4645 = vpop.f32.mrb[0].mxu0
        %v4646 = vadd.f32 %v4314, %v4645
        %v4647 = vpop.f32.mrb[0].mxu0
        %v4648 = vadd.f32 %v4318, %v4647
        %v4649 = vpop.f32.mrb[0].mxu0
        %v4650 = vadd.f32 %v4314, %v4649
        %v4651 = vpop.f32.mrb[0].mxu0
        %v4652 = vadd.f32 %v4318, %v4651
        %4653 = vmatprep.mubr.bf16.mxu0 0
        %4654 = vmatmul.mubr.bf16.gmra.mrb[0].mxu0 %v4274
        %v4655 = vpop.f32.mrb[0].mxu0
        %v4656 = vadd.f32 %v4314, %v4655
        %v4657 = vpop.f32.mrb[0].mxu0
        %v4658 = vadd.f32 %v4318, %v4657
        %v4659 = vpop.f32.mrb[0].mxu0
        %v4660 = vadd.f32 %v4314, %v4659
        %v4661 = vpop.f32.mrb[0].mxu0
        %v4662 = vadd.f32 %v4318, %v4661
        %4663 = vmatprep.mubr.bf16.mxu0 0
        %4664 = vmatmul.mubr.bf16.gmra.mrb[0].mxu0 %v4275
        %v4665 = vpop.f32.mrb[0].mxu0
        %v4666 = vadd.f32 %v4314, %v4665
        %v4667 = vpop.f32.mrb[0].mxu0
        %v4668 = vadd.f32 %v4318, %v4667
        %v4669 = vpop.f32.mrb[0].mxu0
        %v4670 = vadd.f32 %v4314, %v4669
        %v4671 = vpop.f32.mrb[0].mxu0
        %v4672 = vadd.f32 %v4318, %v4671
        %4673 = vmatprep.mubr.bf16.mxu0 0
        %4674 = vmatmul.mubr.bf16.gmra.mrb[0].mxu0 %v4276
        %v4675 = vpop.f32.mrb[0].mxu0
        %v4676 = vadd.f32 %v4314, %v4675
        %v4677 = vpop.f32.mrb[0].mxu0
        %v4678 = vadd.f32 %v4318, %v4677
        %v4679 = vpop.f32.mrb[0].mxu0
        %v4680 = vadd.f32 %v4314, %v4679
        %v4681 = vpop.f32.mrb[0].mxu0
        %v4682 = vadd.f32 %v4318, %v4681
        %4683 = vdwg.mxu0
        %4684 = vmatprep.subr.bf16.mxu0 %v4430
        %4685 = vmatpush1.bf16.msra.mxu0 %v4429
        %4686 = vmatprep.subr.bf16.mxu0 %v4434
        %4687 = vmatpush1.bf16.msra.mxu0 %v4433
        %4688 = vmatprep.subr.bf16.mxu0 %v4438
        %4689 = vmatpush1.bf16.msra.mxu0 %v4437
        %4690 = vmatprep.subr.bf16.mxu0 %v4442
        %4691 = vmatpush1.bf16.msra.mxu0 %v4441
        %4692 = vmatprep.subr.bf16.mxu0 %v4446
        %4693 = vmatpush1.bf16.msra.mxu0 %v4445
        %4694 = vmatprep.subr.bf16.mxu0 %v4450
        %4695 = vmatpush1.bf16.msra.mxu0 %v4449
        %4696 = vmatprep.subr.bf16.mxu0 %v4454
        %4697 = vmatpush1.bf16.msra.mxu0 %v4453
        %4698 = vmatprep.subr.bf16.mxu0 %v4458
        %4699 = vmatpush1.bf16.msra.mxu0 %v4457
        %4700 = vmatprep.subr.bf16.mxu0 0
        %4701 = vmatpush1.bf16.msra.mxu0 0
        %4702 = vmatprep.subr.bf16.mxu0 0
        %4703 = vmatpush1.bf16.msra.mxu0 0
        %4704 = vmatprep.subr.bf16.mxu0 0
        %4705 = vmatpush1.bf16.msra.mxu0 0
        %4706 = vmatprep.subr.bf16.mxu0 0
        %4707 = vmatpush1.bf16.msra.mxu0 0
        %4708 = vmatprep.subr.bf16.mxu0 0
        %4709 = vmatpush1.bf16.msra.mxu0 0
        %4710 = vmatprep.subr.bf16.mxu0 0
        %4711 = vmatpush1.bf16.msra.mxu0 0
        %4712 = vmatprep.subr.bf16.mxu0 0
        %4713 = vmatpush1.bf16.msra.mxu0 0
        %4714 = vmatprep.subr.bf16.mxu0 0
        %4715 = vmatpush1.bf16.msra.mxu0 0
        %4716 = vmatprep.mubr.bf16.mxu0 0
        %4717 = vmatmul.mubr.bf16.gmra.mrb[0].mxu0 %v4261
        %v4718 = vpop.f32.mrb[0].mxu0
        %v4719 = vadd.f32 %v4322, %v4718
        %v4720 = vpop.f32.mrb[0].mxu0
        %v4721 = vadd.f32 %v4326, %v4720
        %v4722 = vpop.f32.mrb[0].mxu0
        %v4723 = vadd.f32 %v4322, %v4722
        %v4724 = vpop.f32.mrb[0].mxu0
        %v4725 = vadd.f32 %v4326, %v4724
        %4726 = vmatprep.mubr.bf16.mxu0 0
        %4727 = vmatmul.mubr.bf16.gmra.mrb[0].mxu0 %v4262
        %v4728 = vpop.f32.mrb[0].mxu0
        %v4729 = vadd.f32 %v4322, %v4728
        %v4730 = vpop.f32.mrb[0].mxu0
        %v4731 = vadd.f32 %v4326, %v4730
        %v4732 = vpop.f32.mrb[0].mxu0
        %v4733 = vadd.f32 %v4322, %v4732
        %v4734 = vpop.f32.mrb[0].mxu0
        %v4735 = vadd.f32 %v4326, %v4734
        %4736 = vmatprep.mubr.bf16.mxu0 0
        %4737 = vmatmul.mubr.bf16.gmra.mrb[0].mxu0 %v4263
        %v4738 = vpop.f32.mrb[0].mxu0
        %v4739 = vadd.f32 %v4322, %v4738
        %v4740 = vpop.f32.mrb[0].mxu0
        %v4741 = vadd.f32 %v4326, %v4740
        %v4742 = vpop.f32.mrb[0].mxu0
        %v4743 = vadd.f32 %v4322, %v4742
        %v4744 = vpop.f32.mrb[0].mxu0
        %v4745 = vadd.f32 %v4326, %v4744
        %4746 = vmatprep.mubr.bf16.mxu0 0
        %4747 = vmatmul.mubr.bf16.gmra.mrb[0].mxu0 %v4264
        %v4748 = vpop.f32.mrb[0].mxu0
        %v4749 = vadd.f32 %v4322, %v4748
        %v4750 = vpop.f32.mrb[0].mxu0
        %v4751 = vadd.f32 %v4326, %v4750
        %v4752 = vpop.f32.mrb[0].mxu0
        %v4753 = vadd.f32 %v4322, %v4752
        %v4754 = vpop.f32.mrb[0].mxu0
        %v4755 = vadd.f32 %v4326, %v4754
        %4756 = vmatprep.mubr.bf16.mxu0 0
        %4757 = vmatmul.mubr.bf16.gmra.mrb[0].mxu0 %v4265
        %v4758 = vpop.f32.mrb[0].mxu0
        %v4759 = vadd.f32 %v4322, %v4758
        %v4760 = vpop.f32.mrb[0].mxu0
        %v4761 = vadd.f32 %v4326, %v4760
        %v4762 = vpop.f32.mrb[0].mxu0
        %v4763 = vadd.f32 %v4322, %v4762
        %v4764 = vpop.f32.mrb[0].mxu0
        %v4765 = vadd.f32 %v4326, %v4764
        %4766 = vmatprep.mubr.bf16.mxu0 0
        %4767 = vmatmul.mubr.bf16.gmra.mrb[0].mxu0 %v4266
        %v4768 = vpop.f32.mrb[0].mxu0
        %v4769 = vadd.f32 %v4322, %v4768
        %v4770 = vpop.f32.mrb[0].mxu0
        %v4771 = vadd.f32 %v4326, %v4770
        %v4772 = vpop.f32.mrb[0].mxu0
        %v4773 = vadd.f32 %v4322, %v4772
        %v4774 = vpop.f32.mrb[0].mxu0
        %v4775 = vadd.f32 %v4326, %v4774
        %4776 = vmatprep.mubr.bf16.mxu0 0
        %4777 = vmatmul.mubr.bf16.gmra.mrb[0].mxu0 %v4267
        %v4778 = vpop.f32.mrb[0].mxu0
        %v4779 = vadd.f32 %v4322, %v4778
        %v4780 = vpop.f32.mrb[0].mxu0
        %v4781 = vadd.f32 %v4326, %v4780
        %v4782 = vpop.f32.mrb[0].mxu0
        %v4783 = vadd.f32 %v4322, %v4782
        %v4784 = vpop.f32.mrb[0].mxu0
        %v4785 = vadd.f32 %v4326, %v4784
        %4786 = vmatprep.mubr.bf16.mxu0 0
        %4787 = vmatmul.mubr.bf16.gmra.mrb[0].mxu0 %v4268
        %v4788 = vpop.f32.mrb[0].mxu0
        %v4789 = vadd.f32 %v4322, %v4788
        %v4790 = vpop.f32.mrb[0].mxu0
        %v4791 = vadd.f32 %v4326, %v4790
        %v4792 = vpop.f32.mrb[0].mxu0
        %v4793 = vadd.f32 %v4322, %v4792
        %v4794 = vpop.f32.mrb[0].mxu0
        %v4795 = vadd.f32 %v4326, %v4794
        %4796 = vmatprep.mubr.bf16.mxu0 0
        %4797 = vmatmul.mubr.bf16.gmra.mrb[0].mxu0 %v4269
        %v4798 = vpop.f32.mrb[0].mxu0
        %v4799 = vadd.f32 %v4322, %v4798
        %v4800 = vpop.f32.mrb[0].mxu0
        %v4801 = vadd.f32 %v4326, %v4800
        %v4802 = vpop.f32.mrb[0].mxu0
        %v4803 = vadd.f32 %v4322, %v4802
        %v4804 = vpop.f32.mrb[0].mxu0
        %v4805 = vadd.f32 %v4326, %v4804
        %4806 = vmatprep.mubr.bf16.mxu0 0
        %4807 = vmatmul.mubr.bf16.gmra.mrb[0].mxu0 %v4270
        %v4808 = vpop.f32.mrb[0].mxu0
        %v4809 = vadd.f32 %v4322, %v4808
        %v4810 = vpop.f32.mrb[0].mxu0
        %v4811 = vadd.f32 %v4326, %v4810
        %v4812 = vpop.f32.mrb[0].mxu0
        %v4813 = vadd.f32 %v4322, %v4812
        %v4814 = vpop.f32.mrb[0].mxu0
        %v4815 = vadd.f32 %v4326, %v4814
        %4816 = vmatprep.mubr.bf16.mxu0 0
        %4817 = vmatmul.mubr.bf16.gmra.mrb[0].mxu0 %v4271
        %v4818 = vpop.f32.mrb[0].mxu0
        %v4819 = vadd.f32 %v4322, %v4818
        %v4820 = vpop.f32.mrb[0].mxu0
        %v4821 = vadd.f32 %v4326, %v4820
        %v4822 = vpop.f32.mrb[0].mxu0
        %v4823 = vadd.f32 %v4322, %v4822
        %v4824 = vpop.f32.mrb[0].mxu0
        %v4825 = vadd.f32 %v4326, %v4824
        %4826 = vmatprep.mubr.bf16.mxu0 0
        %4827 = vmatmul.mubr.bf16.gmra.mrb[0].mxu0 %v4272
        %v4828 = vpop.f32.mrb[0].mxu0
        %v4829 = vadd.f32 %v4322, %v4828
        %v4830 = vpop.f32.mrb[0].mxu0
        %v4831 = vadd.f32 %v4326, %v4830
        %v4832 = vpop.f32.mrb[0].mxu0
        %v4833 = vadd.f32 %v4322, %v4832
        %v4834 = vpop.f32.mrb[0].mxu0
        %v4835 = vadd.f32 %v4326, %v4834
        %4836 = vmatprep.mubr.bf16.mxu0 0
        %4837 = vmatmul.mubr.bf16.gmra.mrb[0].mxu0 %v4273
        %v4838 = vpop.f32.mrb[0].mxu0
        %v4839 = vadd.f32 %v4322, %v4838
        %v4840 = vpop.f32.mrb[0].mxu0
        %v4841 = vadd.f32 %v4326, %v4840
        %v4842 = vpop.f32.mrb[0].mxu0
        %v4843 = vadd.f32 %v4322, %v4842
        %v4844 = vpop.f32.mrb[0].mxu0
        %v4845 = vadd.f32 %v4326, %v4844
        %4846 = vmatprep.mubr.bf16.mxu0 0
        %4847 = vmatmul.mubr.bf16.gmra.mrb[0].mxu0 %v4274
        %v4848 = vpop.f32.mrb[0].mxu0
        %v4849 = vadd.f32 %v4322, %v4848
        %v4850 = vpop.f32.mrb[0].mxu0
        %v4851 = vadd.f32 %v4326, %v4850
        %v4852 = vpop.f32.mrb[0].mxu0
        %v4853 = vadd.f32 %v4322, %v4852
        %v4854 = vpop.f32.mrb[0].mxu0
        %v4855 = vadd.f32 %v4326, %v4854
        %4856 = vmatprep.mubr.bf16.mxu0 0
        %4857 = vmatmul.mubr.bf16.gmra.mrb[0].mxu0 %v4275
        %v4858 = vpop.f32.mrb[0].mxu0
        %v4859 = vadd.f32 %v4322, %v4858
        %v4860 = vpop.f32.mrb[0].mxu0
        %v4861 = vadd.f32 %v4326, %v4860
        %v4862 = vpop.f32.mrb[0].mxu0
        %v4863 = vadd.f32 %v4322, %v4862
        %v4864 = vpop.f32.mrb[0].mxu0
        %v4865 = vadd.f32 %v4326, %v4864
        %4866 = vmatprep.mubr.bf16.mxu0 0
        %4867 = vmatmul.mubr.bf16.gmra.mrb[0].mxu0 %v4276
        %v4868 = vpop.f32.mrb[0].mxu0
        %v4869 = vadd.f32 %v4322, %v4868
        %v4870 = vpop.f32.mrb[0].mxu0
        %v4871 = vadd.f32 %v4326, %v4870
        %v4872 = vpop.f32.mrb[0].mxu0
        %v4873 = vadd.f32 %v4322, %v4872
        %v4874 = vpop.f32.mrb[0].mxu0
        %v4875 = vadd.f32 %v4326, %v4874
        %4876 = vdwg.mxu0
        %v4877 = vld [vmem:[%s355] sm:$0xff]
        %v4878 = vld [vmem:[%s355 + $0x8] sm:$0xff]
        %v4879 = vld [vmem:[%s355 + $0x10] sm:$0xff]
        %v4880 = vld [vmem:[%s355 + $0x18] sm:$0xff]
        %v4881 = vld [vmem:[%s355 + $0x20] sm:$0xff]
        %v4882 = vld [vmem:[%s355 + $0x28] sm:$0xff]
        %v4883 = vld [vmem:[%s355 + $0x30] sm:$0xff]
        %v4884 = vld [vmem:[%s355 + $0x38] sm:$0xff]
        %v4885 = vld [vmem:[%s355 + $0x40] sm:$0xff]
        %v4886 = vld [vmem:[%s355 + $0x48] sm:$0xff]
        %v4887 = vld [vmem:[%s355 + $0x50] sm:$0xff]
        %v4888 = vld [vmem:[%s355 + $0x58] sm:$0xff]
        %v4889 = vld [vmem:[%s355 + $0x60] sm:$0xff]
        %v4890 = vld [vmem:[%s355 + $0x68] sm:$0xff]
        %v4891 = vld [vmem:[%s355 + $0x70] sm:$0xff]
        %v4892 = vld [vmem:[%s355 + $0x78] sm:$0xff]
        %v4893 = vld [vmem:[%s355 + $0x80] sm:$0xff]
        %v4894 = vld [vmem:[%s355 + $0x88] sm:$0xff]
        %v4895 = vld [vmem:[%s355 + $0x90] sm:$0xff]
        %v4896 = vld [vmem:[%s355 + $0x98] sm:$0xff]
        %v4897 = vld [vmem:[%s355 + $0xa0] sm:$0xff]
        %v4898 = vld [vmem:[%s355 + $0xa8] sm:$0xff]
        %v4899 = vld [vmem:[%s355 + $0xb0] sm:$0xff]
        %v4900 = vld [vmem:[%s355 + $0xb8] sm:$0xff]
        %v4901 = vld [vmem:[%s355 + $0xc0] sm:$0xff]
        %v4902 = vld [vmem:[%s355 + $0xc8] sm:$0xff]
        %v4903 = vld [vmem:[%s355 + $0xd0] sm:$0xff]
        %v4904 = vld [vmem:[%s355 + $0xd8] sm:$0xff]
        %v4905 = vld [vmem:[%s355 + $0xe0] sm:$0xff]
        %v4906 = vld [vmem:[%s355 + $0xe8] sm:$0xff]
        %v4907 = vld [vmem:[%s355 + $0xf0] sm:$0xff]
        %v4908 = vld [vmem:[%s355 + $0xf8] sm:$0xff]
        %v4909 = vld [vmem:[%s355 + $0x100] sm:$0xff]
        %v4910 = vld [vmem:[%s355 + $0x108] sm:$0xff]
        %v4911 = vld [vmem:[%s355 + $0x110] sm:$0xff]
        %v4912 = vld [vmem:[%s355 + $0x118] sm:$0xff]
        %v4913 = vld [vmem:[%s355 + $0x120] sm:$0xff]
        %v4914 = vld [vmem:[%s355 + $0x128] sm:$0xff]
        %v4915 = vld [vmem:[%s355 + $0x130] sm:$0xff]
        %v4916 = vld [vmem:[%s355 + $0x138] sm:$0xff]
        %v4917 = vld [vmem:[%s355 + $0x140] sm:$0xff]
        %v4918 = vld [vmem:[%s355 + $0x148] sm:$0xff]
        %v4919 = vld [vmem:[%s355 + $0x150] sm:$0xff]
        %v4920 = vld [vmem:[%s355 + $0x158] sm:$0xff]
        %v4921 = vld [vmem:[%s355 + $0x160] sm:$0xff]
        %v4922 = vld [vmem:[%s355 + $0x168] sm:$0xff]
        %v4923 = vld [vmem:[%s355 + $0x170] sm:$0xff]
        %v4924 = vld [vmem:[%s355 + $0x178] sm:$0xff]
        %v4925 = vld [vmem:[%s355 + $0x180] sm:$0xff]
        %v4926 = vld [vmem:[%s355 + $0x188] sm:$0xff]
        %v4927 = vld [vmem:[%s355 + $0x190] sm:$0xff]
        %v4928 = vld [vmem:[%s355 + $0x198] sm:$0xff]
        %v4929 = vld [vmem:[%s355 + $0x1a0] sm:$0xff]
        %v4930 = vld [vmem:[%s355 + $0x1a8] sm:$0xff]
        %v4931 = vld [vmem:[%s355 + $0x1b0] sm:$0xff]
        %v4932 = vld [vmem:[%s355 + $0x1b8] sm:$0xff]
        %v4933 = vld [vmem:[%s355 + $0x1c0] sm:$0xff]
        %v4934 = vld [vmem:[%s355 + $0x1c8] sm:$0xff]
        %v4935 = vld [vmem:[%s355 + $0x1d0] sm:$0xff]
        %v4936 = vld [vmem:[%s355 + $0x1d8] sm:$0xff]
        %v4937 = vld [vmem:[%s355 + $0x1e0] sm:$0xff]
        %v4938 = vld [vmem:[%s355 + $0x1e8] sm:$0xff]
        %v4939 = vld [vmem:[%s355 + $0x1f0] sm:$0xff]
        %v4940 = vld [vmem:[%s355 + $0x1f8] sm:$0xff]
        %v4941 = vld [vmem:[%s355 + $0x200] sm:$0xff]
        %v4942 = vld [vmem:[%s355 + $0x208] sm:$0xff]
        %v4943 = vld [vmem:[%s355 + $0x210] sm:$0xff]
        %v4944 = vld [vmem:[%s355 + $0x218] sm:$0xff]
        %v4945 = vld [vmem:[%s355 + $0x220] sm:$0xff]
        %v4946 = vld [vmem:[%s355 + $0x228] sm:$0xff]
        %v4947 = vld [vmem:[%s355 + $0x230] sm:$0xff]
        %v4948 = vld [vmem:[%s355 + $0x238] sm:$0xff]
        %v4949 = vld [vmem:[%s355 + $0x240] sm:$0xff]
        %v4950 = vld [vmem:[%s355 + $0x248] sm:$0xff]
        %v4951 = vld [vmem:[%s355 + $0x250] sm:$0xff]
        %v4952 = vld [vmem:[%s355 + $0x258] sm:$0xff]
        %v4953 = vld [vmem:[%s355 + $0x260] sm:$0xff]
        %v4954 = vld [vmem:[%s355 + $0x268] sm:$0xff]
        %v4955 = vld [vmem:[%s355 + $0x270] sm:$0xff]
        %v4956 = vld [vmem:[%s355 + $0x278] sm:$0xff]
        %v4957 = vld [vmem:[%s355 + $0x280] sm:$0xff]
        %v4958 = vld [vmem:[%s355 + $0x288] sm:$0xff]
        %v4959 = vld [vmem:[%s355 + $0x290] sm:$0xff]
        %v4960 = vld [vmem:[%s355 + $0x298] sm:$0xff]
        %v4961 = vld [vmem:[%s355 + $0x2a0] sm:$0xff]
        %v4962 = vld [vmem:[%s355 + $0x2a8] sm:$0xff]
        %v4963 = vld [vmem:[%s355 + $0x2b0] sm:$0xff]
        %v4964 = vld [vmem:[%s355 + $0x2b8] sm:$0xff]
        %v4965 = vld [vmem:[%s355 + $0x2c0] sm:$0xff]
        %v4966 = vld [vmem:[%s355 + $0x2c8] sm:$0xff]
        %v4967 = vld [vmem:[%s355 + $0x2d0] sm:$0xff]
        %v4968 = vld [vmem:[%s355 + $0x2d8] sm:$0xff]
        %v4969 = vld [vmem:[%s355 + $0x2e0] sm:$0xff]
        %v4970 = vld [vmem:[%s355 + $0x2e8] sm:$0xff]
        %v4971 = vld [vmem:[%s355 + $0x2f0] sm:$0xff]
        %v4972 = vld [vmem:[%s355 + $0x2f8] sm:$0xff]
        %v4973 = vld [vmem:[%s355 + $0x300] sm:$0xff]
        %v4974 = vld [vmem:[%s355 + $0x308] sm:$0xff]
        %v4975 = vld [vmem:[%s355 + $0x310] sm:$0xff]
        %v4976 = vld [vmem:[%s355 + $0x318] sm:$0xff]
        %v4977 = vld [vmem:[%s355 + $0x320] sm:$0xff]
        %v4978 = vld [vmem:[%s355 + $0x328] sm:$0xff]
        %v4979 = vld [vmem:[%s355 + $0x330] sm:$0xff]
        %v4980 = vld [vmem:[%s355 + $0x338] sm:$0xff]
        %v4981 = vld [vmem:[%s355 + $0x340] sm:$0xff]
        %v4982 = vld [vmem:[%s355 + $0x348] sm:$0xff]
        %v4983 = vld [vmem:[%s355 + $0x350] sm:$0xff]
        %v4984 = vld [vmem:[%s355 + $0x358] sm:$0xff]
        %v4985 = vld [vmem:[%s355 + $0x360] sm:$0xff]
        %v4986 = vld [vmem:[%s355 + $0x368] sm:$0xff]
        %v4987 = vld [vmem:[%s355 + $0x370] sm:$0xff]
        %v4988 = vld [vmem:[%s355 + $0x378] sm:$0xff]
        %v4989 = vld [vmem:[%s355 + $0x380] sm:$0xff]
        %v4990 = vld [vmem:[%s355 + $0x388] sm:$0xff]
        %v4991 = vld [vmem:[%s355 + $0x390] sm:$0xff]
        %v4992 = vld [vmem:[%s355 + $0x398] sm:$0xff]
        %v4993 = vld [vmem:[%s355 + $0x3a0] sm:$0xff]
        %v4994 = vld [vmem:[%s355 + $0x3a8] sm:$0xff]
        %v4995 = vld [vmem:[%s355 + $0x3b0] sm:$0xff]
        %v4996 = vld [vmem:[%s355 + $0x3b8] sm:$0xff]
        %v4997 = vld [vmem:[%s355 + $0x3c0] sm:$0xff]
        %v4998 = vld [vmem:[%s355 + $0x3c8] sm:$0xff]
        %v4999 = vld [vmem:[%s355 + $0x3d0] sm:$0xff]
        %v5000 = vld [vmem:[%s355 + $0x3d8] sm:$0xff]
        %v5001 = vld [vmem:[%s355 + $0x3e0] sm:$0xff]
        %v5002 = vld [vmem:[%s355 + $0x3e8] sm:$0xff]
        %v5003 = vld [vmem:[%s355 + $0x3f0] sm:$0xff]
        %v5004 = vld [vmem:[%s355 + $0x3f8] sm:$0xff]
        %v5005 = vadd.f32 %v4526, %v4877
        %v5006 = vadd.f32 %v4528, %v4878
        %v5007 = vadd.f32 %v4719, %v4879
        %v5008 = vadd.f32 %v4721, %v4880
        %v5009 = vadd.f32 %v4530, %v4881
        %v5010 = vadd.f32 %v4532, %v4882
        %v5011 = vadd.f32 %v4723, %v4883
        %v5012 = vadd.f32 %v4725, %v4884
        %v5013 = vadd.f32 %v4536, %v4885
        %v5014 = vadd.f32 %v4538, %v4886
        %v5015 = vadd.f32 %v4729, %v4887
        %v5016 = vadd.f32 %v4731, %v4888
        %v5017 = vadd.f32 %v4540, %v4889
        %v5018 = vadd.f32 %v4542, %v4890
        %v5019 = vadd.f32 %v4733, %v4891
        %v5020 = vadd.f32 %v4735, %v4892
        %v5021 = vadd.f32 %v4546, %v4893
        %v5022 = vadd.f32 %v4548, %v4894
        %v5023 = vadd.f32 %v4739, %v4895
        %v5024 = vadd.f32 %v4741, %v4896
        %v5025 = vadd.f32 %v4550, %v4897
        %v5026 = vadd.f32 %v4552, %v4898
        %v5027 = vadd.f32 %v4743, %v4899
        %v5028 = vadd.f32 %v4745, %v4900
        %v5029 = vadd.f32 %v4556, %v4901
        %v5030 = vadd.f32 %v4558, %v4902
        %v5031 = vadd.f32 %v4749, %v4903
        %v5032 = vadd.f32 %v4751, %v4904
        %v5033 = vadd.f32 %v4560, %v4905
        %v5034 = vadd.f32 %v4562, %v4906
        %v5035 = vadd.f32 %v4753, %v4907
        %v5036 = vadd.f32 %v4755, %v4908
        %v5037 = vadd.f32 %v4566, %v4909
        %v5038 = vadd.f32 %v4568, %v4910
        %v5039 = vadd.f32 %v4759, %v4911
        %v5040 = vadd.f32 %v4761, %v4912
        %v5041 = vadd.f32 %v4570, %v4913
        %v5042 = vadd.f32 %v4572, %v4914
        %v5043 = vadd.f32 %v4763, %v4915
        %v5044 = vadd.f32 %v4765, %v4916
        %v5045 = vadd.f32 %v4576, %v4917
        %v5046 = vadd.f32 %v4578, %v4918
        %v5047 = vadd.f32 %v4769, %v4919
        %v5048 = vadd.f32 %v4771, %v4920
        %v5049 = vadd.f32 %v4580, %v4921
        %v5050 = vadd.f32 %v4582, %v4922
        %v5051 = vadd.f32 %v4773, %v4923
        %v5052 = vadd.f32 %v4775, %v4924
        %v5053 = vadd.f32 %v4586, %v4925
        %v5054 = vadd.f32 %v4588, %v4926
        %v5055 = vadd.f32 %v4779, %v4927
        %v5056 = vadd.f32 %v4781, %v4928
        %v5057 = vadd.f32 %v4590, %v4929
        %v5058 = vadd.f32 %v4592, %v4930
        %v5059 = vadd.f32 %v4783, %v4931
        %v5060 = vadd.f32 %v4785, %v4932
        %v5061 = vadd.f32 %v4596, %v4933
        %v5062 = vadd.f32 %v4598, %v4934
        %v5063 = vadd.f32 %v4789, %v4935
        %v5064 = vadd.f32 %v4791, %v4936
        %v5065 = vadd.f32 %v4600, %v4937
        %v5066 = vadd.f32 %v4602, %v4938
        %v5067 = vadd.f32 %v4793, %v4939
        %v5068 = vadd.f32 %v4795, %v4940
        %v5069 = vadd.f32 %v4606, %v4941
        %v5070 = vadd.f32 %v4608, %v4942
        %v5071 = vadd.f32 %v4799, %v4943
        %v5072 = vadd.f32 %v4801, %v4944
        %v5073 = vadd.f32 %v4610, %v4945
        %v5074 = vadd.f32 %v4612, %v4946
        %v5075 = vadd.f32 %v4803, %v4947
        %v5076 = vadd.f32 %v4805, %v4948
        %v5077 = vadd.f32 %v4616, %v4949
        %v5078 = vadd.f32 %v4618, %v4950
        %v5079 = vadd.f32 %v4809, %v4951
        %v5080 = vadd.f32 %v4811, %v4952
        %v5081 = vadd.f32 %v4620, %v4953
        %v5082 = vadd.f32 %v4622, %v4954
        %v5083 = vadd.f32 %v4813, %v4955
        %v5084 = vadd.f32 %v4815, %v4956
        %v5085 = vadd.f32 %v4626, %v4957
        %v5086 = vadd.f32 %v4628, %v4958
        %v5087 = vadd.f32 %v4819, %v4959
        %v5088 = vadd.f32 %v4821, %v4960
        %v5089 = vadd.f32 %v4630, %v4961
        %v5090 = vadd.f32 %v4632, %v4962
        %v5091 = vadd.f32 %v4823, %v4963
        %v5092 = vadd.f32 %v4825, %v4964
        %v5093 = vadd.f32 %v4636, %v4965
        %v5094 = vadd.f32 %v4638, %v4966
        %v5095 = vadd.f32 %v4829, %v4967
        %v5096 = vadd.f32 %v4831, %v4968
        %v5097 = vadd.f32 %v4640, %v4969
        %v5098 = vadd.f32 %v4642, %v4970
        %v5099 = vadd.f32 %v4833, %v4971
        %v5100 = vadd.f32 %v4835, %v4972
        %v5101 = vadd.f32 %v4646, %v4973
        %v5102 = vadd.f32 %v4648, %v4974
        %v5103 = vadd.f32 %v4839, %v4975
        %v5104 = vadd.f32 %v4841, %v4976
        %v5105 = vadd.f32 %v4650, %v4977
        %v5106 = vadd.f32 %v4652, %v4978
        %v5107 = vadd.f32 %v4843, %v4979
        %v5108 = vadd.f32 %v4845, %v4980
        %v5109 = vadd.f32 %v4656, %v4981
        %v5110 = vadd.f32 %v4658, %v4982
        %v5111 = vadd.f32 %v4849, %v4983
        %v5112 = vadd.f32 %v4851, %v4984
        %v5113 = vadd.f32 %v4660, %v4985
        %v5114 = vadd.f32 %v4662, %v4986
        %v5115 = vadd.f32 %v4853, %v4987
        %v5116 = vadd.f32 %v4855, %v4988
        %v5117 = vadd.f32 %v4666, %v4989
        %v5118 = vadd.f32 %v4668, %v4990
        %v5119 = vadd.f32 %v4859, %v4991
        %v5120 = vadd.f32 %v4861, %v4992
        %v5121 = vadd.f32 %v4670, %v4993
        %v5122 = vadd.f32 %v4672, %v4994
        %v5123 = vadd.f32 %v4863, %v4995
        %v5124 = vadd.f32 %v4865, %v4996
        %v5125 = vadd.f32 %v4676, %v4997
        %v5126 = vadd.f32 %v4678, %v4998
        %v5127 = vadd.f32 %v4869, %v4999
        %v5128 = vadd.f32 %v4871, %v5000
        %v5129 = vadd.f32 %v4680, %v5001
        %v5130 = vadd.f32 %v4682, %v5002
        %v5131 = vadd.f32 %v4873, %v5003
        %v5132 = vadd.f32 %v4875, %v5004
        %v5133 = vmax.f32 %v5005, 0.0
        %v5134 = vmax.f32 %v5006, 0.0
        %v5135 = vmax.f32 %v5007, 0.0
        %v5136 = vmax.f32 %v5008, 0.0
        %v5137 = vmax.f32 %v5009, 0.0
        %v5138 = vmax.f32 %v5010, 0.0
        %v5139 = vmax.f32 %v5011, 0.0
        %v5140 = vmax.f32 %v5012, 0.0
        %v5141 = vmax.f32 %v5013, 0.0
        %v5142 = vmax.f32 %v5014, 0.0
        %v5143 = vmax.f32 %v5015, 0.0
        %v5144 = vmax.f32 %v5016, 0.0
        %v5145 = vmax.f32 %v5017, 0.0
        %v5146 = vmax.f32 %v5018, 0.0
        %v5147 = vmax.f32 %v5019, 0.0
        %v5148 = vmax.f32 %v5020, 0.0
        %v5149 = vmax.f32 %v5021, 0.0
        %v5150 = vmax.f32 %v5022, 0.0
        %v5151 = vmax.f32 %v5023, 0.0
        %v5152 = vmax.f32 %v5024, 0.0
        %v5153 = vmax.f32 %v5025, 0.0
        %v5154 = vmax.f32 %v5026, 0.0
        %v5155 = vmax.f32 %v5027, 0.0
        %v5156 = vmax.f32 %v5028, 0.0
        %v5157 = vmax.f32 %v5029, 0.0
        %v5158 = vmax.f32 %v5030, 0.0
        %v5159 = vmax.f32 %v5031, 0.0
        %v5160 = vmax.f32 %v5032, 0.0
        %v5161 = vmax.f32 %v5033, 0.0
        %v5162 = vmax.f32 %v5034, 0.0
        %v5163 = vmax.f32 %v5035, 0.0
        %v5164 = vmax.f32 %v5036, 0.0
        %v5165 = vmax.f32 %v5037, 0.0
        %v5166 = vmax.f32 %v5038, 0.0
        %v5167 = vmax.f32 %v5039, 0.0
        %v5168 = vmax.f32 %v5040, 0.0
        %v5169 = vmax.f32 %v5041, 0.0
        %v5170 = vmax.f32 %v5042, 0.0
        %v5171 = vmax.f32 %v5043, 0.0
        %v5172 = vmax.f32 %v5044, 0.0
        %v5173 = vmax.f32 %v5045, 0.0
        %v5174 = vmax.f32 %v5046, 0.0
        %v5175 = vmax.f32 %v5047, 0.0
        %v5176 = vmax.f32 %v5048, 0.0
        %v5177 = vmax.f32 %v5049, 0.0
        %v5178 = vmax.f32 %v5050, 0.0
        %v5179 = vmax.f32 %v5051, 0.0
        %v5180 = vmax.f32 %v5052, 0.0
        %v5181 = vmax.f32 %v5053, 0.0
        %v5182 = vmax.f32 %v5054, 0.0
        %v5183 = vmax.f32 %v5055, 0.0
        %v5184 = vmax.f32 %v5056, 0.0
        %v5185 = vmax.f32 %v5057, 0.0
        %v5186 = vmax.f32 %v5058, 0.0
        %v5187 = vmax.f32 %v5059, 0.0
        %v5188 = vmax.f32 %v5060, 0.0
        %v5189 = vmax.f32 %v5061, 0.0
        %v5190 = vmax.f32 %v5062, 0.0
        %v5191 = vmax.f32 %v5063, 0.0
        %v5192 = vmax.f32 %v5064, 0.0
        %v5193 = vmax.f32 %v5065, 0.0
        %v5194 = vmax.f32 %v5066, 0.0
        %v5195 = vmax.f32 %v5067, 0.0
        %v5196 = vmax.f32 %v5068, 0.0
        %v5197 = vmax.f32 %v5069, 0.0
        %v5198 = vmax.f32 %v5070, 0.0
        %v5199 = vmax.f32 %v5071, 0.0
        %v5200 = vmax.f32 %v5072, 0.0
        %v5201 = vmax.f32 %v5073, 0.0
        %v5202 = vmax.f32 %v5074, 0.0
        %v5203 = vmax.f32 %v5075, 0.0
        %v5204 = vmax.f32 %v5076, 0.0
        %v5205 = vmax.f32 %v5077, 0.0
        %v5206 = vmax.f32 %v5078, 0.0
        %v5207 = vmax.f32 %v5079, 0.0
        %v5208 = vmax.f32 %v5080, 0.0
        %v5209 = vmax.f32 %v5081, 0.0
        %v5210 = vmax.f32 %v5082, 0.0
        %v5211 = vmax.f32 %v5083, 0.0
        %v5212 = vmax.f32 %v5084, 0.0
        %v5213 = vmax.f32 %v5085, 0.0
        %v5214 = vmax.f32 %v5086, 0.0
        %v5215 = vmax.f32 %v5087, 0.0
        %v5216 = vmax.f32 %v5088, 0.0
        %v5217 = vmax.f32 %v5089, 0.0
        %v5218 = vmax.f32 %v5090, 0.0
        %v5219 = vmax.f32 %v5091, 0.0
        %v5220 = vmax.f32 %v5092, 0.0
        %v5221 = vmax.f32 %v5093, 0.0
        %v5222 = vmax.f32 %v5094, 0.0
        %v5223 = vmax.f32 %v5095, 0.0
        %v5224 = vmax.f32 %v5096, 0.0
        %v5225 = vmax.f32 %v5097, 0.0
        %v5226 = vmax.f32 %v5098, 0.0
        %v5227 = vmax.f32 %v5099, 0.0
        %v5228 = vmax.f32 %v5100, 0.0
        %v5229 = vmax.f32 %v5101, 0.0
        %v5230 = vmax.f32 %v5102, 0.0
        %v5231 = vmax.f32 %v5103, 0.0
        %v5232 = vmax.f32 %v5104, 0.0
        %v5233 = vmax.f32 %v5105, 0.0
        %v5234 = vmax.f32 %v5106, 0.0
        %v5235 = vmax.f32 %v5107, 0.0
        %v5236 = vmax.f32 %v5108, 0.0
        %v5237 = vmax.f32 %v5109, 0.0
        %v5238 = vmax.f32 %v5110, 0.0
        %v5239 = vmax.f32 %v5111, 0.0
        %v5240 = vmax.f32 %v5112, 0.0
        %v5241 = vmax.f32 %v5113, 0.0
        %v5242 = vmax.f32 %v5114, 0.0
        %v5243 = vmax.f32 %v5115, 0.0
        %v5244 = vmax.f32 %v5116, 0.0
        %v5245 = vmax.f32 %v5117, 0.0
        %v5246 = vmax.f32 %v5118, 0.0
        %v5247 = vmax.f32 %v5119, 0.0
        %v5248 = vmax.f32 %v5120, 0.0
        %v5249 = vmax.f32 %v5121, 0.0
        %v5250 = vmax.f32 %v5122, 0.0
        %v5251 = vmax.f32 %v5123, 0.0
        %v5252 = vmax.f32 %v5124, 0.0
        %v5253 = vmax.f32 %v5125, 0.0
        %v5254 = vmax.f32 %v5126, 0.0
        %v5255 = vmax.f32 %v5127, 0.0
        %v5256 = vmax.f32 %v5128, 0.0
        %v5257 = vmax.f32 %v5129, 0.0
        %v5258 = vmax.f32 %v5130, 0.0
        %v5259 = vmax.f32 %v5131, 0.0
        %v5260 = vmax.f32 %v5132, 0.0
        %v5261 = vpack.c.bf16 %v5137, %v5133
        %v5262 = vpack.c.bf16 %v5138, %v5134
        %v5263 = vpack.c.bf16 %v5139, %v5135
        %v5264 = vpack.c.bf16 %v5140, %v5136
        %v5265 = vpack.c.bf16 %v5145, %v5141
        %v5266 = vpack.c.bf16 %v5146, %v5142
        %v5267 = vpack.c.bf16 %v5147, %v5143
        %v5268 = vpack.c.bf16 %v5148, %v5144
        %v5269 = vpack.c.bf16 %v5153, %v5149
        %v5270 = vpack.c.bf16 %v5154, %v5150
        %v5271 = vpack.c.bf16 %v5155, %v5151
        %v5272 = vpack.c.bf16 %v5156, %v5152
        %v5273 = vpack.c.bf16 %v5161, %v5157
        %v5274 = vpack.c.bf16 %v5162, %v5158
        %v5275 = vpack.c.bf16 %v5163, %v5159
        %v5276 = vpack.c.bf16 %v5164, %v5160
        %v5277 = vpack.c.bf16 %v5169, %v5165
        %v5278 = vpack.c.bf16 %v5170, %v5166
        %v5279 = vpack.c.bf16 %v5171, %v5167
        %v5280 = vpack.c.bf16 %v5172, %v5168
        %v5281 = vpack.c.bf16 %v5177, %v5173
        %v5282 = vpack.c.bf16 %v5178, %v5174
        %v5283 = vpack.c.bf16 %v5179, %v5175
        %v5284 = vpack.c.bf16 %v5180, %v5176
        %v5285 = vpack.c.bf16 %v5185, %v5181
        %v5286 = vpack.c.bf16 %v5186, %v5182
        %v5287 = vpack.c.bf16 %v5187, %v5183
        %v5288 = vpack.c.bf16 %v5188, %v5184
        %v5289 = vpack.c.bf16 %v5193, %v5189
        %v5290 = vpack.c.bf16 %v5194, %v5190
        %v5291 = vpack.c.bf16 %v5195, %v5191
        %v5292 = vpack.c.bf16 %v5196, %v5192
        %v5293 = vpack.c.bf16 %v5201, %v5197
        %v5294 = vpack.c.bf16 %v5202, %v5198
        %v5295 = vpack.c.bf16 %v5203, %v5199
        %v5296 = vpack.c.bf16 %v5204, %v5200
        %v5297 = vpack.c.bf16 %v5209, %v5205
        %v5298 = vpack.c.bf16 %v5210, %v5206
        %v5299 = vpack.c.bf16 %v5211, %v5207
        %v5300 = vpack.c.bf16 %v5212, %v5208
        %v5301 = vpack.c.bf16 %v5217, %v5213
        %v5302 = vpack.c.bf16 %v5218, %v5214
        %v5303 = vpack.c.bf16 %v5219, %v5215
        %v5304 = vpack.c.bf16 %v5220, %v5216
        %v5305 = vpack.c.bf16 %v5225, %v5221
        %v5306 = vpack.c.bf16 %v5226, %v5222
        %v5307 = vpack.c.bf16 %v5227, %v5223
        %v5308 = vpack.c.bf16 %v5228, %v5224
        %v5309 = vpack.c.bf16 %v5233, %v5229
        %v5310 = vpack.c.bf16 %v5234, %v5230
        %v5311 = vpack.c.bf16 %v5235, %v5231
        %v5312 = vpack.c.bf16 %v5236, %v5232
        %v5313 = vpack.c.bf16 %v5241, %v5237
        %v5314 = vpack.c.bf16 %v5242, %v5238
        %v5315 = vpack.c.bf16 %v5243, %v5239
        %v5316 = vpack.c.bf16 %v5244, %v5240
        %v5317 = vpack.c.bf16 %v5249, %v5245
        %v5318 = vpack.c.bf16 %v5250, %v5246
        %v5319 = vpack.c.bf16 %v5251, %v5247
        %v5320 = vpack.c.bf16 %v5252, %v5248
        %v5321 = vpack.c.bf16 %v5257, %v5253
        %v5322 = vpack.c.bf16 %v5258, %v5254
        %v5323 = vpack.c.bf16 %v5259, %v5255
        %v5324 = vpack.c.bf16 %v5260, %v5256
        %v5389 = vunpack.c.l.b16 %v5261
        %v5390 = vunpack.c.l.b16 %v5262
        %v5391 = vunpack.c.l.b16 %v5263
        %v5392 = vunpack.c.l.b16 %v5264
        %v5393 = vunpack.c.h.b16 %v5261
        %v5394 = vunpack.c.h.b16 %v5262
        %v5395 = vunpack.c.h.b16 %v5263
        %v5396 = vunpack.c.h.b16 %v5264
        %v5397 = vunpack.c.l.b16 %v5265
        %v5398 = vunpack.c.l.b16 %v5266
        %v5399 = vunpack.c.l.b16 %v5267
        %v5400 = vunpack.c.l.b16 %v5268
        %v5401 = vunpack.c.h.b16 %v5265
        %v5402 = vunpack.c.h.b16 %v5266
        %v5403 = vunpack.c.h.b16 %v5267
        %v5404 = vunpack.c.h.b16 %v5268
        %v5405 = vunpack.c.l.b16 %v5269
        %v5406 = vunpack.c.l.b16 %v5270
        %v5407 = vunpack.c.l.b16 %v5271
        %v5408 = vunpack.c.l.b16 %v5272
        %v5409 = vunpack.c.h.b16 %v5269
        %v5410 = vunpack.c.h.b16 %v5270
        %v5411 = vunpack.c.h.b16 %v5271
        %v5412 = vunpack.c.h.b16 %v5272
        %v5413 = vunpack.c.l.b16 %v5273
        %v5414 = vunpack.c.l.b16 %v5274
        %v5415 = vunpack.c.l.b16 %v5275
        %v5416 = vunpack.c.l.b16 %v5276
        %v5417 = vunpack.c.h.b16 %v5273
        %v5418 = vunpack.c.h.b16 %v5274
        %v5419 = vunpack.c.h.b16 %v5275
        %v5420 = vunpack.c.h.b16 %v5276
        %v5421 = vunpack.c.l.b16 %v5277
        %v5422 = vunpack.c.l.b16 %v5278
        %v5423 = vunpack.c.l.b16 %v5279
        %v5424 = vunpack.c.l.b16 %v5280
        %v5425 = vunpack.c.h.b16 %v5277
        %v5426 = vunpack.c.h.b16 %v5278
        %v5427 = vunpack.c.h.b16 %v5279
        %v5428 = vunpack.c.h.b16 %v5280
        %v5429 = vunpack.c.l.b16 %v5281
        %v5430 = vunpack.c.l.b16 %v5282
        %v5431 = vunpack.c.l.b16 %v5283
        %v5432 = vunpack.c.l.b16 %v5284
        %v5433 = vunpack.c.h.b16 %v5281
        %v5434 = vunpack.c.h.b16 %v5282
        %v5435 = vunpack.c.h.b16 %v5283
        %v5436 = vunpack.c.h.b16 %v5284
        %v5437 = vunpack.c.l.b16 %v5285
        %v5438 = vunpack.c.l.b16 %v5286
        %v5439 = vunpack.c.l.b16 %v5287
        %v5440 = vunpack.c.l.b16 %v5288
        %v5441 = vunpack.c.h.b16 %v5285
        %v5442 = vunpack.c.h.b16 %v5286
        %v5443 = vunpack.c.h.b16 %v5287
        %v5444 = vunpack.c.h.b16 %v5288
        %v5445 = vunpack.c.l.b16 %v5289
        %v5446 = vunpack.c.l.b16 %v5290
        %v5447 = vunpack.c.l.b16 %v5291
        %v5448 = vunpack.c.l.b16 %v5292
        %v5449 = vunpack.c.h.b16 %v5289
        %v5450 = vunpack.c.h.b16 %v5290
        %v5451 = vunpack.c.h.b16 %v5291
        %v5452 = vunpack.c.h.b16 %v5292
        %v5453 = vunpack.c.l.b16 %v5293
        %v5454 = vunpack.c.l.b16 %v5294
        %v5455 = vunpack.c.l.b16 %v5295
        %v5456 = vunpack.c.l.b16 %v5296
        %v5457 = vunpack.c.h.b16 %v5293
        %v5458 = vunpack.c.h.b16 %v5294
        %v5459 = vunpack.c.h.b16 %v5295
        %v5460 = vunpack.c.h.b16 %v5296
        %v5461 = vunpack.c.l.b16 %v5297
        %v5462 = vunpack.c.l.b16 %v5298
        %v5463 = vunpack.c.l.b16 %v5299
        %v5464 = vunpack.c.l.b16 %v5300
        %v5465 = vunpack.c.h.b16 %v5297
        %v5466 = vunpack.c.h.b16 %v5298
        %v5467 = vunpack.c.h.b16 %v5299
        %v5468 = vunpack.c.h.b16 %v5300
        %v5469 = vunpack.c.l.b16 %v5301
        %v5470 = vunpack.c.l.b16 %v5302
        %v5471 = vunpack.c.l.b16 %v5303
        %v5472 = vunpack.c.l.b16 %v5304
        %v5473 = vunpack.c.h.b16 %v5301
        %v5474 = vunpack.c.h.b16 %v5302
        %v5475 = vunpack.c.h.b16 %v5303
        %v5476 = vunpack.c.h.b16 %v5304
        %v5477 = vunpack.c.l.b16 %v5305
        %v5478 = vunpack.c.l.b16 %v5306
        %v5479 = vunpack.c.l.b16 %v5307
        %v5480 = vunpack.c.l.b16 %v5308
        %v5481 = vunpack.c.h.b16 %v5305
        %v5482 = vunpack.c.h.b16 %v5306
        %v5483 = vunpack.c.h.b16 %v5307
        %v5484 = vunpack.c.h.b16 %v5308
        %v5485 = vunpack.c.l.b16 %v5309
        %v5486 = vunpack.c.l.b16 %v5310
        %v5487 = vunpack.c.l.b16 %v5311
        %v5488 = vunpack.c.l.b16 %v5312
        %v5489 = vunpack.c.h.b16 %v5309
        %v5490 = vunpack.c.h.b16 %v5310
        %v5491 = vunpack.c.h.b16 %v5311
        %v5492 = vunpack.c.h.b16 %v5312
        %v5493 = vunpack.c.l.b16 %v5313
        %v5494 = vunpack.c.l.b16 %v5314
        %v5495 = vunpack.c.l.b16 %v5315
        %v5496 = vunpack.c.l.b16 %v5316
        %v5497 = vunpack.c.h.b16 %v5313
        %v5498 = vunpack.c.h.b16 %v5314
        %v5499 = vunpack.c.h.b16 %v5315
        %v5500 = vunpack.c.h.b16 %v5316
        %v5501 = vunpack.c.l.b16 %v5317
        %v5502 = vunpack.c.l.b16 %v5318
        %v5503 = vunpack.c.l.b16 %v5319
        %v5504 = vunpack.c.l.b16 %v5320
        %v5505 = vunpack.c.h.b16 %v5317
        %v5506 = vunpack.c.h.b16 %v5318
        %v5507 = vunpack.c.h.b16 %v5319
        %v5508 = vunpack.c.h.b16 %v5320
        %v5509 = vunpack.c.l.b16 %v5321
        %v5510 = vunpack.c.l.b16 %v5322
        %v5511 = vunpack.c.l.b16 %v5323
        %v5512 = vunpack.c.l.b16 %v5324
        %v5513 = vunpack.c.h.b16 %v5321
        %v5514 = vunpack.c.h.b16 %v5322
        %v5515 = vunpack.c.h.b16 %v5323
        %v5516 = vunpack.c.h.b16 %v5324
        %v5517 = vpack.c.b16 %v5390, %v5389
        %v5518 = vpack.c.b16 %v5392, %v5391
        %v5519 = vpack.c.b16 %v5394, %v5393
        %v5520 = vpack.c.b16 %v5396, %v5395
        %v5521 = vpack.c.b16 %v5398, %v5397
        %v5522 = vpack.c.b16 %v5400, %v5399
        %v5523 = vpack.c.b16 %v5402, %v5401
        %v5524 = vpack.c.b16 %v5404, %v5403
        %v5525 = vpack.c.b16 %v5406, %v5405
        %v5526 = vpack.c.b16 %v5408, %v5407
        %v5527 = vpack.c.b16 %v5410, %v5409
        %v5528 = vpack.c.b16 %v5412, %v5411
        %v5529 = vpack.c.b16 %v5414, %v5413
        %v5530 = vpack.c.b16 %v5416, %v5415
        %v5531 = vpack.c.b16 %v5418, %v5417
        %v5532 = vpack.c.b16 %v5420, %v5419
        %v5533 = vpack.c.b16 %v5422, %v5421
        %v5534 = vpack.c.b16 %v5424, %v5423
        %v5535 = vpack.c.b16 %v5426, %v5425
        %v5536 = vpack.c.b16 %v5428, %v5427
        %v5537 = vpack.c.b16 %v5430, %v5429
        %v5538 = vpack.c.b16 %v5432, %v5431
        %v5539 = vpack.c.b16 %v5434, %v5433
        %v5540 = vpack.c.b16 %v5436, %v5435
        %v5541 = vpack.c.b16 %v5438, %v5437
        %v5542 = vpack.c.b16 %v5440, %v5439
        %v5543 = vpack.c.b16 %v5442, %v5441
        %v5544 = vpack.c.b16 %v5444, %v5443
        %v5545 = vpack.c.b16 %v5446, %v5445
        %v5546 = vpack.c.b16 %v5448, %v5447
        %v5547 = vpack.c.b16 %v5450, %v5449
        %v5548 = vpack.c.b16 %v5452, %v5451
        %v5549 = vpack.c.b16 %v5454, %v5453
        %v5550 = vpack.c.b16 %v5456, %v5455
        %v5551 = vpack.c.b16 %v5458, %v5457
        %v5552 = vpack.c.b16 %v5460, %v5459
        %v5553 = vpack.c.b16 %v5462, %v5461
        %v5554 = vpack.c.b16 %v5464, %v5463
        %v5555 = vpack.c.b16 %v5466, %v5465
        %v5556 = vpack.c.b16 %v5468, %v5467
        %v5557 = vpack.c.b16 %v5470, %v5469
        %v5558 = vpack.c.b16 %v5472, %v5471
        %v5559 = vpack.c.b16 %v5474, %v5473
        %v5560 = vpack.c.b16 %v5476, %v5475
        %v5561 = vpack.c.b16 %v5478, %v5477
        %v5562 = vpack.c.b16 %v5480, %v5479
        %v5563 = vpack.c.b16 %v5482, %v5481
        %v5564 = vpack.c.b16 %v5484, %v5483
        %v5565 = vpack.c.b16 %v5486, %v5485
        %v5566 = vpack.c.b16 %v5488, %v5487
        %v5567 = vpack.c.b16 %v5490, %v5489
        %v5568 = vpack.c.b16 %v5492, %v5491
        %v5569 = vpack.c.b16 %v5494, %v5493
        %v5570 = vpack.c.b16 %v5496, %v5495
        %v5571 = vpack.c.b16 %v5498, %v5497
        %v5572 = vpack.c.b16 %v5500, %v5499
        %v5573 = vpack.c.b16 %v5502, %v5501
        %v5574 = vpack.c.b16 %v5504, %v5503
        %v5575 = vpack.c.b16 %v5506, %v5505
        %v5576 = vpack.c.b16 %v5508, %v5507
        %v5577 = vpack.c.b16 %v5510, %v5509
        %v5578 = vpack.c.b16 %v5512, %v5511
        %v5579 = vpack.c.b16 %v5514, %v5513
        %v5580 = vpack.c.b16 %v5516, %v5515
        %5645 = vst [vmem:[%s340] sm:$0xff] %v5517
        %5646 = vst [vmem:[%s340 + $0x8] sm:$0xff] %v5518
        %5647 = vst [vmem:[%s340 + $0x10] sm:$0xff] %v5519
        %5648 = vst [vmem:[%s340 + $0x18] sm:$0xff] %v5520
        %5649 = vst [vmem:[%s340 + $0x20] sm:$0xff] %v5521
        %5650 = vst [vmem:[%s340 + $0x28] sm:$0xff] %v5522
        %5651 = vst [vmem:[%s340 + $0x30] sm:$0xff] %v5523
        %5652 = vst [vmem:[%s340 + $0x38] sm:$0xff] %v5524
        %5653 = vst [vmem:[%s340 + $0x40] sm:$0xff] %v5525
        %5654 = vst [vmem:[%s340 + $0x48] sm:$0xff] %v5526
        %5655 = vst [vmem:[%s340 + $0x50] sm:$0xff] %v5527
        %5656 = vst [vmem:[%s340 + $0x58] sm:$0xff] %v5528
        %5657 = vst [vmem:[%s340 + $0x60] sm:$0xff] %v5529
        %5658 = vst [vmem:[%s340 + $0x68] sm:$0xff] %v5530
        %5659 = vst [vmem:[%s340 + $0x70] sm:$0xff] %v5531
        %5660 = vst [vmem:[%s340 + $0x78] sm:$0xff] %v5532
        %5661 = vst [vmem:[%s340 + $0x80] sm:$0xff] %v5533
        %5662 = vst [vmem:[%s340 + $0x88] sm:$0xff] %v5534
        %5663 = vst [vmem:[%s340 + $0x90] sm:$0xff] %v5535
        %5664 = vst [vmem:[%s340 + $0x98] sm:$0xff] %v5536
        %5665 = vst [vmem:[%s340 + $0xa0] sm:$0xff] %v5537
        %5666 = vst [vmem:[%s340 + $0xa8] sm:$0xff] %v5538
        %5667 = vst [vmem:[%s340 + $0xb0] sm:$0xff] %v5539
        %5668 = vst [vmem:[%s340 + $0xb8] sm:$0xff] %v5540
        %5669 = vst [vmem:[%s340 + $0xc0] sm:$0xff] %v5541
        %5670 = vst [vmem:[%s340 + $0xc8] sm:$0xff] %v5542
        %5671 = vst [vmem:[%s340 + $0xd0] sm:$0xff] %v5543
        %5672 = vst [vmem:[%s340 + $0xd8] sm:$0xff] %v5544
        %5673 = vst [vmem:[%s340 + $0xe0] sm:$0xff] %v5545
        %5674 = vst [vmem:[%s340 + $0xe8] sm:$0xff] %v5546
        %5675 = vst [vmem:[%s340 + $0xf0] sm:$0xff] %v5547
        %5676 = vst [vmem:[%s340 + $0xf8] sm:$0xff] %v5548
        %5677 = vst [vmem:[%s340 + $0x100] sm:$0xff] %v5549
        %5678 = vst [vmem:[%s340 + $0x108] sm:$0xff] %v5550
        %5679 = vst [vmem:[%s340 + $0x110] sm:$0xff] %v5551
        %5680 = vst [vmem:[%s340 + $0x118] sm:$0xff] %v5552
        %5681 = vst [vmem:[%s340 + $0x120] sm:$0xff] %v5553
        %5682 = vst [vmem:[%s340 + $0x128] sm:$0xff] %v5554
        %5683 = vst [vmem:[%s340 + $0x130] sm:$0xff] %v5555
        %5684 = vst [vmem:[%s340 + $0x138] sm:$0xff] %v5556
        %5685 = vst [vmem:[%s340 + $0x140] sm:$0xff] %v5557
        %5686 = vst [vmem:[%s340 + $0x148] sm:$0xff] %v5558
        %5687 = vst [vmem:[%s340 + $0x150] sm:$0xff] %v5559
        %5688 = vst [vmem:[%s340 + $0x158] sm:$0xff] %v5560
        %5689 = vst [vmem:[%s340 + $0x160] sm:$0xff] %v5561
        %5690 = vst [vmem:[%s340 + $0x168] sm:$0xff] %v5562
        %5691 = vst [vmem:[%s340 + $0x170] sm:$0xff] %v5563
        %5692 = vst [vmem:[%s340 + $0x178] sm:$0xff] %v5564
        %5693 = vst [vmem:[%s340 + $0x180] sm:$0xff] %v5565
        %5694 = vst [vmem:[%s340 + $0x188] sm:$0xff] %v5566
        %5695 = vst [vmem:[%s340 + $0x190] sm:$0xff] %v5567
        %5696 = vst [vmem:[%s340 + $0x198] sm:$0xff] %v5568
        %5697 = vst [vmem:[%s340 + $0x1a0] sm:$0xff] %v5569
        %5698 = vst [vmem:[%s340 + $0x1a8] sm:$0xff] %v5570
        %5699 = vst [vmem:[%s340 + $0x1b0] sm:$0xff] %v5571
        %5700 = vst [vmem:[%s340 + $0x1b8] sm:$0xff] %v5572
        %5701 = vst [vmem:[%s340 + $0x1c0] sm:$0xff] %v5573
        %5702 = vst [vmem:[%s340 + $0x1c8] sm:$0xff] %v5574
        %5703 = vst [vmem:[%s340 + $0x1d0] sm:$0xff] %v5575
        %5704 = vst [vmem:[%s340 + $0x1d8] sm:$0xff] %v5576
        %5705 = vst [vmem:[%s340 + $0x1e0] sm:$0xff] %v5577
        %5706 = vst [vmem:[%s340 + $0x1e8] sm:$0xff] %v5578
        %5707 = vst [vmem:[%s340 + $0x1f0] sm:$0xff] %v5579
        %5708 = vst [vmem:[%s340 + $0x1f8] sm:$0xff] %v5580
        %s5709 = sand.u32 %s224, 1
        %s5710 = scalar_lea.sflag [#allocation4], %s5709
        %s5711 = sand.u32 %s224, 1
        %s5712 = smul.addr %s5711, 512
        %s5713 = scalar_lea.vmem [#allocation3], %s5712
        // Predicated region
        $region53: #{bottleneck_forward.1} parent=51 // pred_check
          %p5714 = pneg %p234
        $region54: #{bottleneck_forward.1} parent=51 // pred_check_branch
          %5716 = sbr.rel (%p5714) target = $region56
        $region55: #{bottleneck_forward.1} parent=51 // pred_region
          %s5717 = smul.u32 16, %s27
          %s5719 = ssub.s32 8192, 8192
          %5720 = vsyncadd %s5710, %s5719
          %s5721 = smul.addr %s5717, 8
          %s5722 = smul.addr %s26, 256
          %s5723 = sadd.s32 %s5721, %s5722
          %s5724 = smul.addr %s5723, 64
          %s5725 = scalar_lea.hbm %s8, %s5724
          %s5726 = sshll.u32 %s5713, 4
          %s5727 = int_to_ptr.vmem [resolvable:$true] %s5726
          %5732 = dma.vmem_to_hbm [thread:$0]  %s5727, 8192, %s5725, %s5710, 256, 256, 16
        $region56: #{bottleneck_forward.1} parent=51 // pred_fallthru
          _
      $region52: #{bottleneck_forward.1} parent=5 // pred_fallthru
        _
      %p5733 = scmp.le.s32.totalorder 2, %s17
      // Predicated region
      $region57: #{bottleneck_forward.1} parent=5 // pred_check
        %p5734 = pneg %p5733
      $region58: #{bottleneck_forward.1} parent=5 // pred_check_branch
        %5736 = sbr.rel (%p5734) target = $region60
      $region59: #{bottleneck_forward.1} parent=5 // pred_region
        %s5737 = ssub.s32 %s17, 2
        // Predicated region
        $region61: #{bottleneck_forward.1} parent=59 // pred_check
          %p5738 = pneg %p240
        $region62: #{bottleneck_forward.1} parent=59 // pred_check_branch
          %5740 = sbr.rel (%p5738) target = $region64
        $region63: #{bottleneck_forward.1} parent=59 // pred_region
          %s5741 = sand.u32 %s225, 1
          %s5742 = scalar_lea.sflag [#allocation4], %s5741
          %s5743 = sand.u32 %s225, 1
          %s5744 = smul.addr %s5743, 512
          %s5745 = scalar_lea.vmem [#allocation3], %s5744
          %5746 = dma.done %s5742, 8192
        $region64: #{bottleneck_forward.1} parent=59 // pred_fallthru
          _
      $region60: #{bottleneck_forward.1} parent=5 // pred_fallthru
        _
    $region6: #{bottleneck_forward.1} parent=1 // loop_footer
      %s21 = sadd.s32 1, %s17
    $region7: #{bottleneck_forward.1} parent=1 // loop_footer_branch
      %16 = sbr.rel target = $region3
    $region8: #{bottleneck_forward.1} parent=1 // loop_exit
      _
    %5747 = vsyncpa [#allocation4], 1
    %s5748 = scalar_lea.sflag [#allocation4], 1
    %5749 = vsyncpa %s5748, 1

</llo_original>
